<compile_context>
chip_gen: v6e
topology: v6e:2x2x1
jax: 0.10.0
libtpu: 0.0.40
codegen_flags: <defaults>
</compile_context>

<pallas_src>
import functools

import jax
import jax.numpy as jnp
from jax.experimental import pallas as pl
from jax.experimental.pallas import tpu as pltpu

B_PAD = 8      # sublane-dense batch fed to the kernel
N_PAD = 1024   # backbone logits padded from 1000 (lane-dense)
OUT_PAD = 128  # lane-dense output; valid columns are [:10]


def reprog_kernel(x_ref, p_ref, wq_ref, scale_ref, bb_ref, wl_ref, bl_ref, out_ref):
    """Single-shot fused forward (no grid; everything resident in VMEM).

    x_ref    : (B_PAD, F)       f32   embedded image (zero canvas + patch), flat
    p_ref    : (1, F)           f32   P = tanh(W*M), precomputed outside
    wq_ref   : (F, N_PAD)       int8  quantized backbone-projection weight
    scale_ref: (1, N_PAD)       f32   per-column dequant scale for wq
    bb_ref   : (1, N_PAD)       f32   backbone bias (padded)
    wl_ref   : (N_PAD, OUT_PAD) bf16  new_layers Linear weight (10 -> padded 128)
    bl_ref   : (1, OUT_PAD)     f32   new_layers Linear bias (padded)
    out_ref  : (B_PAD, OUT_PAD) f32   final logits
    """
    # Reprogramming: X_adv = tanh(W*M) + X.
    x_adv = x_ref[...] + p_ref[...]

    # Backbone stand-in: dequantize int8 weights in VMEM; per-column scale is
    # applied AFTER the matmul ((x @ Wq) * s == x @ (Wq * s)), so the scale
    # multiply is only (B_PAD, N_PAD) instead of (F, N_PAD).
    wq = wq_ref[...].astype(jnp.float32)
    y = jnp.dot(x_adv, wq, preferred_element_type=jnp.float32)
    y = y * scale_ref[...] + bb_ref[...]

    # new_layers = ReLU() then Linear(1000, 10)  (padded to 128 lanes).
    h = jnp.maximum(y, 0.0).astype(jnp.bfloat16)
    out_ref[...] = (jnp.dot(h, wl_ref[...], preferred_element_type=jnp.float32)
                    + bl_ref[...])


@functools.partial(
    jax.jit,
    static_argnames=("input_size", "h_start", "h_end", "w_start", "w_end"))
def reprogramming_forward(image, P_flat, Wq_i8, scale, bb_pad, Wl_bf16, bl_pad, *,
                          input_size, h_start, h_end, w_start, w_end):
    B, C, _, _ = image.shape
    F = C * input_size * input_size

    # Minimal per-call glue (fused under this jit): one zero canvas already
    # padded to B_PAD rows, one static-slice scatter of the tiny patch, and a
    # free reshape onto the lane axis.
    X = jnp.zeros((B_PAD, C, input_size, input_size), jnp.float32)
    X = X.at[:B, :, h_start:h_end, w_start:w_end].set(image.astype(jnp.float32))
    x_flat = X.reshape(B_PAD, F)

    cost = pl.CostEstimate(
        flops=2 * B_PAD * F * N_PAD + 2 * B_PAD * N_PAD * OUT_PAD,
        transcendentals=0,
        bytes_accessed=(Wq_i8.size                     # int8
                        + Wl_bf16.size * 2
                        + x_flat.size * 4 + P_flat.size * 4
                        + scale.size * 4 + bb_pad.size * 4 + bl_pad.size * 4
                        + B_PAD * OUT_PAD * 4))

    out = pl.pallas_call(
        reprog_kernel,
        out_shape=jax.ShapeDtypeStruct((B_PAD, OUT_PAD), jnp.float32),
        in_specs=[pl.BlockSpec(memory_space=pltpu.MemorySpace.VMEM)] * 7,
        out_specs=pl.BlockSpec(memory_space=pltpu.MemorySpace.VMEM),
        compiler_params=pltpu.CompilerParams(
            vmem_limit_bytes=32 * 1024 * 1024,   # total footprint ~1.1 MiB
        ),
        cost_estimate=cost,
    )(x_flat, P_flat, Wq_i8, scale, bb_pad, Wl_bf16, bl_pad)

    return out[:B, :10]


if __name__ == "__main__":
    # Small, module-consistent shapes: input_size=16, patch=8x8, channel_out=3.
    input_size = 16
    patch_h = 8
    patch_w = 8
    channel_out = 3
    batch = 2

    h_start = input_size // 2 - patch_h // 2
    h_end = h_start + patch_h
    w_start = input_size // 2 - patch_w // 2
    w_end = w_start + patch_w

    key = jax.random.PRNGKey(0)
    k_img, k_w, k_wb, k_bb, k_wl, k_bl = jax.random.split(key, 6)

    # Input image (NCHW), matches the patch slot size.
    image = jax.random.normal(k_img, (batch, channel_out, patch_h, patch_w), jnp.float32)

    # Module parameters (deterministic synthetic init).
    W = jax.random.normal(k_w, (channel_out, input_size, input_size), jnp.float32)
    M = jnp.ones((channel_out, input_size, input_size), jnp.float32)
    M = M.at[:, h_start:h_end, w_start:w_end].set(0.0)

    F = channel_out * input_size * input_size
    N_LOGITS = 1000
    N_CLASSES = 10
    Wb = jax.random.normal(k_wb, (F, N_LOGITS), jnp.float32) * 0.02   # backbone stand-in
    bb = jax.random.normal(k_bb, (1, N_LOGITS), jnp.float32) * 0.02
    Wl = jax.random.normal(k_wl, (N_LOGITS, N_CLASSES), jnp.float32) * 0.02
    bl = jax.random.normal(k_bl, (1, N_CLASSES), jnp.float32) * 0.02

    # Hoisted parameter-only compute + dtype/padding/quantization prep
    # (done once, reused every call).
    P_flat = jnp.tanh(W * M).reshape(1, F).astype(jnp.float32)

    Wb_pad = jnp.pad(Wb, ((0, 0), (0, N_PAD - N_LOGITS)))
    absmax = jnp.maximum(jnp.max(jnp.abs(Wb_pad), axis=0, keepdims=True), 1e-8)
    scale = (absmax / 127.0).astype(jnp.float32)                       # (1, N_PAD)
    Wq_i8 = jnp.round(Wb_pad / scale).astype(jnp.int8)                 # (F, N_PAD)

    bb_pad = jnp.pad(bb, ((0, 0), (0, N_PAD - N_LOGITS)))
    Wl_bf16 = jnp.pad(
        Wl, ((0, N_PAD - N_LOGITS), (0, OUT_PAD - N_CLASSES))).astype(jnp.bfloat16)
    bl_pad = jnp.pad(bl, ((0, 0), (0, OUT_PAD - N_CLASSES)))

    out = reprogramming_forward(
        image, P_flat, Wq_i8, scale, bb_pad, Wl_bf16, bl_pad,
        input_size=input_size, h_start=h_start, h_end=h_end,
        w_start=w_start, w_end=w_end)
    out = jax.block_until_ready(out)

    # Pure-JAX reference using the identical quantized/dequantized weights and
    # dtype path, so the check validates the kernel math bit-for-bit (modulo
    # f32 matmul associativity).
    X_ref = jnp.zeros((batch, channel_out, input_size, input_size), jnp.float32)
    X_ref = X_ref.at[:, :, h_start:h_end, w_start:w_end].set(image)
    x_adv_ref = X_ref.reshape(batch, F) + P_flat                        # f32
    y_adv_ref = (jnp.dot(x_adv_ref, Wq_i8[:, :N_LOGITS].astype(jnp.float32),
                         preferred_element_type=jnp.float32)
                 * scale[:, :N_LOGITS] + bb)
    h_ref = jnp.maximum(y_adv_ref, 0.0).astype(jnp.bfloat16)
    ref = jnp.dot(h_ref, Wl.astype(jnp.bfloat16),
                  preferred_element_type=jnp.float32) + bl

    assert out.shape == (batch, N_CLASSES)
    assert jnp.allclose(out, ref, atol=2e-2, rtol=2e-2), float(jnp.max(jnp.abs(out - ref)))
    print("KERNEL_OK")
</pallas_src>

<mosaic_0001>
module attributes {stable_mosaic.version = 11 : i64} {
  func.func @reprog_kernel(%arg0: memref<8x768xf32, #tpu.memory_space<vmem>>, %arg1: memref<1x768xf32, #tpu.memory_space<vmem>>, %arg2: memref<768x1024xi8, #tpu.memory_space<vmem>>, %arg3: memref<1x1024xf32, #tpu.memory_space<vmem>>, %arg4: memref<1x1024xf32, #tpu.memory_space<vmem>>, %arg5: memref<1024x128xbf16, #tpu.memory_space<vmem>>, %arg6: memref<1x128xf32, #tpu.memory_space<vmem>>, %arg7: memref<8x128xf32, #tpu.memory_space<vmem>>) attributes {dimension_semantics = [], scalar_prefetch = 0 : i64, scratch_operands = 0 : i64, tpu.core_type = #tpu.core_type<tc>} {
    %c0 = arith.constant 0 : index
    %c0_0 = arith.constant 0 : index
    %0 = vector.load %arg0[%c0, %c0_0] : memref<8x768xf32, #tpu.memory_space<vmem>>, vector<8x768xf32>
    %c0_1 = arith.constant 0 : index
    %c0_2 = arith.constant 0 : index
    %1 = vector.load %arg1[%c0_1, %c0_2] : memref<1x768xf32, #tpu.memory_space<vmem>>, vector<1x768xf32>
    %2 = vector.broadcast %1 : vector<1x768xf32> to vector<8x768xf32>
    %3 = arith.addf %0, %2 : vector<8x768xf32>
    %c0_3 = arith.constant 0 : index
    %c0_4 = arith.constant 0 : index
    %4 = vector.load %arg2[%c0_3, %c0_4] : memref<768x1024xi8, #tpu.memory_space<vmem>>, vector<768x1024xi8>
    %5 = arith.sitofp %4 : vector<768x1024xi8> to vector<768x1024xf32>
    %cst = arith.constant dense<0.000000e+00> : vector<8x1024xf32>
    %6 = tpu.matmul %3, %5, %cst {dimension_numbers = #tpu.dot_dimension_numbers<[1], [0], [0], [1], [0, 0, 1, 1], [], []>} : vector<8x768xf32>, vector<768x1024xf32>, vector<8x1024xf32> -> vector<8x1024xf32>
    %c0_5 = arith.constant 0 : index
    %c0_6 = arith.constant 0 : index
    %7 = vector.load %arg3[%c0_5, %c0_6] : memref<1x1024xf32, #tpu.memory_space<vmem>>, vector<1x1024xf32>
    %8 = vector.broadcast %7 : vector<1x1024xf32> to vector<8x1024xf32>
    %9 = arith.mulf %6, %8 : vector<8x1024xf32>
    %c0_7 = arith.constant 0 : index
    %c0_8 = arith.constant 0 : index
    %10 = vector.load %arg4[%c0_7, %c0_8] : memref<1x1024xf32, #tpu.memory_space<vmem>>, vector<1x1024xf32>
    %11 = vector.broadcast %10 : vector<1x1024xf32> to vector<8x1024xf32>
    %12 = arith.addf %9, %11 : vector<8x1024xf32>
    %cst_9 = arith.constant 0.000000e+00 : f32
    %13 = vector.broadcast %cst_9 : f32 to vector<8x1024xf32>
    %14 = arith.maximumf %12, %13 : vector<8x1024xf32>
    %15 = arith.truncf %14 : vector<8x1024xf32> to vector<8x1024xbf16>
    %c0_10 = arith.constant 0 : index
    %c0_11 = arith.constant 0 : index
    %16 = vector.load %arg5[%c0_10, %c0_11] : memref<1024x128xbf16, #tpu.memory_space<vmem>>, vector<1024x128xbf16>
    %cst_12 = arith.constant dense<0.000000e+00> : vector<8x128xf32>
    %17 = tpu.matmul %15, %16, %cst_12 {dimension_numbers = #tpu.dot_dimension_numbers<[1], [0], [0], [1], [0, 0, 1, 1], [], []>} : vector<8x1024xbf16>, vector<1024x128xbf16>, vector<8x128xf32> -> vector<8x128xf32>
    %c0_13 = arith.constant 0 : index
    %c0_14 = arith.constant 0 : index
    %18 = vector.load %arg6[%c0_13, %c0_14] : memref<1x128xf32, #tpu.memory_space<vmem>>, vector<1x128xf32>
    %19 = vector.broadcast %18 : vector<1x128xf32> to vector<8x128xf32>
    %20 = arith.addf %17, %19 : vector<8x128xf32>
    %c0_15 = arith.constant 0 : index
    %c0_16 = arith.constant 0 : index
    %21 = vector.load %arg7[%c0_15, %c0_16] : memref<8x128xf32, #tpu.memory_space<vmem>>, vector<8x128xf32>
    tpu.vector_store %arg7[%c0_15, %c0_16], %20 {strides = array<i32>} : memref<8x128xf32, #tpu.memory_space<vmem>>, vector<8x128xf32>,
    return
  }
}

</mosaic_0001>

<llo_original>
// kernel: reprogramming_forward.1
$region0: #{reprogramming_forward.1}
  #allocation0 [shape = 'u32[]', space=smem, size = 0x4, offset = 0x4, fixed_abs, tag = 'smem constant byte address 0x4 - core index']
  #allocation1 [shape = 'u32[144,128]{1,0:T(1,128)}', space=vmem, size = 0x12000, scoped, tag = 'internal scratch']
  %s0 = inlined_call_operand.vmem [shape: f32[8,768], index: 0, kind: input, shape index: {}]
  %s1 = inlined_call_operand.vmem [shape: f32[1,768], index: 1, kind: input, shape index: {}]
  %s2 = inlined_call_operand.hbm [shape: s8[768,1024], index: 2, kind: input, shape index: {}]
  %s3 = inlined_call_operand.vmem [shape: f32[1,1024], index: 3, kind: input, shape index: {}]
  %s4 = inlined_call_operand.vmem [shape: f32[1,1024], index: 4, kind: input, shape index: {}]
  %s5 = inlined_call_operand.vmem [shape: bf16[1024,128], index: 5, kind: input, shape index: {}]
  %s6 = inlined_call_operand.vmem [shape: f32[1,128], index: 6, kind: input, shape index: {}]
  %s7 = inlined_call_operand.vmem [shape: f32[8,128], index: 7, kind: output, shape index: {}]
  %s8 = sld [smem:[#allocation0]]
  $region42: #{reprogramming_forward.1} parent=0
    _
  %s10 = ssub.s32 1, %s8
  %s11 = scalar_select 0, %s10, %s8
  $region1: #{reprogramming_forward.1} parent=0
    #allocation2 [shape = 'u8[786432]{0}', space=vmem, size = 0xc0000, scoped, tag = 'input window, operand 2, single buffered']
    #allocation3 [shape = 's32[1]{0}', space=sflag, size = 0x4, scoped, tag = 'scoped memory for reprogramming_forward.1']
    %12 = vsyncpa [#allocation3], 0
    // Predicated region
    $region2: #{reprogramming_forward.1} parent=1 // pred_check
      _
    $region3: #{reprogramming_forward.1} parent=1 // pred_check_branch
      %14 = sbr.rel (0) target = $region5
    $region4: #{reprogramming_forward.1} parent=1 // pred_region
      _
    $region5: #{reprogramming_forward.1} parent=1 // pred_fallthru
      _
    // Predicated region
    $region6: #{reprogramming_forward.1} parent=1 // pred_check
      _
    $region7: #{reprogramming_forward.1} parent=1 // pred_check_branch
      %16 = sbr.rel (0) target = $region9
    $region8: #{reprogramming_forward.1} parent=1 // pred_region
      _
    $region9: #{reprogramming_forward.1} parent=1 // pred_fallthru
      _
    // Predicated region
    $region10: #{reprogramming_forward.1} parent=1 // pred_check
      _
    $region11: #{reprogramming_forward.1} parent=1 // pred_check_branch
      %18 = sbr.rel (0) target = $region13
    $region12: #{reprogramming_forward.1} parent=1 // pred_region
      %s20 = ssub.s32 24576, 24576
      %21 = vsyncadd [#allocation3], %s20
      %s22 = sshll.u32 [#allocation2], 4
      %s23 = int_to_ptr.vmem [resolvable:$true] %s22
      %28 = dma.hbm_to_vmem [thread:$0]  %s2, 24576, %s23, [#allocation3], 1024, 1024, 64
    $region13: #{reprogramming_forward.1} parent=1 // pred_fallthru
      _
    // Predicated region
    $region14: #{reprogramming_forward.1} parent=1 // pred_check
      _
    $region15: #{reprogramming_forward.1} parent=1 // pred_check_branch
      %30 = sbr.rel (0) target = $region17
    $region16: #{reprogramming_forward.1} parent=1 // pred_region
      _
    $region17: #{reprogramming_forward.1} parent=1 // pred_fallthru
      _
    // Predicated region
    $region18: #{reprogramming_forward.1} parent=1 // pred_check
      _
    $region19: #{reprogramming_forward.1} parent=1 // pred_check_branch
      %32 = sbr.rel (0) target = $region21
    $region20: #{reprogramming_forward.1} parent=1 // pred_region
      _
    $region21: #{reprogramming_forward.1} parent=1 // pred_fallthru
      _
    // Predicated region
    $region22: #{reprogramming_forward.1} parent=1 // pred_check
      _
    $region23: #{reprogramming_forward.1} parent=1 // pred_check_branch
      %34 = sbr.rel (0) target = $region25
    $region24: #{reprogramming_forward.1} parent=1 // pred_region
      _
    $region25: #{reprogramming_forward.1} parent=1 // pred_fallthru
      _
    // Predicated region
    $region26: #{reprogramming_forward.1} parent=1 // pred_check
      _
    $region27: #{reprogramming_forward.1} parent=1 // pred_check_branch
      %36 = sbr.rel (0) target = $region29
    $region28: #{reprogramming_forward.1} parent=1 // pred_region
      _
    $region29: #{reprogramming_forward.1} parent=1 // pred_fallthru
      _
    // Predicated region
    $region30: #{reprogramming_forward.1} parent=1 // pred_check
      _
    $region31: #{reprogramming_forward.1} parent=1 // pred_check_branch
      %38 = sbr.rel (0) target = $region33
    $region32: #{reprogramming_forward.1} parent=1 // pred_region
      %39 = dma.done [#allocation3], 24576
    $region33: #{reprogramming_forward.1} parent=1 // pred_fallthru
      _
    %v41 = vld [vmem:[%s0] sm:$0xff]
    %v42 = vld [vmem:[%s0 + $0x8] sm:$0xff]
    %v43 = vld [vmem:[%s0 + $0x10] sm:$0xff]
    %v44 = vld [vmem:[%s0 + $0x18] sm:$0xff]
    %v45 = vld [vmem:[%s0 + $0x20] sm:$0xff]
    %v46 = vld [vmem:[%s0 + $0x28] sm:$0xff]
    %v47 = vld [vmem:[%s1] sm:$0x3f]
    %v49 = vlaneseq
    %v50 = vshrl.u32 %v49, 7
    %v51 = vsub.s32 0, %v50
    %v52 = vrot.slane %v47, %v51
    %v53 = vlaneseq
    %v54 = vshrl.u32 %v53, 7
    %v55 = vsub.s32 1, %v54
    %v56 = vrot.slane %v47, %v55
    %v57 = vlaneseq
    %v58 = vshrl.u32 %v57, 7
    %v59 = vsub.s32 2, %v58
    %v60 = vrot.slane %v47, %v59
    %v61 = vlaneseq
    %v62 = vshrl.u32 %v61, 7
    %v63 = vsub.s32 3, %v62
    %v64 = vrot.slane %v47, %v63
    %v65 = vlaneseq
    %v66 = vshrl.u32 %v65, 7
    %v67 = vsub.s32 4, %v66
    %v68 = vrot.slane %v47, %v67
    %v69 = vlaneseq
    %v70 = vshrl.u32 %v69, 7
    %v71 = vsub.s32 5, %v70
    %v72 = vrot.slane %v47, %v71
    %v79 = vadd.f32 %v41, %v52
    %v80 = vadd.f32 %v42, %v56
    %v81 = vadd.f32 %v43, %v60
    %v82 = vadd.f32 %v44, %v64
    %v83 = vadd.f32 %v45, %v68
    %v84 = vadd.f32 %v46, %v72
    %v85 = vld [vmem:[#allocation2] sm:$0xff]
    %v86 = vld [vmem:[#allocation2 + $0x8] sm:$0xff]
    %v87 = vld [vmem:[#allocation2 + $0x10] sm:$0xff]
    %v88 = vld [vmem:[#allocation2 + $0x18] sm:$0xff]
    %v89 = vld [vmem:[#allocation2 + $0x20] sm:$0xff]
    %v90 = vld [vmem:[#allocation2 + $0x28] sm:$0xff]
    %v91 = vld [vmem:[#allocation2 + $0x30] sm:$0xff]
    %v92 = vld [vmem:[#allocation2 + $0x38] sm:$0xff]
    %v93 = vld [vmem:[#allocation2 + $0x40] sm:$0xff]
    %v94 = vld [vmem:[#allocation2 + $0x48] sm:$0xff]
    %v95 = vld [vmem:[#allocation2 + $0x50] sm:$0xff]
    %v96 = vld [vmem:[#allocation2 + $0x58] sm:$0xff]
    %v97 = vld [vmem:[#allocation2 + $0x60] sm:$0xff]
    %v98 = vld [vmem:[#allocation2 + $0x68] sm:$0xff]
    %v99 = vld [vmem:[#allocation2 + $0x70] sm:$0xff]
    %v100 = vld [vmem:[#allocation2 + $0x78] sm:$0xff]
    %v101 = vld [vmem:[#allocation2 + $0x80] sm:$0xff]
    %v102 = vld [vmem:[#allocation2 + $0x88] sm:$0xff]
    %v103 = vld [vmem:[#allocation2 + $0x90] sm:$0xff]
    %v104 = vld [vmem:[#allocation2 + $0x98] sm:$0xff]
    %v105 = vld [vmem:[#allocation2 + $0xa0] sm:$0xff]
    %v106 = vld [vmem:[#allocation2 + $0xa8] sm:$0xff]
    %v107 = vld [vmem:[#allocation2 + $0xb0] sm:$0xff]
    %v108 = vld [vmem:[#allocation2 + $0xb8] sm:$0xff]
    %v109 = vld [vmem:[#allocation2 + $0xc0] sm:$0xff]
    %v110 = vld [vmem:[#allocation2 + $0xc8] sm:$0xff]
    %v111 = vld [vmem:[#allocation2 + $0xd0] sm:$0xff]
    %v112 = vld [vmem:[#allocation2 + $0xd8] sm:$0xff]
    %v113 = vld [vmem:[#allocation2 + $0xe0] sm:$0xff]
    %v114 = vld [vmem:[#allocation2 + $0xe8] sm:$0xff]
    %v115 = vld [vmem:[#allocation2 + $0xf0] sm:$0xff]
    %v116 = vld [vmem:[#allocation2 + $0xf8] sm:$0xff]
    %v117 = vld [vmem:[#allocation2 + $0x100] sm:$0xff]
    %v118 = vld [vmem:[#allocation2 + $0x108] sm:$0xff]
    %v119 = vld [vmem:[#allocation2 + $0x110] sm:$0xff]
    %v120 = vld [vmem:[#allocation2 + $0x118] sm:$0xff]
    %v121 = vld [vmem:[#allocation2 + $0x120] sm:$0xff]
    %v122 = vld [vmem:[#allocation2 + $0x128] sm:$0xff]
    %v123 = vld [vmem:[#allocation2 + $0x130] sm:$0xff]
    %v124 = vld [vmem:[#allocation2 + $0x138] sm:$0xff]
    %v125 = vld [vmem:[#allocation2 + $0x140] sm:$0xff]
    %v126 = vld [vmem:[#allocation2 + $0x148] sm:$0xff]
    %v127 = vld [vmem:[#allocation2 + $0x150] sm:$0xff]
    %v128 = vld [vmem:[#allocation2 + $0x158] sm:$0xff]
    %v129 = vld [vmem:[#allocation2 + $0x160] sm:$0xff]
    %v130 = vld [vmem:[#allocation2 + $0x168] sm:$0xff]
    %v131 = vld [vmem:[#allocation2 + $0x170] sm:$0xff]
    %v132 = vld [vmem:[#allocation2 + $0x178] sm:$0xff]
    %v133 = vld [vmem:[#allocation2 + $0x180] sm:$0xff]
    %v134 = vld [vmem:[#allocation2 + $0x188] sm:$0xff]
    %v135 = vld [vmem:[#allocation2 + $0x190] sm:$0xff]
    %v136 = vld [vmem:[#allocation2 + $0x198] sm:$0xff]
    %v137 = vld [vmem:[#allocation2 + $0x1a0] sm:$0xff]
    %v138 = vld [vmem:[#allocation2 + $0x1a8] sm:$0xff]
    %v139 = vld [vmem:[#allocation2 + $0x1b0] sm:$0xff]
    %v140 = vld [vmem:[#allocation2 + $0x1b8] sm:$0xff]
    %v141 = vld [vmem:[#allocation2 + $0x1c0] sm:$0xff]
    %v142 = vld [vmem:[#allocation2 + $0x1c8] sm:$0xff]
    %v143 = vld [vmem:[#allocation2 + $0x1d0] sm:$0xff]
    %v144 = vld [vmem:[#allocation2 + $0x1d8] sm:$0xff]
    %v145 = vld [vmem:[#allocation2 + $0x1e0] sm:$0xff]
    %v146 = vld [vmem:[#allocation2 + $0x1e8] sm:$0xff]
    %v147 = vld [vmem:[#allocation2 + $0x1f0] sm:$0xff]
    %v148 = vld [vmem:[#allocation2 + $0x1f8] sm:$0xff]
    %v149 = vld [vmem:[#allocation2 + $0x200] sm:$0xff]
    %v150 = vld [vmem:[#allocation2 + $0x208] sm:$0xff]
    %v151 = vld [vmem:[#allocation2 + $0x210] sm:$0xff]
    %v152 = vld [vmem:[#allocation2 + $0x218] sm:$0xff]
    %v153 = vld [vmem:[#allocation2 + $0x220] sm:$0xff]
    %v154 = vld [vmem:[#allocation2 + $0x228] sm:$0xff]
    %v155 = vld [vmem:[#allocation2 + $0x230] sm:$0xff]
    %v156 = vld [vmem:[#allocation2 + $0x238] sm:$0xff]
    %v157 = vld [vmem:[#allocation2 + $0x240] sm:$0xff]
    %v158 = vld [vmem:[#allocation2 + $0x248] sm:$0xff]
    %v159 = vld [vmem:[#allocation2 + $0x250] sm:$0xff]
    %v160 = vld [vmem:[#allocation2 + $0x258] sm:$0xff]
    %v161 = vld [vmem:[#allocation2 + $0x260] sm:$0xff]
    %v162 = vld [vmem:[#allocation2 + $0x268] sm:$0xff]
    %v163 = vld [vmem:[#allocation2 + $0x270] sm:$0xff]
    %v164 = vld [vmem:[#allocation2 + $0x278] sm:$0xff]
    %v165 = vld [vmem:[#allocation2 + $0x280] sm:$0xff]
    %v166 = vld [vmem:[#allocation2 + $0x288] sm:$0xff]
    %v167 = vld [vmem:[#allocation2 + $0x290] sm:$0xff]
    %v168 = vld [vmem:[#allocation2 + $0x298] sm:$0xff]
    %v169 = vld [vmem:[#allocation2 + $0x2a0] sm:$0xff]
    %v170 = vld [vmem:[#allocation2 + $0x2a8] sm:$0xff]
    %v171 = vld [vmem:[#allocation2 + $0x2b0] sm:$0xff]
    %v172 = vld [vmem:[#allocation2 + $0x2b8] sm:$0xff]
    %v173 = vld [vmem:[#allocation2 + $0x2c0] sm:$0xff]
    %v174 = vld [vmem:[#allocation2 + $0x2c8] sm:$0xff]
    %v175 = vld [vmem:[#allocation2 + $0x2d0] sm:$0xff]
    %v176 = vld [vmem:[#allocation2 + $0x2d8] sm:$0xff]
    %v177 = vld [vmem:[#allocation2 + $0x2e0] sm:$0xff]
    %v178 = vld [vmem:[#allocation2 + $0x2e8] sm:$0xff]
    %v179 = vld [vmem:[#allocation2 + $0x2f0] sm:$0xff]
    %v180 = vld [vmem:[#allocation2 + $0x2f8] sm:$0xff]
    %v181 = vld [vmem:[#allocation2 + $0x300] sm:$0xff]
    %v182 = vld [vmem:[#allocation2 + $0x308] sm:$0xff]
    %v183 = vld [vmem:[#allocation2 + $0x310] sm:$0xff]
    %v184 = vld [vmem:[#allocation2 + $0x318] sm:$0xff]
    %v185 = vld [vmem:[#allocation2 + $0x320] sm:$0xff]
    %v186 = vld [vmem:[#allocation2 + $0x328] sm:$0xff]
    %v187 = vld [vmem:[#allocation2 + $0x330] sm:$0xff]
    %v188 = vld [vmem:[#allocation2 + $0x338] sm:$0xff]
    %v189 = vld [vmem:[#allocation2 + $0x340] sm:$0xff]
    %v190 = vld [vmem:[#allocation2 + $0x348] sm:$0xff]
    %v191 = vld [vmem:[#allocation2 + $0x350] sm:$0xff]
    %v192 = vld [vmem:[#allocation2 + $0x358] sm:$0xff]
    %v193 = vld [vmem:[#allocation2 + $0x360] sm:$0xff]
    %v194 = vld [vmem:[#allocation2 + $0x368] sm:$0xff]
    %v195 = vld [vmem:[#allocation2 + $0x370] sm:$0xff]
    %v196 = vld [vmem:[#allocation2 + $0x378] sm:$0xff]
    %v197 = vld [vmem:[#allocation2 + $0x380] sm:$0xff]
    %v198 = vld [vmem:[#allocation2 + $0x388] sm:$0xff]
    %v199 = vld [vmem:[#allocation2 + $0x390] sm:$0xff]
    %v200 = vld [vmem:[#allocation2 + $0x398] sm:$0xff]
    %v201 = vld [vmem:[#allocation2 + $0x3a0] sm:$0xff]
    %v202 = vld [vmem:[#allocation2 + $0x3a8] sm:$0xff]
    %v203 = vld [vmem:[#allocation2 + $0x3b0] sm:$0xff]
    %v204 = vld [vmem:[#allocation2 + $0x3b8] sm:$0xff]
    %v205 = vld [vmem:[#allocation2 + $0x3c0] sm:$0xff]
    %v206 = vld [vmem:[#allocation2 + $0x3c8] sm:$0xff]
    %v207 = vld [vmem:[#allocation2 + $0x3d0] sm:$0xff]
    %v208 = vld [vmem:[#allocation2 + $0x3d8] sm:$0xff]
    %v209 = vld [vmem:[#allocation2 + $0x3e0] sm:$0xff]
    %v210 = vld [vmem:[#allocation2 + $0x3e8] sm:$0xff]
    %v211 = vld [vmem:[#allocation2 + $0x3f0] sm:$0xff]
    %v212 = vld [vmem:[#allocation2 + $0x3f8] sm:$0xff]
    %v213 = vld [vmem:[#allocation2 + $0x400] sm:$0xff]
    %v214 = vld [vmem:[#allocation2 + $0x408] sm:$0xff]
    %v215 = vld [vmem:[#allocation2 + $0x410] sm:$0xff]
    %v216 = vld [vmem:[#allocation2 + $0x418] sm:$0xff]
    %v217 = vld [vmem:[#allocation2 + $0x420] sm:$0xff]
    %v218 = vld [vmem:[#allocation2 + $0x428] sm:$0xff]
    %v219 = vld [vmem:[#allocation2 + $0x430] sm:$0xff]
    %v220 = vld [vmem:[#allocation2 + $0x438] sm:$0xff]
    %v221 = vld [vmem:[#allocation2 + $0x440] sm:$0xff]
    %v222 = vld [vmem:[#allocation2 + $0x448] sm:$0xff]
    %v223 = vld [vmem:[#allocation2 + $0x450] sm:$0xff]
    %v224 = vld [vmem:[#allocation2 + $0x458] sm:$0xff]
    %v225 = vld [vmem:[#allocation2 + $0x460] sm:$0xff]
    %v226 = vld [vmem:[#allocation2 + $0x468] sm:$0xff]
    %v227 = vld [vmem:[#allocation2 + $0x470] sm:$0xff]
    %v228 = vld [vmem:[#allocation2 + $0x478] sm:$0xff]
    %v229 = vld [vmem:[#allocation2 + $0x480] sm:$0xff]
    %v230 = vld [vmem:[#allocation2 + $0x488] sm:$0xff]
    %v231 = vld [vmem:[#allocation2 + $0x490] sm:$0xff]
    %v232 = vld [vmem:[#allocation2 + $0x498] sm:$0xff]
    %v233 = vld [vmem:[#allocation2 + $0x4a0] sm:$0xff]
    %v234 = vld [vmem:[#allocation2 + $0x4a8] sm:$0xff]
    %v235 = vld [vmem:[#allocation2 + $0x4b0] sm:$0xff]
    %v236 = vld [vmem:[#allocation2 + $0x4b8] sm:$0xff]
    %v237 = vld [vmem:[#allocation2 + $0x4c0] sm:$0xff]
    %v238 = vld [vmem:[#allocation2 + $0x4c8] sm:$0xff]
    %v239 = vld [vmem:[#allocation2 + $0x4d0] sm:$0xff]
    %v240 = vld [vmem:[#allocation2 + $0x4d8] sm:$0xff]
    %v241 = vld [vmem:[#allocation2 + $0x4e0] sm:$0xff]
    %v242 = vld [vmem:[#allocation2 + $0x4e8] sm:$0xff]
    %v243 = vld [vmem:[#allocation2 + $0x4f0] sm:$0xff]
    %v244 = vld [vmem:[#allocation2 + $0x4f8] sm:$0xff]
    %v245 = vld [vmem:[#allocation2 + $0x500] sm:$0xff]
    %v246 = vld [vmem:[#allocation2 + $0x508] sm:$0xff]
    %v247 = vld [vmem:[#allocation2 + $0x510] sm:$0xff]
    %v248 = vld [vmem:[#allocation2 + $0x518] sm:$0xff]
    %v249 = vld [vmem:[#allocation2 + $0x520] sm:$0xff]
    %v250 = vld [vmem:[#allocation2 + $0x528] sm:$0xff]
    %v251 = vld [vmem:[#allocation2 + $0x530] sm:$0xff]
    %v252 = vld [vmem:[#allocation2 + $0x538] sm:$0xff]
    %v253 = vld [vmem:[#allocation2 + $0x540] sm:$0xff]
    %v254 = vld [vmem:[#allocation2 + $0x548] sm:$0xff]
    %v255 = vld [vmem:[#allocation2 + $0x550] sm:$0xff]
    %v256 = vld [vmem:[#allocation2 + $0x558] sm:$0xff]
    %v257 = vld [vmem:[#allocation2 + $0x560] sm:$0xff]
    %v258 = vld [vmem:[#allocation2 + $0x568] sm:$0xff]
    %v259 = vld [vmem:[#allocation2 + $0x570] sm:$0xff]
    %v260 = vld [vmem:[#allocation2 + $0x578] sm:$0xff]
    %v261 = vld [vmem:[#allocation2 + $0x580] sm:$0xff]
    %v262 = vld [vmem:[#allocation2 + $0x588] sm:$0xff]
    %v263 = vld [vmem:[#allocation2 + $0x590] sm:$0xff]
    %v264 = vld [vmem:[#allocation2 + $0x598] sm:$0xff]
    %v265 = vld [vmem:[#allocation2 + $0x5a0] sm:$0xff]
    %v266 = vld [vmem:[#allocation2 + $0x5a8] sm:$0xff]
    %v267 = vld [vmem:[#allocation2 + $0x5b0] sm:$0xff]
    %v268 = vld [vmem:[#allocation2 + $0x5b8] sm:$0xff]
    %v269 = vld [vmem:[#allocation2 + $0x5c0] sm:$0xff]
    %v270 = vld [vmem:[#allocation2 + $0x5c8] sm:$0xff]
    %v271 = vld [vmem:[#allocation2 + $0x5d0] sm:$0xff]
    %v272 = vld [vmem:[#allocation2 + $0x5d8] sm:$0xff]
    %v273 = vld [vmem:[#allocation2 + $0x5e0] sm:$0xff]
    %v274 = vld [vmem:[#allocation2 + $0x5e8] sm:$0xff]
    %v275 = vld [vmem:[#allocation2 + $0x5f0] sm:$0xff]
    %v276 = vld [vmem:[#allocation2 + $0x5f8] sm:$0xff]
    %v277 = vunpack.c.0.s8 %v85
    %v278 = vunpack.c.0.s8 %v86
    %v279 = vunpack.c.0.s8 %v87
    %v280 = vunpack.c.0.s8 %v88
    %v281 = vunpack.c.0.s8 %v89
    %v282 = vunpack.c.0.s8 %v90
    %v283 = vunpack.c.0.s8 %v91
    %v284 = vunpack.c.0.s8 %v92
    %v285 = vunpack.c.1.s8 %v85
    %v286 = vunpack.c.1.s8 %v86
    %v287 = vunpack.c.1.s8 %v87
    %v288 = vunpack.c.1.s8 %v88
    %v289 = vunpack.c.1.s8 %v89
    %v290 = vunpack.c.1.s8 %v90
    %v291 = vunpack.c.1.s8 %v91
    %v292 = vunpack.c.1.s8 %v92
    %v293 = vunpack.c.2.s8 %v85
    %v294 = vunpack.c.2.s8 %v86
    %v295 = vunpack.c.2.s8 %v87
    %v296 = vunpack.c.2.s8 %v88
    %v297 = vunpack.c.2.s8 %v89
    %v298 = vunpack.c.2.s8 %v90
    %v299 = vunpack.c.2.s8 %v91
    %v300 = vunpack.c.2.s8 %v92
    %v301 = vunpack.c.3.s8 %v85
    %v302 = vunpack.c.3.s8 %v86
    %v303 = vunpack.c.3.s8 %v87
    %v304 = vunpack.c.3.s8 %v88
    %v305 = vunpack.c.3.s8 %v89
    %v306 = vunpack.c.3.s8 %v90
    %v307 = vunpack.c.3.s8 %v91
    %v308 = vunpack.c.3.s8 %v92
    %v309 = vunpack.c.0.s8 %v93
    %v310 = vunpack.c.0.s8 %v94
    %v311 = vunpack.c.0.s8 %v95
    %v312 = vunpack.c.0.s8 %v96
    %v313 = vunpack.c.0.s8 %v97
    %v314 = vunpack.c.0.s8 %v98
    %v315 = vunpack.c.0.s8 %v99
    %v316 = vunpack.c.0.s8 %v100
    %v317 = vunpack.c.1.s8 %v93
    %v318 = vunpack.c.1.s8 %v94
    %v319 = vunpack.c.1.s8 %v95
    %v320 = vunpack.c.1.s8 %v96
    %v321 = vunpack.c.1.s8 %v97
    %v322 = vunpack.c.1.s8 %v98
    %v323 = vunpack.c.1.s8 %v99
    %v324 = vunpack.c.1.s8 %v100
    %v325 = vunpack.c.2.s8 %v93
    %v326 = vunpack.c.2.s8 %v94
    %v327 = vunpack.c.2.s8 %v95
    %v328 = vunpack.c.2.s8 %v96
    %v329 = vunpack.c.2.s8 %v97
    %v330 = vunpack.c.2.s8 %v98
    %v331 = vunpack.c.2.s8 %v99
    %v332 = vunpack.c.2.s8 %v100
    %v333 = vunpack.c.3.s8 %v93
    %v334 = vunpack.c.3.s8 %v94
    %v335 = vunpack.c.3.s8 %v95
    %v336 = vunpack.c.3.s8 %v96
    %v337 = vunpack.c.3.s8 %v97
    %v338 = vunpack.c.3.s8 %v98
    %v339 = vunpack.c.3.s8 %v99
    %v340 = vunpack.c.3.s8 %v100
    %v341 = vunpack.c.0.s8 %v101
    %v342 = vunpack.c.0.s8 %v102
    %v343 = vunpack.c.0.s8 %v103
    %v344 = vunpack.c.0.s8 %v104
    %v345 = vunpack.c.0.s8 %v105
    %v346 = vunpack.c.0.s8 %v106
    %v347 = vunpack.c.0.s8 %v107
    %v348 = vunpack.c.0.s8 %v108
    %v349 = vunpack.c.1.s8 %v101
    %v350 = vunpack.c.1.s8 %v102
    %v351 = vunpack.c.1.s8 %v103
    %v352 = vunpack.c.1.s8 %v104
    %v353 = vunpack.c.1.s8 %v105
    %v354 = vunpack.c.1.s8 %v106
    %v355 = vunpack.c.1.s8 %v107
    %v356 = vunpack.c.1.s8 %v108
    %v357 = vunpack.c.2.s8 %v101
    %v358 = vunpack.c.2.s8 %v102
    %v359 = vunpack.c.2.s8 %v103
    %v360 = vunpack.c.2.s8 %v104
    %v361 = vunpack.c.2.s8 %v105
    %v362 = vunpack.c.2.s8 %v106
    %v363 = vunpack.c.2.s8 %v107
    %v364 = vunpack.c.2.s8 %v108
    %v365 = vunpack.c.3.s8 %v101
    %v366 = vunpack.c.3.s8 %v102
    %v367 = vunpack.c.3.s8 %v103
    %v368 = vunpack.c.3.s8 %v104
    %v369 = vunpack.c.3.s8 %v105
    %v370 = vunpack.c.3.s8 %v106
    %v371 = vunpack.c.3.s8 %v107
    %v372 = vunpack.c.3.s8 %v108
    %v373 = vunpack.c.0.s8 %v109
    %v374 = vunpack.c.0.s8 %v110
    %v375 = vunpack.c.0.s8 %v111
    %v376 = vunpack.c.0.s8 %v112
    %v377 = vunpack.c.0.s8 %v113
    %v378 = vunpack.c.0.s8 %v114
    %v379 = vunpack.c.0.s8 %v115
    %v380 = vunpack.c.0.s8 %v116
    %v381 = vunpack.c.1.s8 %v109
    %v382 = vunpack.c.1.s8 %v110
    %v383 = vunpack.c.1.s8 %v111
    %v384 = vunpack.c.1.s8 %v112
    %v385 = vunpack.c.1.s8 %v113
    %v386 = vunpack.c.1.s8 %v114
    %v387 = vunpack.c.1.s8 %v115
    %v388 = vunpack.c.1.s8 %v116
    %v389 = vunpack.c.2.s8 %v109
    %v390 = vunpack.c.2.s8 %v110
    %v391 = vunpack.c.2.s8 %v111
    %v392 = vunpack.c.2.s8 %v112
    %v393 = vunpack.c.2.s8 %v113
    %v394 = vunpack.c.2.s8 %v114
    %v395 = vunpack.c.2.s8 %v115
    %v396 = vunpack.c.2.s8 %v116
    %v397 = vunpack.c.3.s8 %v109
    %v398 = vunpack.c.3.s8 %v110
    %v399 = vunpack.c.3.s8 %v111
    %v400 = vunpack.c.3.s8 %v112
    %v401 = vunpack.c.3.s8 %v113
    %v402 = vunpack.c.3.s8 %v114
    %v403 = vunpack.c.3.s8 %v115
    %v404 = vunpack.c.3.s8 %v116
    %v405 = vunpack.c.0.s8 %v117
    %v406 = vunpack.c.0.s8 %v118
    %v407 = vunpack.c.0.s8 %v119
    %v408 = vunpack.c.0.s8 %v120
    %v409 = vunpack.c.0.s8 %v121
    %v410 = vunpack.c.0.s8 %v122
    %v411 = vunpack.c.0.s8 %v123
    %v412 = vunpack.c.0.s8 %v124
    %v413 = vunpack.c.1.s8 %v117
    %v414 = vunpack.c.1.s8 %v118
    %v415 = vunpack.c.1.s8 %v119
    %v416 = vunpack.c.1.s8 %v120
    %v417 = vunpack.c.1.s8 %v121
    %v418 = vunpack.c.1.s8 %v122
    %v419 = vunpack.c.1.s8 %v123
    %v420 = vunpack.c.1.s8 %v124
    %v421 = vunpack.c.2.s8 %v117
    %v422 = vunpack.c.2.s8 %v118
    %v423 = vunpack.c.2.s8 %v119
    %v424 = vunpack.c.2.s8 %v120
    %v425 = vunpack.c.2.s8 %v121
    %v426 = vunpack.c.2.s8 %v122
    %v427 = vunpack.c.2.s8 %v123
    %v428 = vunpack.c.2.s8 %v124
    %v429 = vunpack.c.3.s8 %v117
    %v430 = vunpack.c.3.s8 %v118
    %v431 = vunpack.c.3.s8 %v119
    %v432 = vunpack.c.3.s8 %v120
    %v433 = vunpack.c.3.s8 %v121
    %v434 = vunpack.c.3.s8 %v122
    %v435 = vunpack.c.3.s8 %v123
    %v436 = vunpack.c.3.s8 %v124
    %v437 = vunpack.c.0.s8 %v125
    %v438 = vunpack.c.0.s8 %v126
    %v439 = vunpack.c.0.s8 %v127
    %v440 = vunpack.c.0.s8 %v128
    %v441 = vunpack.c.0.s8 %v129
    %v442 = vunpack.c.0.s8 %v130
    %v443 = vunpack.c.0.s8 %v131
    %v444 = vunpack.c.0.s8 %v132
    %v445 = vunpack.c.1.s8 %v125
    %v446 = vunpack.c.1.s8 %v126
    %v447 = vunpack.c.1.s8 %v127
    %v448 = vunpack.c.1.s8 %v128
    %v449 = vunpack.c.1.s8 %v129
    %v450 = vunpack.c.1.s8 %v130
    %v451 = vunpack.c.1.s8 %v131
    %v452 = vunpack.c.1.s8 %v132
    %v453 = vunpack.c.2.s8 %v125
    %v454 = vunpack.c.2.s8 %v126
    %v455 = vunpack.c.2.s8 %v127
    %v456 = vunpack.c.2.s8 %v128
    %v457 = vunpack.c.2.s8 %v129
    %v458 = vunpack.c.2.s8 %v130
    %v459 = vunpack.c.2.s8 %v131
    %v460 = vunpack.c.2.s8 %v132
    %v461 = vunpack.c.3.s8 %v125
    %v462 = vunpack.c.3.s8 %v126
    %v463 = vunpack.c.3.s8 %v127
    %v464 = vunpack.c.3.s8 %v128
    %v465 = vunpack.c.3.s8 %v129
    %v466 = vunpack.c.3.s8 %v130
    %v467 = vunpack.c.3.s8 %v131
    %v468 = vunpack.c.3.s8 %v132
    %v469 = vunpack.c.0.s8 %v133
    %v470 = vunpack.c.0.s8 %v134
    %v471 = vunpack.c.0.s8 %v135
    %v472 = vunpack.c.0.s8 %v136
    %v473 = vunpack.c.0.s8 %v137
    %v474 = vunpack.c.0.s8 %v138
    %v475 = vunpack.c.0.s8 %v139
    %v476 = vunpack.c.0.s8 %v140
    %v477 = vunpack.c.1.s8 %v133
    %v478 = vunpack.c.1.s8 %v134
    %v479 = vunpack.c.1.s8 %v135
    %v480 = vunpack.c.1.s8 %v136
    %v481 = vunpack.c.1.s8 %v137
    %v482 = vunpack.c.1.s8 %v138
    %v483 = vunpack.c.1.s8 %v139
    %v484 = vunpack.c.1.s8 %v140
    %v485 = vunpack.c.2.s8 %v133
    %v486 = vunpack.c.2.s8 %v134
    %v487 = vunpack.c.2.s8 %v135
    %v488 = vunpack.c.2.s8 %v136
    %v489 = vunpack.c.2.s8 %v137
    %v490 = vunpack.c.2.s8 %v138
    %v491 = vunpack.c.2.s8 %v139
    %v492 = vunpack.c.2.s8 %v140
    %v493 = vunpack.c.3.s8 %v133
    %v494 = vunpack.c.3.s8 %v134
    %v495 = vunpack.c.3.s8 %v135
    %v496 = vunpack.c.3.s8 %v136
    %v497 = vunpack.c.3.s8 %v137
    %v498 = vunpack.c.3.s8 %v138
    %v499 = vunpack.c.3.s8 %v139
    %v500 = vunpack.c.3.s8 %v140
    %v501 = vunpack.c.0.s8 %v141
    %v502 = vunpack.c.0.s8 %v142
    %v503 = vunpack.c.0.s8 %v143
    %v504 = vunpack.c.0.s8 %v144
    %v505 = vunpack.c.0.s8 %v145
    %v506 = vunpack.c.0.s8 %v146
    %v507 = vunpack.c.0.s8 %v147
    %v508 = vunpack.c.0.s8 %v148
    %v509 = vunpack.c.1.s8 %v141
    %v510 = vunpack.c.1.s8 %v142
    %v511 = vunpack.c.1.s8 %v143
    %v512 = vunpack.c.1.s8 %v144
    %v513 = vunpack.c.1.s8 %v145
    %v514 = vunpack.c.1.s8 %v146
    %v515 = vunpack.c.1.s8 %v147
    %v516 = vunpack.c.1.s8 %v148
    %v517 = vunpack.c.2.s8 %v141
    %v518 = vunpack.c.2.s8 %v142
    %v519 = vunpack.c.2.s8 %v143
    %v520 = vunpack.c.2.s8 %v144
    %v521 = vunpack.c.2.s8 %v145
    %v522 = vunpack.c.2.s8 %v146
    %v523 = vunpack.c.2.s8 %v147
    %v524 = vunpack.c.2.s8 %v148
    %v525 = vunpack.c.3.s8 %v141
    %v526 = vunpack.c.3.s8 %v142
    %v527 = vunpack.c.3.s8 %v143
    %v528 = vunpack.c.3.s8 %v144
    %v529 = vunpack.c.3.s8 %v145
    %v530 = vunpack.c.3.s8 %v146
    %v531 = vunpack.c.3.s8 %v147
    %v532 = vunpack.c.3.s8 %v148
    %v533 = vunpack.c.0.s8 %v149
    %v534 = vunpack.c.0.s8 %v150
    %v535 = vunpack.c.0.s8 %v151
    %v536 = vunpack.c.0.s8 %v152
    %v537 = vunpack.c.0.s8 %v153
    %v538 = vunpack.c.0.s8 %v154
    %v539 = vunpack.c.0.s8 %v155
    %v540 = vunpack.c.0.s8 %v156
    %v541 = vunpack.c.1.s8 %v149
    %v542 = vunpack.c.1.s8 %v150
    %v543 = vunpack.c.1.s8 %v151
    %v544 = vunpack.c.1.s8 %v152
    %v545 = vunpack.c.1.s8 %v153
    %v546 = vunpack.c.1.s8 %v154
    %v547 = vunpack.c.1.s8 %v155
    %v548 = vunpack.c.1.s8 %v156
    %v549 = vunpack.c.2.s8 %v149
    %v550 = vunpack.c.2.s8 %v150
    %v551 = vunpack.c.2.s8 %v151
    %v552 = vunpack.c.2.s8 %v152
    %v553 = vunpack.c.2.s8 %v153
    %v554 = vunpack.c.2.s8 %v154
    %v555 = vunpack.c.2.s8 %v155
    %v556 = vunpack.c.2.s8 %v156
    %v557 = vunpack.c.3.s8 %v149
    %v558 = vunpack.c.3.s8 %v150
    %v559 = vunpack.c.3.s8 %v151
    %v560 = vunpack.c.3.s8 %v152
    %v561 = vunpack.c.3.s8 %v153
    %v562 = vunpack.c.3.s8 %v154
    %v563 = vunpack.c.3.s8 %v155
    %v564 = vunpack.c.3.s8 %v156
    %v565 = vunpack.c.0.s8 %v157
    %v566 = vunpack.c.0.s8 %v158
    %v567 = vunpack.c.0.s8 %v159
    %v568 = vunpack.c.0.s8 %v160
    %v569 = vunpack.c.0.s8 %v161
    %v570 = vunpack.c.0.s8 %v162
    %v571 = vunpack.c.0.s8 %v163
    %v572 = vunpack.c.0.s8 %v164
    %v573 = vunpack.c.1.s8 %v157
    %v574 = vunpack.c.1.s8 %v158
    %v575 = vunpack.c.1.s8 %v159
    %v576 = vunpack.c.1.s8 %v160
    %v577 = vunpack.c.1.s8 %v161
    %v578 = vunpack.c.1.s8 %v162
    %v579 = vunpack.c.1.s8 %v163
    %v580 = vunpack.c.1.s8 %v164
    %v581 = vunpack.c.2.s8 %v157
    %v582 = vunpack.c.2.s8 %v158
    %v583 = vunpack.c.2.s8 %v159
    %v584 = vunpack.c.2.s8 %v160
    %v585 = vunpack.c.2.s8 %v161
    %v586 = vunpack.c.2.s8 %v162
    %v587 = vunpack.c.2.s8 %v163
    %v588 = vunpack.c.2.s8 %v164
    %v589 = vunpack.c.3.s8 %v157
    %v590 = vunpack.c.3.s8 %v158
    %v591 = vunpack.c.3.s8 %v159
    %v592 = vunpack.c.3.s8 %v160
    %v593 = vunpack.c.3.s8 %v161
    %v594 = vunpack.c.3.s8 %v162
    %v595 = vunpack.c.3.s8 %v163
    %v596 = vunpack.c.3.s8 %v164
    %v597 = vunpack.c.0.s8 %v165
    %v598 = vunpack.c.0.s8 %v166
    %v599 = vunpack.c.0.s8 %v167
    %v600 = vunpack.c.0.s8 %v168
    %v601 = vunpack.c.0.s8 %v169
    %v602 = vunpack.c.0.s8 %v170
    %v603 = vunpack.c.0.s8 %v171
    %v604 = vunpack.c.0.s8 %v172
    %v605 = vunpack.c.1.s8 %v165
    %v606 = vunpack.c.1.s8 %v166
    %v607 = vunpack.c.1.s8 %v167
    %v608 = vunpack.c.1.s8 %v168
    %v609 = vunpack.c.1.s8 %v169
    %v610 = vunpack.c.1.s8 %v170
    %v611 = vunpack.c.1.s8 %v171
    %v612 = vunpack.c.1.s8 %v172
    %v613 = vunpack.c.2.s8 %v165
    %v614 = vunpack.c.2.s8 %v166
    %v615 = vunpack.c.2.s8 %v167
    %v616 = vunpack.c.2.s8 %v168
    %v617 = vunpack.c.2.s8 %v169
    %v618 = vunpack.c.2.s8 %v170
    %v619 = vunpack.c.2.s8 %v171
    %v620 = vunpack.c.2.s8 %v172
    %v621 = vunpack.c.3.s8 %v165
    %v622 = vunpack.c.3.s8 %v166
    %v623 = vunpack.c.3.s8 %v167
    %v624 = vunpack.c.3.s8 %v168
    %v625 = vunpack.c.3.s8 %v169
    %v626 = vunpack.c.3.s8 %v170
    %v627 = vunpack.c.3.s8 %v171
    %v628 = vunpack.c.3.s8 %v172
    %v629 = vunpack.c.0.s8 %v173
    %v630 = vunpack.c.0.s8 %v174
    %v631 = vunpack.c.0.s8 %v175
    %v632 = vunpack.c.0.s8 %v176
    %v633 = vunpack.c.0.s8 %v177
    %v634 = vunpack.c.0.s8 %v178
    %v635 = vunpack.c.0.s8 %v179
    %v636 = vunpack.c.0.s8 %v180
    %v637 = vunpack.c.1.s8 %v173
    %v638 = vunpack.c.1.s8 %v174
    %v639 = vunpack.c.1.s8 %v175
    %v640 = vunpack.c.1.s8 %v176
    %v641 = vunpack.c.1.s8 %v177
    %v642 = vunpack.c.1.s8 %v178
    %v643 = vunpack.c.1.s8 %v179
    %v644 = vunpack.c.1.s8 %v180
    %v645 = vunpack.c.2.s8 %v173
    %v646 = vunpack.c.2.s8 %v174
    %v647 = vunpack.c.2.s8 %v175
    %v648 = vunpack.c.2.s8 %v176
    %v649 = vunpack.c.2.s8 %v177
    %v650 = vunpack.c.2.s8 %v178
    %v651 = vunpack.c.2.s8 %v179
    %v652 = vunpack.c.2.s8 %v180
    %v653 = vunpack.c.3.s8 %v173
    %v654 = vunpack.c.3.s8 %v174
    %v655 = vunpack.c.3.s8 %v175
    %v656 = vunpack.c.3.s8 %v176
    %v657 = vunpack.c.3.s8 %v177
    %v658 = vunpack.c.3.s8 %v178
    %v659 = vunpack.c.3.s8 %v179
    %v660 = vunpack.c.3.s8 %v180
    %v661 = vunpack.c.0.s8 %v181
    %v662 = vunpack.c.0.s8 %v182
    %v663 = vunpack.c.0.s8 %v183
    %v664 = vunpack.c.0.s8 %v184
    %v665 = vunpack.c.0.s8 %v185
    %v666 = vunpack.c.0.s8 %v186
    %v667 = vunpack.c.0.s8 %v187
    %v668 = vunpack.c.0.s8 %v188
    %v669 = vunpack.c.1.s8 %v181
    %v670 = vunpack.c.1.s8 %v182
    %v671 = vunpack.c.1.s8 %v183
    %v672 = vunpack.c.1.s8 %v184
    %v673 = vunpack.c.1.s8 %v185
    %v674 = vunpack.c.1.s8 %v186
    %v675 = vunpack.c.1.s8 %v187
    %v676 = vunpack.c.1.s8 %v188
    %v677 = vunpack.c.2.s8 %v181
    %v678 = vunpack.c.2.s8 %v182
    %v679 = vunpack.c.2.s8 %v183
    %v680 = vunpack.c.2.s8 %v184
    %v681 = vunpack.c.2.s8 %v185
    %v682 = vunpack.c.2.s8 %v186
    %v683 = vunpack.c.2.s8 %v187
    %v684 = vunpack.c.2.s8 %v188
    %v685 = vunpack.c.3.s8 %v181
    %v686 = vunpack.c.3.s8 %v182
    %v687 = vunpack.c.3.s8 %v183
    %v688 = vunpack.c.3.s8 %v184
    %v689 = vunpack.c.3.s8 %v185
    %v690 = vunpack.c.3.s8 %v186
    %v691 = vunpack.c.3.s8 %v187
    %v692 = vunpack.c.3.s8 %v188
    %v693 = vunpack.c.0.s8 %v189
    %v694 = vunpack.c.0.s8 %v190
    %v695 = vunpack.c.0.s8 %v191
    %v696 = vunpack.c.0.s8 %v192
    %v697 = vunpack.c.0.s8 %v193
    %v698 = vunpack.c.0.s8 %v194
    %v699 = vunpack.c.0.s8 %v195
    %v700 = vunpack.c.0.s8 %v196
    %v701 = vunpack.c.1.s8 %v189
    %v702 = vunpack.c.1.s8 %v190
    %v703 = vunpack.c.1.s8 %v191
    %v704 = vunpack.c.1.s8 %v192
    %v705 = vunpack.c.1.s8 %v193
    %v706 = vunpack.c.1.s8 %v194
    %v707 = vunpack.c.1.s8 %v195
    %v708 = vunpack.c.1.s8 %v196
    %v709 = vunpack.c.2.s8 %v189
    %v710 = vunpack.c.2.s8 %v190
    %v711 = vunpack.c.2.s8 %v191
    %v712 = vunpack.c.2.s8 %v192
    %v713 = vunpack.c.2.s8 %v193
    %v714 = vunpack.c.2.s8 %v194
    %v715 = vunpack.c.2.s8 %v195
    %v716 = vunpack.c.2.s8 %v196
    %v717 = vunpack.c.3.s8 %v189
    %v718 = vunpack.c.3.s8 %v190
    %v719 = vunpack.c.3.s8 %v191
    %v720 = vunpack.c.3.s8 %v192
    %v721 = vunpack.c.3.s8 %v193
    %v722 = vunpack.c.3.s8 %v194
    %v723 = vunpack.c.3.s8 %v195
    %v724 = vunpack.c.3.s8 %v196
    %v725 = vunpack.c.0.s8 %v197
    %v726 = vunpack.c.0.s8 %v198
    %v727 = vunpack.c.0.s8 %v199
    %v728 = vunpack.c.0.s8 %v200
    %v729 = vunpack.c.0.s8 %v201
    %v730 = vunpack.c.0.s8 %v202
    %v731 = vunpack.c.0.s8 %v203
    %v732 = vunpack.c.0.s8 %v204
    %v733 = vunpack.c.1.s8 %v197
    %v734 = vunpack.c.1.s8 %v198
    %v735 = vunpack.c.1.s8 %v199
    %v736 = vunpack.c.1.s8 %v200
    %v737 = vunpack.c.1.s8 %v201
    %v738 = vunpack.c.1.s8 %v202
    %v739 = vunpack.c.1.s8 %v203
    %v740 = vunpack.c.1.s8 %v204
    %v741 = vunpack.c.2.s8 %v197
    %v742 = vunpack.c.2.s8 %v198
    %v743 = vunpack.c.2.s8 %v199
    %v744 = vunpack.c.2.s8 %v200
    %v745 = vunpack.c.2.s8 %v201
    %v746 = vunpack.c.2.s8 %v202
    %v747 = vunpack.c.2.s8 %v203
    %v748 = vunpack.c.2.s8 %v204
    %v749 = vunpack.c.3.s8 %v197
    %v750 = vunpack.c.3.s8 %v198
    %v751 = vunpack.c.3.s8 %v199
    %v752 = vunpack.c.3.s8 %v200
    %v753 = vunpack.c.3.s8 %v201
    %v754 = vunpack.c.3.s8 %v202
    %v755 = vunpack.c.3.s8 %v203
    %v756 = vunpack.c.3.s8 %v204
    %v757 = vunpack.c.0.s8 %v205
    %v758 = vunpack.c.0.s8 %v206
    %v759 = vunpack.c.0.s8 %v207
    %v760 = vunpack.c.0.s8 %v208
    %v761 = vunpack.c.0.s8 %v209
    %v762 = vunpack.c.0.s8 %v210
    %v763 = vunpack.c.0.s8 %v211
    %v764 = vunpack.c.0.s8 %v212
    %v765 = vunpack.c.1.s8 %v205
    %v766 = vunpack.c.1.s8 %v206
    %v767 = vunpack.c.1.s8 %v207
    %v768 = vunpack.c.1.s8 %v208
    %v769 = vunpack.c.1.s8 %v209
    %v770 = vunpack.c.1.s8 %v210
    %v771 = vunpack.c.1.s8 %v211
    %v772 = vunpack.c.1.s8 %v212
    %v773 = vunpack.c.2.s8 %v205
    %v774 = vunpack.c.2.s8 %v206
    %v775 = vunpack.c.2.s8 %v207
    %v776 = vunpack.c.2.s8 %v208
    %v777 = vunpack.c.2.s8 %v209
    %v778 = vunpack.c.2.s8 %v210
    %v779 = vunpack.c.2.s8 %v211
    %v780 = vunpack.c.2.s8 %v212
    %v781 = vunpack.c.3.s8 %v205
    %v782 = vunpack.c.3.s8 %v206
    %v783 = vunpack.c.3.s8 %v207
    %v784 = vunpack.c.3.s8 %v208
    %v785 = vunpack.c.3.s8 %v209
    %v786 = vunpack.c.3.s8 %v210
    %v787 = vunpack.c.3.s8 %v211
    %v788 = vunpack.c.3.s8 %v212
    %v789 = vunpack.c.0.s8 %v213
    %v790 = vunpack.c.0.s8 %v214
    %v791 = vunpack.c.0.s8 %v215
    %v792 = vunpack.c.0.s8 %v216
    %v793 = vunpack.c.0.s8 %v217
    %v794 = vunpack.c.0.s8 %v218
    %v795 = vunpack.c.0.s8 %v219
    %v796 = vunpack.c.0.s8 %v220
    %v797 = vunpack.c.1.s8 %v213
    %v798 = vunpack.c.1.s8 %v214
    %v799 = vunpack.c.1.s8 %v215
    %v800 = vunpack.c.1.s8 %v216
    %v801 = vunpack.c.1.s8 %v217
    %v802 = vunpack.c.1.s8 %v218
    %v803 = vunpack.c.1.s8 %v219
    %v804 = vunpack.c.1.s8 %v220
    %v805 = vunpack.c.2.s8 %v213
    %v806 = vunpack.c.2.s8 %v214
    %v807 = vunpack.c.2.s8 %v215
    %v808 = vunpack.c.2.s8 %v216
    %v809 = vunpack.c.2.s8 %v217
    %v810 = vunpack.c.2.s8 %v218
    %v811 = vunpack.c.2.s8 %v219
    %v812 = vunpack.c.2.s8 %v220
    %v813 = vunpack.c.3.s8 %v213
    %v814 = vunpack.c.3.s8 %v214
    %v815 = vunpack.c.3.s8 %v215
    %v816 = vunpack.c.3.s8 %v216
    %v817 = vunpack.c.3.s8 %v217
    %v818 = vunpack.c.3.s8 %v218
    %v819 = vunpack.c.3.s8 %v219
    %v820 = vunpack.c.3.s8 %v220
    %v821 = vunpack.c.0.s8 %v221
    %v822 = vunpack.c.0.s8 %v222
    %v823 = vunpack.c.0.s8 %v223
    %v824 = vunpack.c.0.s8 %v224
    %v825 = vunpack.c.0.s8 %v225
    %v826 = vunpack.c.0.s8 %v226
    %v827 = vunpack.c.0.s8 %v227
    %v828 = vunpack.c.0.s8 %v228
    %v829 = vunpack.c.1.s8 %v221
    %v830 = vunpack.c.1.s8 %v222
    %v831 = vunpack.c.1.s8 %v223
    %v832 = vunpack.c.1.s8 %v224
    %v833 = vunpack.c.1.s8 %v225
    %v834 = vunpack.c.1.s8 %v226
    %v835 = vunpack.c.1.s8 %v227
    %v836 = vunpack.c.1.s8 %v228
    %v837 = vunpack.c.2.s8 %v221
    %v838 = vunpack.c.2.s8 %v222
    %v839 = vunpack.c.2.s8 %v223
    %v840 = vunpack.c.2.s8 %v224
    %v841 = vunpack.c.2.s8 %v225
    %v842 = vunpack.c.2.s8 %v226
    %v843 = vunpack.c.2.s8 %v227
    %v844 = vunpack.c.2.s8 %v228
    %v845 = vunpack.c.3.s8 %v221
    %v846 = vunpack.c.3.s8 %v222
    %v847 = vunpack.c.3.s8 %v223
    %v848 = vunpack.c.3.s8 %v224
    %v849 = vunpack.c.3.s8 %v225
    %v850 = vunpack.c.3.s8 %v226
    %v851 = vunpack.c.3.s8 %v227
    %v852 = vunpack.c.3.s8 %v228
    %v853 = vunpack.c.0.s8 %v229
    %v854 = vunpack.c.0.s8 %v230
    %v855 = vunpack.c.0.s8 %v231
    %v856 = vunpack.c.0.s8 %v232
    %v857 = vunpack.c.0.s8 %v233
    %v858 = vunpack.c.0.s8 %v234
    %v859 = vunpack.c.0.s8 %v235
    %v860 = vunpack.c.0.s8 %v236
    %v861 = vunpack.c.1.s8 %v229
    %v862 = vunpack.c.1.s8 %v230
    %v863 = vunpack.c.1.s8 %v231
    %v864 = vunpack.c.1.s8 %v232
    %v865 = vunpack.c.1.s8 %v233
    %v866 = vunpack.c.1.s8 %v234
    %v867 = vunpack.c.1.s8 %v235
    %v868 = vunpack.c.1.s8 %v236
    %v869 = vunpack.c.2.s8 %v229
    %v870 = vunpack.c.2.s8 %v230
    %v871 = vunpack.c.2.s8 %v231
    %v872 = vunpack.c.2.s8 %v232
    %v873 = vunpack.c.2.s8 %v233
    %v874 = vunpack.c.2.s8 %v234
    %v875 = vunpack.c.2.s8 %v235
    %v876 = vunpack.c.2.s8 %v236
    %v877 = vunpack.c.3.s8 %v229
    %v878 = vunpack.c.3.s8 %v230
    %v879 = vunpack.c.3.s8 %v231
    %v880 = vunpack.c.3.s8 %v232
    %v881 = vunpack.c.3.s8 %v233
    %v882 = vunpack.c.3.s8 %v234
    %v883 = vunpack.c.3.s8 %v235
    %v884 = vunpack.c.3.s8 %v236
    %v885 = vunpack.c.0.s8 %v237
    %v886 = vunpack.c.0.s8 %v238
    %v887 = vunpack.c.0.s8 %v239
    %v888 = vunpack.c.0.s8 %v240
    %v889 = vunpack.c.0.s8 %v241
    %v890 = vunpack.c.0.s8 %v242
    %v891 = vunpack.c.0.s8 %v243
    %v892 = vunpack.c.0.s8 %v244
    %v893 = vunpack.c.1.s8 %v237
    %v894 = vunpack.c.1.s8 %v238
    %v895 = vunpack.c.1.s8 %v239
    %v896 = vunpack.c.1.s8 %v240
    %v897 = vunpack.c.1.s8 %v241
    %v898 = vunpack.c.1.s8 %v242
    %v899 = vunpack.c.1.s8 %v243
    %v900 = vunpack.c.1.s8 %v244
    %v901 = vunpack.c.2.s8 %v237
    %v902 = vunpack.c.2.s8 %v238
    %v903 = vunpack.c.2.s8 %v239
    %v904 = vunpack.c.2.s8 %v240
    %v905 = vunpack.c.2.s8 %v241
    %v906 = vunpack.c.2.s8 %v242
    %v907 = vunpack.c.2.s8 %v243
    %v908 = vunpack.c.2.s8 %v244
    %v909 = vunpack.c.3.s8 %v237
    %v910 = vunpack.c.3.s8 %v238
    %v911 = vunpack.c.3.s8 %v239
    %v912 = vunpack.c.3.s8 %v240
    %v913 = vunpack.c.3.s8 %v241
    %v914 = vunpack.c.3.s8 %v242
    %v915 = vunpack.c.3.s8 %v243
    %v916 = vunpack.c.3.s8 %v244
    %v917 = vunpack.c.0.s8 %v245
    %v918 = vunpack.c.0.s8 %v246
    %v919 = vunpack.c.0.s8 %v247
    %v920 = vunpack.c.0.s8 %v248
    %v921 = vunpack.c.0.s8 %v249
    %v922 = vunpack.c.0.s8 %v250
    %v923 = vunpack.c.0.s8 %v251
    %v924 = vunpack.c.0.s8 %v252
    %v925 = vunpack.c.1.s8 %v245
    %v926 = vunpack.c.1.s8 %v246
    %v927 = vunpack.c.1.s8 %v247
    %v928 = vunpack.c.1.s8 %v248
    %v929 = vunpack.c.1.s8 %v249
    %v930 = vunpack.c.1.s8 %v250
    %v931 = vunpack.c.1.s8 %v251
    %v932 = vunpack.c.1.s8 %v252
    %v933 = vunpack.c.2.s8 %v245
    %v934 = vunpack.c.2.s8 %v246
    %v935 = vunpack.c.2.s8 %v247
    %v936 = vunpack.c.2.s8 %v248
    %v937 = vunpack.c.2.s8 %v249
    %v938 = vunpack.c.2.s8 %v250
    %v939 = vunpack.c.2.s8 %v251
    %v940 = vunpack.c.2.s8 %v252
    %v941 = vunpack.c.3.s8 %v245
    %v942 = vunpack.c.3.s8 %v246
    %v943 = vunpack.c.3.s8 %v247
    %v944 = vunpack.c.3.s8 %v248
    %v945 = vunpack.c.3.s8 %v249
    %v946 = vunpack.c.3.s8 %v250
    %v947 = vunpack.c.3.s8 %v251
    %v948 = vunpack.c.3.s8 %v252
    %v949 = vunpack.c.0.s8 %v253
    %v950 = vunpack.c.0.s8 %v254
    %v951 = vunpack.c.0.s8 %v255
    %v952 = vunpack.c.0.s8 %v256
    %v953 = vunpack.c.0.s8 %v257
    %v954 = vunpack.c.0.s8 %v258
    %v955 = vunpack.c.0.s8 %v259
    %v956 = vunpack.c.0.s8 %v260
    %v957 = vunpack.c.1.s8 %v253
    %v958 = vunpack.c.1.s8 %v254
    %v959 = vunpack.c.1.s8 %v255
    %v960 = vunpack.c.1.s8 %v256
    %v961 = vunpack.c.1.s8 %v257
    %v962 = vunpack.c.1.s8 %v258
    %v963 = vunpack.c.1.s8 %v259
    %v964 = vunpack.c.1.s8 %v260
    %v965 = vunpack.c.2.s8 %v253
    %v966 = vunpack.c.2.s8 %v254
    %v967 = vunpack.c.2.s8 %v255
    %v968 = vunpack.c.2.s8 %v256
    %v969 = vunpack.c.2.s8 %v257
    %v970 = vunpack.c.2.s8 %v258
    %v971 = vunpack.c.2.s8 %v259
    %v972 = vunpack.c.2.s8 %v260
    %v973 = vunpack.c.3.s8 %v253
    %v974 = vunpack.c.3.s8 %v254
    %v975 = vunpack.c.3.s8 %v255
    %v976 = vunpack.c.3.s8 %v256
    %v977 = vunpack.c.3.s8 %v257
    %v978 = vunpack.c.3.s8 %v258
    %v979 = vunpack.c.3.s8 %v259
    %v980 = vunpack.c.3.s8 %v260
    %v981 = vunpack.c.0.s8 %v261
    %v982 = vunpack.c.0.s8 %v262
    %v983 = vunpack.c.0.s8 %v263
    %v984 = vunpack.c.0.s8 %v264
    %v985 = vunpack.c.0.s8 %v265
    %v986 = vunpack.c.0.s8 %v266
    %v987 = vunpack.c.0.s8 %v267
    %v988 = vunpack.c.0.s8 %v268
    %v989 = vunpack.c.1.s8 %v261
    %v990 = vunpack.c.1.s8 %v262
    %v991 = vunpack.c.1.s8 %v263
    %v992 = vunpack.c.1.s8 %v264
    %v993 = vunpack.c.1.s8 %v265
    %v994 = vunpack.c.1.s8 %v266
    %v995 = vunpack.c.1.s8 %v267
    %v996 = vunpack.c.1.s8 %v268
    %v997 = vunpack.c.2.s8 %v261
    %v998 = vunpack.c.2.s8 %v262
    %v999 = vunpack.c.2.s8 %v263
    %v1000 = vunpack.c.2.s8 %v264
    %v1001 = vunpack.c.2.s8 %v265
    %v1002 = vunpack.c.2.s8 %v266
    %v1003 = vunpack.c.2.s8 %v267
    %v1004 = vunpack.c.2.s8 %v268
    %v1005 = vunpack.c.3.s8 %v261
    %v1006 = vunpack.c.3.s8 %v262
    %v1007 = vunpack.c.3.s8 %v263
    %v1008 = vunpack.c.3.s8 %v264
    %v1009 = vunpack.c.3.s8 %v265
    %v1010 = vunpack.c.3.s8 %v266
    %v1011 = vunpack.c.3.s8 %v267
    %v1012 = vunpack.c.3.s8 %v268
    %v1013 = vunpack.c.0.s8 %v269
    %v1014 = vunpack.c.0.s8 %v270
    %v1015 = vunpack.c.0.s8 %v271
    %v1016 = vunpack.c.0.s8 %v272
    %v1017 = vunpack.c.0.s8 %v273
    %v1018 = vunpack.c.0.s8 %v274
    %v1019 = vunpack.c.0.s8 %v275
    %v1020 = vunpack.c.0.s8 %v276
    %v1021 = vunpack.c.1.s8 %v269
    %v1022 = vunpack.c.1.s8 %v270
    %v1023 = vunpack.c.1.s8 %v271
    %v1024 = vunpack.c.1.s8 %v272
    %v1025 = vunpack.c.1.s8 %v273
    %v1026 = vunpack.c.1.s8 %v274
    %v1027 = vunpack.c.1.s8 %v275
    %v1028 = vunpack.c.1.s8 %v276
    %v1029 = vunpack.c.2.s8 %v269
    %v1030 = vunpack.c.2.s8 %v270
    %v1031 = vunpack.c.2.s8 %v271
    %v1032 = vunpack.c.2.s8 %v272
    %v1033 = vunpack.c.2.s8 %v273
    %v1034 = vunpack.c.2.s8 %v274
    %v1035 = vunpack.c.2.s8 %v275
    %v1036 = vunpack.c.2.s8 %v276
    %v1037 = vunpack.c.3.s8 %v269
    %v1038 = vunpack.c.3.s8 %v270
    %v1039 = vunpack.c.3.s8 %v271
    %v1040 = vunpack.c.3.s8 %v272
    %v1041 = vunpack.c.3.s8 %v273
    %v1042 = vunpack.c.3.s8 %v274
    %v1043 = vunpack.c.3.s8 %v275
    %v1044 = vunpack.c.3.s8 %v276
    %v1045 = vcvt.s32.f32 %v277
    %v1046 = vcvt.s32.f32 %v278
    %v1047 = vcvt.s32.f32 %v279
    %v1048 = vcvt.s32.f32 %v280
    %v1049 = vcvt.s32.f32 %v281
    %v1050 = vcvt.s32.f32 %v282
    %v1051 = vcvt.s32.f32 %v283
    %v1052 = vcvt.s32.f32 %v284
    %v1053 = vcvt.s32.f32 %v285
    %v1054 = vcvt.s32.f32 %v286
    %v1055 = vcvt.s32.f32 %v287
    %v1056 = vcvt.s32.f32 %v288
    %v1057 = vcvt.s32.f32 %v289
    %v1058 = vcvt.s32.f32 %v290
    %v1059 = vcvt.s32.f32 %v291
    %v1060 = vcvt.s32.f32 %v292
    %v1061 = vcvt.s32.f32 %v293
    %v1062 = vcvt.s32.f32 %v294
    %v1063 = vcvt.s32.f32 %v295
    %v1064 = vcvt.s32.f32 %v296
    %v1065 = vcvt.s32.f32 %v297
    %v1066 = vcvt.s32.f32 %v298
    %v1067 = vcvt.s32.f32 %v299
    %v1068 = vcvt.s32.f32 %v300
    %v1069 = vcvt.s32.f32 %v301
    %v1070 = vcvt.s32.f32 %v302
    %v1071 = vcvt.s32.f32 %v303
    %v1072 = vcvt.s32.f32 %v304
    %v1073 = vcvt.s32.f32 %v305
    %v1074 = vcvt.s32.f32 %v306
    %v1075 = vcvt.s32.f32 %v307
    %v1076 = vcvt.s32.f32 %v308
    %v1077 = vcvt.s32.f32 %v309
    %v1078 = vcvt.s32.f32 %v310
    %v1079 = vcvt.s32.f32 %v311
    %v1080 = vcvt.s32.f32 %v312
    %v1081 = vcvt.s32.f32 %v313
    %v1082 = vcvt.s32.f32 %v314
    %v1083 = vcvt.s32.f32 %v315
    %v1084 = vcvt.s32.f32 %v316
    %v1085 = vcvt.s32.f32 %v317
    %v1086 = vcvt.s32.f32 %v318
    %v1087 = vcvt.s32.f32 %v319
    %v1088 = vcvt.s32.f32 %v320
    %v1089 = vcvt.s32.f32 %v321
    %v1090 = vcvt.s32.f32 %v322
    %v1091 = vcvt.s32.f32 %v323
    %v1092 = vcvt.s32.f32 %v324
    %v1093 = vcvt.s32.f32 %v325
    %v1094 = vcvt.s32.f32 %v326
    %v1095 = vcvt.s32.f32 %v327
    %v1096 = vcvt.s32.f32 %v328
    %v1097 = vcvt.s32.f32 %v329
    %v1098 = vcvt.s32.f32 %v330
    %v1099 = vcvt.s32.f32 %v331
    %v1100 = vcvt.s32.f32 %v332
    %v1101 = vcvt.s32.f32 %v333
    %v1102 = vcvt.s32.f32 %v334
    %v1103 = vcvt.s32.f32 %v335
    %v1104 = vcvt.s32.f32 %v336
    %v1105 = vcvt.s32.f32 %v337
    %v1106 = vcvt.s32.f32 %v338
    %v1107 = vcvt.s32.f32 %v339
    %v1108 = vcvt.s32.f32 %v340
    %v1109 = vcvt.s32.f32 %v341
    %v1110 = vcvt.s32.f32 %v342
    %v1111 = vcvt.s32.f32 %v343
    %v1112 = vcvt.s32.f32 %v344
    %v1113 = vcvt.s32.f32 %v345
    %v1114 = vcvt.s32.f32 %v346
    %v1115 = vcvt.s32.f32 %v347
    %v1116 = vcvt.s32.f32 %v348
    %v1117 = vcvt.s32.f32 %v349
    %v1118 = vcvt.s32.f32 %v350
    %v1119 = vcvt.s32.f32 %v351
    %v1120 = vcvt.s32.f32 %v352
    %v1121 = vcvt.s32.f32 %v353
    %v1122 = vcvt.s32.f32 %v354
    %v1123 = vcvt.s32.f32 %v355
    %v1124 = vcvt.s32.f32 %v356
    %v1125 = vcvt.s32.f32 %v357
    %v1126 = vcvt.s32.f32 %v358
    %v1127 = vcvt.s32.f32 %v359
    %v1128 = vcvt.s32.f32 %v360
    %v1129 = vcvt.s32.f32 %v361
    %v1130 = vcvt.s32.f32 %v362
    %v1131 = vcvt.s32.f32 %v363
    %v1132 = vcvt.s32.f32 %v364
    %v1133 = vcvt.s32.f32 %v365
    %v1134 = vcvt.s32.f32 %v366
    %v1135 = vcvt.s32.f32 %v367
    %v1136 = vcvt.s32.f32 %v368
    %v1137 = vcvt.s32.f32 %v369
    %v1138 = vcvt.s32.f32 %v370
    %v1139 = vcvt.s32.f32 %v371
    %v1140 = vcvt.s32.f32 %v372
    %v1141 = vcvt.s32.f32 %v373
    %v1142 = vcvt.s32.f32 %v374
    %v1143 = vcvt.s32.f32 %v375
    %v1144 = vcvt.s32.f32 %v376
    %v1145 = vcvt.s32.f32 %v377
    %v1146 = vcvt.s32.f32 %v378
    %v1147 = vcvt.s32.f32 %v379
    %v1148 = vcvt.s32.f32 %v380
    %v1149 = vcvt.s32.f32 %v381
    %v1150 = vcvt.s32.f32 %v382
    %v1151 = vcvt.s32.f32 %v383
    %v1152 = vcvt.s32.f32 %v384
    %v1153 = vcvt.s32.f32 %v385
    %v1154 = vcvt.s32.f32 %v386
    %v1155 = vcvt.s32.f32 %v387
    %v1156 = vcvt.s32.f32 %v388
    %v1157 = vcvt.s32.f32 %v389
    %v1158 = vcvt.s32.f32 %v390
    %v1159 = vcvt.s32.f32 %v391
    %v1160 = vcvt.s32.f32 %v392
    %v1161 = vcvt.s32.f32 %v393
    %v1162 = vcvt.s32.f32 %v394
    %v1163 = vcvt.s32.f32 %v395
    %v1164 = vcvt.s32.f32 %v396
    %v1165 = vcvt.s32.f32 %v397
    %v1166 = vcvt.s32.f32 %v398
    %v1167 = vcvt.s32.f32 %v399
    %v1168 = vcvt.s32.f32 %v400
    %v1169 = vcvt.s32.f32 %v401
    %v1170 = vcvt.s32.f32 %v402
    %v1171 = vcvt.s32.f32 %v403
    %v1172 = vcvt.s32.f32 %v404
    %v1173 = vcvt.s32.f32 %v405
    %v1174 = vcvt.s32.f32 %v406
    %v1175 = vcvt.s32.f32 %v407
    %v1176 = vcvt.s32.f32 %v408
    %v1177 = vcvt.s32.f32 %v409
    %v1178 = vcvt.s32.f32 %v410
    %v1179 = vcvt.s32.f32 %v411
    %v1180 = vcvt.s32.f32 %v412
    %v1181 = vcvt.s32.f32 %v413
    %v1182 = vcvt.s32.f32 %v414
    %v1183 = vcvt.s32.f32 %v415
    %v1184 = vcvt.s32.f32 %v416
    %v1185 = vcvt.s32.f32 %v417
    %v1186 = vcvt.s32.f32 %v418
    %v1187 = vcvt.s32.f32 %v419
    %v1188 = vcvt.s32.f32 %v420
    %v1189 = vcvt.s32.f32 %v421
    %v1190 = vcvt.s32.f32 %v422
    %v1191 = vcvt.s32.f32 %v423
    %v1192 = vcvt.s32.f32 %v424
    %v1193 = vcvt.s32.f32 %v425
    %v1194 = vcvt.s32.f32 %v426
    %v1195 = vcvt.s32.f32 %v427
    %v1196 = vcvt.s32.f32 %v428
    %v1197 = vcvt.s32.f32 %v429
    %v1198 = vcvt.s32.f32 %v430
    %v1199 = vcvt.s32.f32 %v431
    %v1200 = vcvt.s32.f32 %v432
    %v1201 = vcvt.s32.f32 %v433
    %v1202 = vcvt.s32.f32 %v434
    %v1203 = vcvt.s32.f32 %v435
    %v1204 = vcvt.s32.f32 %v436
    %v1205 = vcvt.s32.f32 %v437
    %v1206 = vcvt.s32.f32 %v438
    %v1207 = vcvt.s32.f32 %v439
    %v1208 = vcvt.s32.f32 %v440
    %v1209 = vcvt.s32.f32 %v441
    %v1210 = vcvt.s32.f32 %v442
    %v1211 = vcvt.s32.f32 %v443
    %v1212 = vcvt.s32.f32 %v444
    %v1213 = vcvt.s32.f32 %v445
    %v1214 = vcvt.s32.f32 %v446
    %v1215 = vcvt.s32.f32 %v447
    %v1216 = vcvt.s32.f32 %v448
    %v1217 = vcvt.s32.f32 %v449
    %v1218 = vcvt.s32.f32 %v450
    %v1219 = vcvt.s32.f32 %v451
    %v1220 = vcvt.s32.f32 %v452
    %v1221 = vcvt.s32.f32 %v453
    %v1222 = vcvt.s32.f32 %v454
    %v1223 = vcvt.s32.f32 %v455
    %v1224 = vcvt.s32.f32 %v456
    %v1225 = vcvt.s32.f32 %v457
    %v1226 = vcvt.s32.f32 %v458
    %v1227 = vcvt.s32.f32 %v459
    %v1228 = vcvt.s32.f32 %v460
    %v1229 = vcvt.s32.f32 %v461
    %v1230 = vcvt.s32.f32 %v462
    %v1231 = vcvt.s32.f32 %v463
    %v1232 = vcvt.s32.f32 %v464
    %v1233 = vcvt.s32.f32 %v465
    %v1234 = vcvt.s32.f32 %v466
    %v1235 = vcvt.s32.f32 %v467
    %v1236 = vcvt.s32.f32 %v468
    %v1237 = vcvt.s32.f32 %v469
    %v1238 = vcvt.s32.f32 %v470
    %v1239 = vcvt.s32.f32 %v471
    %v1240 = vcvt.s32.f32 %v472
    %v1241 = vcvt.s32.f32 %v473
    %v1242 = vcvt.s32.f32 %v474
    %v1243 = vcvt.s32.f32 %v475
    %v1244 = vcvt.s32.f32 %v476
    %v1245 = vcvt.s32.f32 %v477
    %v1246 = vcvt.s32.f32 %v478
    %v1247 = vcvt.s32.f32 %v479
    %v1248 = vcvt.s32.f32 %v480
    %v1249 = vcvt.s32.f32 %v481
    %v1250 = vcvt.s32.f32 %v482
    %v1251 = vcvt.s32.f32 %v483
    %v1252 = vcvt.s32.f32 %v484
    %v1253 = vcvt.s32.f32 %v485
    %v1254 = vcvt.s32.f32 %v486
    %v1255 = vcvt.s32.f32 %v487
    %v1256 = vcvt.s32.f32 %v488
    %v1257 = vcvt.s32.f32 %v489
    %v1258 = vcvt.s32.f32 %v490
    %v1259 = vcvt.s32.f32 %v491
    %v1260 = vcvt.s32.f32 %v492
    %v1261 = vcvt.s32.f32 %v493
    %v1262 = vcvt.s32.f32 %v494
    %v1263 = vcvt.s32.f32 %v495
    %v1264 = vcvt.s32.f32 %v496
    %v1265 = vcvt.s32.f32 %v497
    %v1266 = vcvt.s32.f32 %v498
    %v1267 = vcvt.s32.f32 %v499
    %v1268 = vcvt.s32.f32 %v500
    %v1269 = vcvt.s32.f32 %v501
    %v1270 = vcvt.s32.f32 %v502
    %v1271 = vcvt.s32.f32 %v503
    %v1272 = vcvt.s32.f32 %v504
    %v1273 = vcvt.s32.f32 %v505
    %v1274 = vcvt.s32.f32 %v506
    %v1275 = vcvt.s32.f32 %v507
    %v1276 = vcvt.s32.f32 %v508
    %v1277 = vcvt.s32.f32 %v509
    %v1278 = vcvt.s32.f32 %v510
    %v1279 = vcvt.s32.f32 %v511
    %v1280 = vcvt.s32.f32 %v512
    %v1281 = vcvt.s32.f32 %v513
    %v1282 = vcvt.s32.f32 %v514
    %v1283 = vcvt.s32.f32 %v515
    %v1284 = vcvt.s32.f32 %v516
    %v1285 = vcvt.s32.f32 %v517
    %v1286 = vcvt.s32.f32 %v518
    %v1287 = vcvt.s32.f32 %v519
    %v1288 = vcvt.s32.f32 %v520
    %v1289 = vcvt.s32.f32 %v521
    %v1290 = vcvt.s32.f32 %v522
    %v1291 = vcvt.s32.f32 %v523
    %v1292 = vcvt.s32.f32 %v524
    %v1293 = vcvt.s32.f32 %v525
    %v1294 = vcvt.s32.f32 %v526
    %v1295 = vcvt.s32.f32 %v527
    %v1296 = vcvt.s32.f32 %v528
    %v1297 = vcvt.s32.f32 %v529
    %v1298 = vcvt.s32.f32 %v530
    %v1299 = vcvt.s32.f32 %v531
    %v1300 = vcvt.s32.f32 %v532
    %v1301 = vcvt.s32.f32 %v533
    %v1302 = vcvt.s32.f32 %v534
    %v1303 = vcvt.s32.f32 %v535
    %v1304 = vcvt.s32.f32 %v536
    %v1305 = vcvt.s32.f32 %v537
    %v1306 = vcvt.s32.f32 %v538
    %v1307 = vcvt.s32.f32 %v539
    %v1308 = vcvt.s32.f32 %v540
    %v1309 = vcvt.s32.f32 %v541
    %v1310 = vcvt.s32.f32 %v542
    %v1311 = vcvt.s32.f32 %v543
    %v1312 = vcvt.s32.f32 %v544
    %v1313 = vcvt.s32.f32 %v545
    %v1314 = vcvt.s32.f32 %v546
    %v1315 = vcvt.s32.f32 %v547
    %v1316 = vcvt.s32.f32 %v548
    %v1317 = vcvt.s32.f32 %v549
    %v1318 = vcvt.s32.f32 %v550
    %v1319 = vcvt.s32.f32 %v551
    %v1320 = vcvt.s32.f32 %v552
    %v1321 = vcvt.s32.f32 %v553
    %v1322 = vcvt.s32.f32 %v554
    %v1323 = vcvt.s32.f32 %v555
    %v1324 = vcvt.s32.f32 %v556
    %v1325 = vcvt.s32.f32 %v557
    %v1326 = vcvt.s32.f32 %v558
    %v1327 = vcvt.s32.f32 %v559
    %v1328 = vcvt.s32.f32 %v560
    %v1329 = vcvt.s32.f32 %v561
    %v1330 = vcvt.s32.f32 %v562
    %v1331 = vcvt.s32.f32 %v563
    %v1332 = vcvt.s32.f32 %v564
    %v1333 = vcvt.s32.f32 %v565
    %v1334 = vcvt.s32.f32 %v566
    %v1335 = vcvt.s32.f32 %v567
    %v1336 = vcvt.s32.f32 %v568
    %v1337 = vcvt.s32.f32 %v569
    %v1338 = vcvt.s32.f32 %v570
    %v1339 = vcvt.s32.f32 %v571
    %v1340 = vcvt.s32.f32 %v572
    %v1341 = vcvt.s32.f32 %v573
    %v1342 = vcvt.s32.f32 %v574
    %v1343 = vcvt.s32.f32 %v575
    %v1344 = vcvt.s32.f32 %v576
    %v1345 = vcvt.s32.f32 %v577
    %v1346 = vcvt.s32.f32 %v578
    %v1347 = vcvt.s32.f32 %v579
    %v1348 = vcvt.s32.f32 %v580
    %v1349 = vcvt.s32.f32 %v581
    %v1350 = vcvt.s32.f32 %v582
    %v1351 = vcvt.s32.f32 %v583
    %v1352 = vcvt.s32.f32 %v584
    %v1353 = vcvt.s32.f32 %v585
    %v1354 = vcvt.s32.f32 %v586
    %v1355 = vcvt.s32.f32 %v587
    %v1356 = vcvt.s32.f32 %v588
    %v1357 = vcvt.s32.f32 %v589
    %v1358 = vcvt.s32.f32 %v590
    %v1359 = vcvt.s32.f32 %v591
    %v1360 = vcvt.s32.f32 %v592
    %v1361 = vcvt.s32.f32 %v593
    %v1362 = vcvt.s32.f32 %v594
    %v1363 = vcvt.s32.f32 %v595
    %v1364 = vcvt.s32.f32 %v596
    %v1365 = vcvt.s32.f32 %v597
    %v1366 = vcvt.s32.f32 %v598
    %v1367 = vcvt.s32.f32 %v599
    %v1368 = vcvt.s32.f32 %v600
    %v1369 = vcvt.s32.f32 %v601
    %v1370 = vcvt.s32.f32 %v602
    %v1371 = vcvt.s32.f32 %v603
    %v1372 = vcvt.s32.f32 %v604
    %v1373 = vcvt.s32.f32 %v605
    %v1374 = vcvt.s32.f32 %v606
    %v1375 = vcvt.s32.f32 %v607
    %v1376 = vcvt.s32.f32 %v608
    %v1377 = vcvt.s32.f32 %v609
    %v1378 = vcvt.s32.f32 %v610
    %v1379 = vcvt.s32.f32 %v611
    %v1380 = vcvt.s32.f32 %v612
    %v1381 = vcvt.s32.f32 %v613
    %v1382 = vcvt.s32.f32 %v614
    %v1383 = vcvt.s32.f32 %v615
    %v1384 = vcvt.s32.f32 %v616
    %v1385 = vcvt.s32.f32 %v617
    %v1386 = vcvt.s32.f32 %v618
    %v1387 = vcvt.s32.f32 %v619
    %v1388 = vcvt.s32.f32 %v620
    %v1389 = vcvt.s32.f32 %v621
    %v1390 = vcvt.s32.f32 %v622
    %v1391 = vcvt.s32.f32 %v623
    %v1392 = vcvt.s32.f32 %v624
    %v1393 = vcvt.s32.f32 %v625
    %v1394 = vcvt.s32.f32 %v626
    %v1395 = vcvt.s32.f32 %v627
    %v1396 = vcvt.s32.f32 %v628
    %v1397 = vcvt.s32.f32 %v629
    %v1398 = vcvt.s32.f32 %v630
    %v1399 = vcvt.s32.f32 %v631
    %v1400 = vcvt.s32.f32 %v632
    %v1401 = vcvt.s32.f32 %v633
    %v1402 = vcvt.s32.f32 %v634
    %v1403 = vcvt.s32.f32 %v635
    %v1404 = vcvt.s32.f32 %v636
    %v1405 = vcvt.s32.f32 %v637
    %v1406 = vcvt.s32.f32 %v638
    %v1407 = vcvt.s32.f32 %v639
    %v1408 = vcvt.s32.f32 %v640
    %v1409 = vcvt.s32.f32 %v641
    %v1410 = vcvt.s32.f32 %v642
    %v1411 = vcvt.s32.f32 %v643
    %v1412 = vcvt.s32.f32 %v644
    %v1413 = vcvt.s32.f32 %v645
    %v1414 = vcvt.s32.f32 %v646
    %v1415 = vcvt.s32.f32 %v647
    %v1416 = vcvt.s32.f32 %v648
    %v1417 = vcvt.s32.f32 %v649
    %v1418 = vcvt.s32.f32 %v650
    %v1419 = vcvt.s32.f32 %v651
    %v1420 = vcvt.s32.f32 %v652
    %v1421 = vcvt.s32.f32 %v653
    %v1422 = vcvt.s32.f32 %v654
    %v1423 = vcvt.s32.f32 %v655
    %v1424 = vcvt.s32.f32 %v656
    %v1425 = vcvt.s32.f32 %v657
    %v1426 = vcvt.s32.f32 %v658
    %v1427 = vcvt.s32.f32 %v659
    %v1428 = vcvt.s32.f32 %v660
    %v1429 = vcvt.s32.f32 %v661
    %v1430 = vcvt.s32.f32 %v662
    %v1431 = vcvt.s32.f32 %v663
    %v1432 = vcvt.s32.f32 %v664
    %v1433 = vcvt.s32.f32 %v665
    %v1434 = vcvt.s32.f32 %v666
    %v1435 = vcvt.s32.f32 %v667
    %v1436 = vcvt.s32.f32 %v668
    %v1437 = vcvt.s32.f32 %v669
    %v1438 = vcvt.s32.f32 %v670
    %v1439 = vcvt.s32.f32 %v671
    %v1440 = vcvt.s32.f32 %v672
    %v1441 = vcvt.s32.f32 %v673
    %v1442 = vcvt.s32.f32 %v674
    %v1443 = vcvt.s32.f32 %v675
    %v1444 = vcvt.s32.f32 %v676
    %v1445 = vcvt.s32.f32 %v677
    %v1446 = vcvt.s32.f32 %v678
    %v1447 = vcvt.s32.f32 %v679
    %v1448 = vcvt.s32.f32 %v680
    %v1449 = vcvt.s32.f32 %v681
    %v1450 = vcvt.s32.f32 %v682
    %v1451 = vcvt.s32.f32 %v683
    %v1452 = vcvt.s32.f32 %v684
    %v1453 = vcvt.s32.f32 %v685
    %v1454 = vcvt.s32.f32 %v686
    %v1455 = vcvt.s32.f32 %v687
    %v1456 = vcvt.s32.f32 %v688
    %v1457 = vcvt.s32.f32 %v689
    %v1458 = vcvt.s32.f32 %v690
    %v1459 = vcvt.s32.f32 %v691
    %v1460 = vcvt.s32.f32 %v692
    %v1461 = vcvt.s32.f32 %v693
    %v1462 = vcvt.s32.f32 %v694
    %v1463 = vcvt.s32.f32 %v695
    %v1464 = vcvt.s32.f32 %v696
    %v1465 = vcvt.s32.f32 %v697
    %v1466 = vcvt.s32.f32 %v698
    %v1467 = vcvt.s32.f32 %v699
    %v1468 = vcvt.s32.f32 %v700
    %v1469 = vcvt.s32.f32 %v701
    %v1470 = vcvt.s32.f32 %v702
    %v1471 = vcvt.s32.f32 %v703
    %v1472 = vcvt.s32.f32 %v704
    %v1473 = vcvt.s32.f32 %v705
    %v1474 = vcvt.s32.f32 %v706
    %v1475 = vcvt.s32.f32 %v707
    %v1476 = vcvt.s32.f32 %v708
    %v1477 = vcvt.s32.f32 %v709
    %v1478 = vcvt.s32.f32 %v710
    %v1479 = vcvt.s32.f32 %v711
    %v1480 = vcvt.s32.f32 %v712
    %v1481 = vcvt.s32.f32 %v713
    %v1482 = vcvt.s32.f32 %v714
    %v1483 = vcvt.s32.f32 %v715
    %v1484 = vcvt.s32.f32 %v716
    %v1485 = vcvt.s32.f32 %v717
    %v1486 = vcvt.s32.f32 %v718
    %v1487 = vcvt.s32.f32 %v719
    %v1488 = vcvt.s32.f32 %v720
    %v1489 = vcvt.s32.f32 %v721
    %v1490 = vcvt.s32.f32 %v722
    %v1491 = vcvt.s32.f32 %v723
    %v1492 = vcvt.s32.f32 %v724
    %v1493 = vcvt.s32.f32 %v725
    %v1494 = vcvt.s32.f32 %v726
    %v1495 = vcvt.s32.f32 %v727
    %v1496 = vcvt.s32.f32 %v728
    %v1497 = vcvt.s32.f32 %v729
    %v1498 = vcvt.s32.f32 %v730
    %v1499 = vcvt.s32.f32 %v731
    %v1500 = vcvt.s32.f32 %v732
    %v1501 = vcvt.s32.f32 %v733
    %v1502 = vcvt.s32.f32 %v734
    %v1503 = vcvt.s32.f32 %v735
    %v1504 = vcvt.s32.f32 %v736
    %v1505 = vcvt.s32.f32 %v737
    %v1506 = vcvt.s32.f32 %v738
    %v1507 = vcvt.s32.f32 %v739
    %v1508 = vcvt.s32.f32 %v740
    %v1509 = vcvt.s32.f32 %v741
    %v1510 = vcvt.s32.f32 %v742
    %v1511 = vcvt.s32.f32 %v743
    %v1512 = vcvt.s32.f32 %v744
    %v1513 = vcvt.s32.f32 %v745
    %v1514 = vcvt.s32.f32 %v746
    %v1515 = vcvt.s32.f32 %v747
    %v1516 = vcvt.s32.f32 %v748
    %v1517 = vcvt.s32.f32 %v749
    %v1518 = vcvt.s32.f32 %v750
    %v1519 = vcvt.s32.f32 %v751
    %v1520 = vcvt.s32.f32 %v752
    %v1521 = vcvt.s32.f32 %v753
    %v1522 = vcvt.s32.f32 %v754
    %v1523 = vcvt.s32.f32 %v755
    %v1524 = vcvt.s32.f32 %v756
    %v1525 = vcvt.s32.f32 %v757
    %v1526 = vcvt.s32.f32 %v758
    %v1527 = vcvt.s32.f32 %v759
    %v1528 = vcvt.s32.f32 %v760
    %v1529 = vcvt.s32.f32 %v761
    %v1530 = vcvt.s32.f32 %v762
    %v1531 = vcvt.s32.f32 %v763
    %v1532 = vcvt.s32.f32 %v764
    %v1533 = vcvt.s32.f32 %v765
    %v1534 = vcvt.s32.f32 %v766
    %v1535 = vcvt.s32.f32 %v767
    %v1536 = vcvt.s32.f32 %v768
    %v1537 = vcvt.s32.f32 %v769
    %v1538 = vcvt.s32.f32 %v770
    %v1539 = vcvt.s32.f32 %v771
    %v1540 = vcvt.s32.f32 %v772
    %v1541 = vcvt.s32.f32 %v773
    %v1542 = vcvt.s32.f32 %v774
    %v1543 = vcvt.s32.f32 %v775
    %v1544 = vcvt.s32.f32 %v776
    %v1545 = vcvt.s32.f32 %v777
    %v1546 = vcvt.s32.f32 %v778
    %v1547 = vcvt.s32.f32 %v779
    %v1548 = vcvt.s32.f32 %v780
    %v1549 = vcvt.s32.f32 %v781
    %v1550 = vcvt.s32.f32 %v782
    %v1551 = vcvt.s32.f32 %v783
    %v1552 = vcvt.s32.f32 %v784
    %v1553 = vcvt.s32.f32 %v785
    %v1554 = vcvt.s32.f32 %v786
    %v1555 = vcvt.s32.f32 %v787
    %v1556 = vcvt.s32.f32 %v788
    %v1557 = vcvt.s32.f32 %v789
    %v1558 = vcvt.s32.f32 %v790
    %v1559 = vcvt.s32.f32 %v791
    %v1560 = vcvt.s32.f32 %v792
    %v1561 = vcvt.s32.f32 %v793
    %v1562 = vcvt.s32.f32 %v794
    %v1563 = vcvt.s32.f32 %v795
    %v1564 = vcvt.s32.f32 %v796
    %v1565 = vcvt.s32.f32 %v797
    %v1566 = vcvt.s32.f32 %v798
    %v1567 = vcvt.s32.f32 %v799
    %v1568 = vcvt.s32.f32 %v800
    %v1569 = vcvt.s32.f32 %v801
    %v1570 = vcvt.s32.f32 %v802
    %v1571 = vcvt.s32.f32 %v803
    %v1572 = vcvt.s32.f32 %v804
    %v1573 = vcvt.s32.f32 %v805
    %v1574 = vcvt.s32.f32 %v806
    %v1575 = vcvt.s32.f32 %v807
    %v1576 = vcvt.s32.f32 %v808
    %v1577 = vcvt.s32.f32 %v809
    %v1578 = vcvt.s32.f32 %v810
    %v1579 = vcvt.s32.f32 %v811
    %v1580 = vcvt.s32.f32 %v812
    %v1581 = vcvt.s32.f32 %v813
    %v1582 = vcvt.s32.f32 %v814
    %v1583 = vcvt.s32.f32 %v815
    %v1584 = vcvt.s32.f32 %v816
    %v1585 = vcvt.s32.f32 %v817
    %v1586 = vcvt.s32.f32 %v818
    %v1587 = vcvt.s32.f32 %v819
    %v1588 = vcvt.s32.f32 %v820
    %v1589 = vcvt.s32.f32 %v821
    %v1590 = vcvt.s32.f32 %v822
    %v1591 = vcvt.s32.f32 %v823
    %v1592 = vcvt.s32.f32 %v824
    %v1593 = vcvt.s32.f32 %v825
    %v1594 = vcvt.s32.f32 %v826
    %v1595 = vcvt.s32.f32 %v827
    %v1596 = vcvt.s32.f32 %v828
    %v1597 = vcvt.s32.f32 %v829
    %v1598 = vcvt.s32.f32 %v830
    %v1599 = vcvt.s32.f32 %v831
    %v1600 = vcvt.s32.f32 %v832
    %v1601 = vcvt.s32.f32 %v833
    %v1602 = vcvt.s32.f32 %v834
    %v1603 = vcvt.s32.f32 %v835
    %v1604 = vcvt.s32.f32 %v836
    %v1605 = vcvt.s32.f32 %v837
    %v1606 = vcvt.s32.f32 %v838
    %v1607 = vcvt.s32.f32 %v839
    %v1608 = vcvt.s32.f32 %v840
    %v1609 = vcvt.s32.f32 %v841
    %v1610 = vcvt.s32.f32 %v842
    %v1611 = vcvt.s32.f32 %v843
    %v1612 = vcvt.s32.f32 %v844
    %v1613 = vcvt.s32.f32 %v845
    %v1614 = vcvt.s32.f32 %v846
    %v1615 = vcvt.s32.f32 %v847
    %v1616 = vcvt.s32.f32 %v848
    %v1617 = vcvt.s32.f32 %v849
    %v1618 = vcvt.s32.f32 %v850
    %v1619 = vcvt.s32.f32 %v851
    %v1620 = vcvt.s32.f32 %v852
    %v1621 = vcvt.s32.f32 %v853
    %v1622 = vcvt.s32.f32 %v854
    %v1623 = vcvt.s32.f32 %v855
    %v1624 = vcvt.s32.f32 %v856
    %v1625 = vcvt.s32.f32 %v857
    %v1626 = vcvt.s32.f32 %v858
    %v1627 = vcvt.s32.f32 %v859
    %v1628 = vcvt.s32.f32 %v860
    %v1629 = vcvt.s32.f32 %v861
    %v1630 = vcvt.s32.f32 %v862
    %v1631 = vcvt.s32.f32 %v863
    %v1632 = vcvt.s32.f32 %v864
    %v1633 = vcvt.s32.f32 %v865
    %v1634 = vcvt.s32.f32 %v866
    %v1635 = vcvt.s32.f32 %v867
    %v1636 = vcvt.s32.f32 %v868
    %v1637 = vcvt.s32.f32 %v869
    %v1638 = vcvt.s32.f32 %v870
    %v1639 = vcvt.s32.f32 %v871
    %v1640 = vcvt.s32.f32 %v872
    %v1641 = vcvt.s32.f32 %v873
    %v1642 = vcvt.s32.f32 %v874
    %v1643 = vcvt.s32.f32 %v875
    %v1644 = vcvt.s32.f32 %v876
    %v1645 = vcvt.s32.f32 %v877
    %v1646 = vcvt.s32.f32 %v878
    %v1647 = vcvt.s32.f32 %v879
    %v1648 = vcvt.s32.f32 %v880
    %v1649 = vcvt.s32.f32 %v881
    %v1650 = vcvt.s32.f32 %v882
    %v1651 = vcvt.s32.f32 %v883
    %v1652 = vcvt.s32.f32 %v884
    %v1653 = vcvt.s32.f32 %v885
    %v1654 = vcvt.s32.f32 %v886
    %v1655 = vcvt.s32.f32 %v887
    %v1656 = vcvt.s32.f32 %v888
    %v1657 = vcvt.s32.f32 %v889
    %v1658 = vcvt.s32.f32 %v890
    %v1659 = vcvt.s32.f32 %v891
    %v1660 = vcvt.s32.f32 %v892
    %v1661 = vcvt.s32.f32 %v893
    %v1662 = vcvt.s32.f32 %v894
    %v1663 = vcvt.s32.f32 %v895
    %v1664 = vcvt.s32.f32 %v896
    %v1665 = vcvt.s32.f32 %v897
    %v1666 = vcvt.s32.f32 %v898
    %v1667 = vcvt.s32.f32 %v899
    %v1668 = vcvt.s32.f32 %v900
    %v1669 = vcvt.s32.f32 %v901
    %v1670 = vcvt.s32.f32 %v902
    %v1671 = vcvt.s32.f32 %v903
    %v1672 = vcvt.s32.f32 %v904
    %v1673 = vcvt.s32.f32 %v905
    %v1674 = vcvt.s32.f32 %v906
    %v1675 = vcvt.s32.f32 %v907
    %v1676 = vcvt.s32.f32 %v908
    %v1677 = vcvt.s32.f32 %v909
    %v1678 = vcvt.s32.f32 %v910
    %v1679 = vcvt.s32.f32 %v911
    %v1680 = vcvt.s32.f32 %v912
    %v1681 = vcvt.s32.f32 %v913
    %v1682 = vcvt.s32.f32 %v914
    %v1683 = vcvt.s32.f32 %v915
    %v1684 = vcvt.s32.f32 %v916
    %v1685 = vcvt.s32.f32 %v917
    %v1686 = vcvt.s32.f32 %v918
    %v1687 = vcvt.s32.f32 %v919
    %v1688 = vcvt.s32.f32 %v920
    %v1689 = vcvt.s32.f32 %v921
    %v1690 = vcvt.s32.f32 %v922
    %v1691 = vcvt.s32.f32 %v923
    %v1692 = vcvt.s32.f32 %v924
    %v1693 = vcvt.s32.f32 %v925
    %v1694 = vcvt.s32.f32 %v926
    %v1695 = vcvt.s32.f32 %v927
    %v1696 = vcvt.s32.f32 %v928
    %v1697 = vcvt.s32.f32 %v929
    %v1698 = vcvt.s32.f32 %v930
    %v1699 = vcvt.s32.f32 %v931
    %v1700 = vcvt.s32.f32 %v932
    %v1701 = vcvt.s32.f32 %v933
    %v1702 = vcvt.s32.f32 %v934
    %v1703 = vcvt.s32.f32 %v935
    %v1704 = vcvt.s32.f32 %v936
    %v1705 = vcvt.s32.f32 %v937
    %v1706 = vcvt.s32.f32 %v938
    %v1707 = vcvt.s32.f32 %v939
    %v1708 = vcvt.s32.f32 %v940
    %v1709 = vcvt.s32.f32 %v941
    %v1710 = vcvt.s32.f32 %v942
    %v1711 = vcvt.s32.f32 %v943
    %v1712 = vcvt.s32.f32 %v944
    %v1713 = vcvt.s32.f32 %v945
    %v1714 = vcvt.s32.f32 %v946
    %v1715 = vcvt.s32.f32 %v947
    %v1716 = vcvt.s32.f32 %v948
    %v1717 = vcvt.s32.f32 %v949
    %v1718 = vcvt.s32.f32 %v950
    %v1719 = vcvt.s32.f32 %v951
    %v1720 = vcvt.s32.f32 %v952
    %v1721 = vcvt.s32.f32 %v953
    %v1722 = vcvt.s32.f32 %v954
    %v1723 = vcvt.s32.f32 %v955
    %v1724 = vcvt.s32.f32 %v956
    %v1725 = vcvt.s32.f32 %v957
    %v1726 = vcvt.s32.f32 %v958
    %v1727 = vcvt.s32.f32 %v959
    %v1728 = vcvt.s32.f32 %v960
    %v1729 = vcvt.s32.f32 %v961
    %v1730 = vcvt.s32.f32 %v962
    %v1731 = vcvt.s32.f32 %v963
    %v1732 = vcvt.s32.f32 %v964
    %v1733 = vcvt.s32.f32 %v965
    %v1734 = vcvt.s32.f32 %v966
    %v1735 = vcvt.s32.f32 %v967
    %v1736 = vcvt.s32.f32 %v968
    %v1737 = vcvt.s32.f32 %v969
    %v1738 = vcvt.s32.f32 %v970
    %v1739 = vcvt.s32.f32 %v971
    %v1740 = vcvt.s32.f32 %v972
    %v1741 = vcvt.s32.f32 %v973
    %v1742 = vcvt.s32.f32 %v974
    %v1743 = vcvt.s32.f32 %v975
    %v1744 = vcvt.s32.f32 %v976
    %v1745 = vcvt.s32.f32 %v977
    %v1746 = vcvt.s32.f32 %v978
    %v1747 = vcvt.s32.f32 %v979
    %v1748 = vcvt.s32.f32 %v980
    %v1749 = vcvt.s32.f32 %v981
    %v1750 = vcvt.s32.f32 %v982
    %v1751 = vcvt.s32.f32 %v983
    %v1752 = vcvt.s32.f32 %v984
    %v1753 = vcvt.s32.f32 %v985
    %v1754 = vcvt.s32.f32 %v986
    %v1755 = vcvt.s32.f32 %v987
    %v1756 = vcvt.s32.f32 %v988
    %v1757 = vcvt.s32.f32 %v989
    %v1758 = vcvt.s32.f32 %v990
    %v1759 = vcvt.s32.f32 %v991
    %v1760 = vcvt.s32.f32 %v992
    %v1761 = vcvt.s32.f32 %v993
    %v1762 = vcvt.s32.f32 %v994
    %v1763 = vcvt.s32.f32 %v995
    %v1764 = vcvt.s32.f32 %v996
    %v1765 = vcvt.s32.f32 %v997
    %v1766 = vcvt.s32.f32 %v998
    %v1767 = vcvt.s32.f32 %v999
    %v1768 = vcvt.s32.f32 %v1000
    %v1769 = vcvt.s32.f32 %v1001
    %v1770 = vcvt.s32.f32 %v1002
    %v1771 = vcvt.s32.f32 %v1003
    %v1772 = vcvt.s32.f32 %v1004
    %v1773 = vcvt.s32.f32 %v1005
    %v1774 = vcvt.s32.f32 %v1006
    %v1775 = vcvt.s32.f32 %v1007
    %v1776 = vcvt.s32.f32 %v1008
    %v1777 = vcvt.s32.f32 %v1009
    %v1778 = vcvt.s32.f32 %v1010
    %v1779 = vcvt.s32.f32 %v1011
    %v1780 = vcvt.s32.f32 %v1012
    %v1781 = vcvt.s32.f32 %v1013
    %v1782 = vcvt.s32.f32 %v1014
    %v1783 = vcvt.s32.f32 %v1015
    %v1784 = vcvt.s32.f32 %v1016
    %v1785 = vcvt.s32.f32 %v1017
    %v1786 = vcvt.s32.f32 %v1018
    %v1787 = vcvt.s32.f32 %v1019
    %v1788 = vcvt.s32.f32 %v1020
    %v1789 = vcvt.s32.f32 %v1021
    %v1790 = vcvt.s32.f32 %v1022
    %v1791 = vcvt.s32.f32 %v1023
    %v1792 = vcvt.s32.f32 %v1024
    %v1793 = vcvt.s32.f32 %v1025
    %v1794 = vcvt.s32.f32 %v1026
    %v1795 = vcvt.s32.f32 %v1027
    %v1796 = vcvt.s32.f32 %v1028
    %v1797 = vcvt.s32.f32 %v1029
    %v1798 = vcvt.s32.f32 %v1030
    %v1799 = vcvt.s32.f32 %v1031
    %v1800 = vcvt.s32.f32 %v1032
    %v1801 = vcvt.s32.f32 %v1033
    %v1802 = vcvt.s32.f32 %v1034
    %v1803 = vcvt.s32.f32 %v1035
    %v1804 = vcvt.s32.f32 %v1036
    %v1805 = vcvt.s32.f32 %v1037
    %v1806 = vcvt.s32.f32 %v1038
    %v1807 = vcvt.s32.f32 %v1039
    %v1808 = vcvt.s32.f32 %v1040
    %v1809 = vcvt.s32.f32 %v1041
    %v1810 = vcvt.s32.f32 %v1042
    %v1811 = vcvt.s32.f32 %v1043
    %v1812 = vcvt.s32.f32 %v1044
    %1813 = vmatprep.subr.mxu0 %v1166
    %1814 = vmatpush1.msra.mxu0 %v1165
    %1815 = vmatprep.subr.mxu0 %v1158
    %1816 = vmatpush1.msra.mxu0 %v1157
    %1817 = vmatprep.subr.mxu0 %v1150
    %1818 = vmatpush1.msra.mxu0 %v1149
    %1819 = vmatprep.subr.mxu0 %v1142
    %1820 = vmatpush1.msra.mxu0 %v1141
    %1821 = vmatprep.subr.mxu0 %v1134
    %1822 = vmatpush1.msra.mxu0 %v1133
    %1823 = vmatprep.subr.mxu0 %v1126
    %1824 = vmatpush1.msra.mxu0 %v1125
    %1825 = vmatprep.subr.mxu0 %v1118
    %1826 = vmatpush1.msra.mxu0 %v1117
    %1827 = vmatprep.subr.mxu0 %v1110
    %1828 = vmatpush1.msra.mxu0 %v1109
    %1829 = vmatprep.subr.mxu0 %v1102
    %1830 = vmatpush1.msra.mxu0 %v1101
    %1831 = vmatprep.subr.mxu0 %v1094
    %1832 = vmatpush1.msra.mxu0 %v1093
    %1833 = vmatprep.subr.mxu0 %v1086
    %1834 = vmatpush1.msra.mxu0 %v1085
    %1835 = vmatprep.subr.mxu0 %v1078
    %1836 = vmatpush1.msra.mxu0 %v1077
    %1837 = vmatprep.subr.mxu0 %v1070
    %1838 = vmatpush1.msra.mxu0 %v1069
    %1839 = vmatprep.subr.mxu0 %v1062
    %1840 = vmatpush1.msra.mxu0 %v1061
    %1841 = vmatprep.subr.mxu0 %v1054
    %1842 = vmatpush1.msra.mxu0 %v1053
    %1843 = vmatprep.subr.mxu0 %v1046
    %1844 = vmatpush1.msra.mxu0 %v1045
    %1845 = vmatprep.subr.mxu0 %v1294
    %1846 = vmatpush2.msra.mxu0 %v1293
    %1847 = vmatprep.subr.mxu0 %v1286
    %1848 = vmatpush2.msra.mxu0 %v1285
    %1849 = vmatprep.subr.mxu0 %v1278
    %1850 = vmatpush2.msra.mxu0 %v1277
    %1851 = vmatprep.subr.mxu0 %v1270
    %1852 = vmatpush2.msra.mxu0 %v1269
    %1853 = vmatprep.subr.mxu0 %v1262
    %1854 = vmatpush2.msra.mxu0 %v1261
    %1855 = vmatprep.subr.mxu0 %v1254
    %1856 = vmatpush2.msra.mxu0 %v1253
    %1857 = vmatprep.subr.mxu0 %v1246
    %1858 = vmatpush2.msra.mxu0 %v1245
    %1859 = vmatprep.subr.mxu0 %v1238
    %1860 = vmatpush2.msra.mxu0 %v1237
    %1861 = vmatprep.subr.mxu0 %v1230
    %1862 = vmatpush2.msra.mxu0 %v1229
    %1863 = vmatprep.subr.mxu0 %v1222
    %1864 = vmatpush2.msra.mxu0 %v1221
    %1865 = vmatprep.subr.mxu0 %v1214
    %1866 = vmatpush2.msra.mxu0 %v1213
    %1867 = vmatprep.subr.mxu0 %v1206
    %1868 = vmatpush2.msra.mxu0 %v1205
    %1869 = vmatprep.subr.mxu0 %v1198
    %1870 = vmatpush2.msra.mxu0 %v1197
    %1871 = vmatprep.subr.mxu0 %v1190
    %1872 = vmatpush2.msra.mxu0 %v1189
    %1873 = vmatprep.subr.mxu0 %v1182
    %1874 = vmatpush2.msra.mxu0 %v1181
    %1875 = vmatprep.subr.mxu0 %v1174
    %1876 = vmatpush2.msra.mxu0 %v1173
    %1877 = vmatprep.mubr.f32.mxu0 %v80
    %1878 = vmatmul.mubr.f32.gmra.mxu0 %v79
    %v1879 = vpop.f32.mrf.mxu0
    %v1880 = vadd.f32 0.0, %v1879
    %v1881 = vpop.f32.mrf.mxu0
    %v1882 = vadd.f32 0.0, %v1881
    %1883 = vdwg.mxu0
    %1884 = vmatprep.subr.mxu0 %v1422
    %1885 = vmatpush1.msra.mxu0 %v1421
    %1886 = vmatprep.subr.mxu0 %v1414
    %1887 = vmatpush1.msra.mxu0 %v1413
    %1888 = vmatprep.subr.mxu0 %v1406
    %1889 = vmatpush1.msra.mxu0 %v1405
    %1890 = vmatprep.subr.mxu0 %v1398
    %1891 = vmatpush1.msra.mxu0 %v1397
    %1892 = vmatprep.subr.mxu0 %v1390
    %1893 = vmatpush1.msra.mxu0 %v1389
    %1894 = vmatprep.subr.mxu0 %v1382
    %1895 = vmatpush1.msra.mxu0 %v1381
    %1896 = vmatprep.subr.mxu0 %v1374
    %1897 = vmatpush1.msra.mxu0 %v1373
    %1898 = vmatprep.subr.mxu0 %v1366
    %1899 = vmatpush1.msra.mxu0 %v1365
    %1900 = vmatprep.subr.mxu0 %v1358
    %1901 = vmatpush1.msra.mxu0 %v1357
    %1902 = vmatprep.subr.mxu0 %v1350
    %1903 = vmatpush1.msra.mxu0 %v1349
    %1904 = vmatprep.subr.mxu0 %v1342
    %1905 = vmatpush1.msra.mxu0 %v1341
    %1906 = vmatprep.subr.mxu0 %v1334
    %1907 = vmatpush1.msra.mxu0 %v1333
    %1908 = vmatprep.subr.mxu0 %v1326
    %1909 = vmatpush1.msra.mxu0 %v1325
    %1910 = vmatprep.subr.mxu0 %v1318
    %1911 = vmatpush1.msra.mxu0 %v1317
    %1912 = vmatprep.subr.mxu0 %v1310
    %1913 = vmatpush1.msra.mxu0 %v1309
    %1914 = vmatprep.subr.mxu0 %v1302
    %1915 = vmatpush1.msra.mxu0 %v1301
    %1916 = vmatprep.subr.mxu0 %v1550
    %1917 = vmatpush2.msra.mxu0 %v1549
    %1918 = vmatprep.subr.mxu0 %v1542
    %1919 = vmatpush2.msra.mxu0 %v1541
    %1920 = vmatprep.subr.mxu0 %v1534
    %1921 = vmatpush2.msra.mxu0 %v1533
    %1922 = vmatprep.subr.mxu0 %v1526
    %1923 = vmatpush2.msra.mxu0 %v1525
    %1924 = vmatprep.subr.mxu0 %v1518
    %1925 = vmatpush2.msra.mxu0 %v1517
    %1926 = vmatprep.subr.mxu0 %v1510
    %1927 = vmatpush2.msra.mxu0 %v1509
    %1928 = vmatprep.subr.mxu0 %v1502
    %1929 = vmatpush2.msra.mxu0 %v1501
    %1930 = vmatprep.subr.mxu0 %v1494
    %1931 = vmatpush2.msra.mxu0 %v1493
    %1932 = vmatprep.subr.mxu0 %v1486
    %1933 = vmatpush2.msra.mxu0 %v1485
    %1934 = vmatprep.subr.mxu0 %v1478
    %1935 = vmatpush2.msra.mxu0 %v1477
    %1936 = vmatprep.subr.mxu0 %v1470
    %1937 = vmatpush2.msra.mxu0 %v1469
    %1938 = vmatprep.subr.mxu0 %v1462
    %1939 = vmatpush2.msra.mxu0 %v1461
    %1940 = vmatprep.subr.mxu0 %v1454
    %1941 = vmatpush2.msra.mxu0 %v1453
    %1942 = vmatprep.subr.mxu0 %v1446
    %1943 = vmatpush2.msra.mxu0 %v1445
    %1944 = vmatprep.subr.mxu0 %v1438
    %1945 = vmatpush2.msra.mxu0 %v1437
    %1946 = vmatprep.subr.mxu0 %v1430
    %1947 = vmatpush2.msra.mxu0 %v1429
    %1948 = vmatprep.mubr.f32.mxu0 %v82
    %1949 = vmatmul.mubr.f32.gmra.mxu0 %v81
    %v1950 = vpop.f32.mrf.mxu0
    %v1951 = vadd.f32 %v1880, %v1950
    %v1952 = vpop.f32.mrf.mxu0
    %v1953 = vadd.f32 %v1882, %v1952
    %1954 = vdwg.mxu0
    %1955 = vmatprep.subr.mxu0 %v1678
    %1956 = vmatpush1.msra.mxu0 %v1677
    %1957 = vmatprep.subr.mxu0 %v1670
    %1958 = vmatpush1.msra.mxu0 %v1669
    %1959 = vmatprep.subr.mxu0 %v1662
    %1960 = vmatpush1.msra.mxu0 %v1661
    %1961 = vmatprep.subr.mxu0 %v1654
    %1962 = vmatpush1.msra.mxu0 %v1653
    %1963 = vmatprep.subr.mxu0 %v1646
    %1964 = vmatpush1.msra.mxu0 %v1645
    %1965 = vmatprep.subr.mxu0 %v1638
    %1966 = vmatpush1.msra.mxu0 %v1637
    %1967 = vmatprep.subr.mxu0 %v1630
    %1968 = vmatpush1.msra.mxu0 %v1629
    %1969 = vmatprep.subr.mxu0 %v1622
    %1970 = vmatpush1.msra.mxu0 %v1621
    %1971 = vmatprep.subr.mxu0 %v1614
    %1972 = vmatpush1.msra.mxu0 %v1613
    %1973 = vmatprep.subr.mxu0 %v1606
    %1974 = vmatpush1.msra.mxu0 %v1605
    %1975 = vmatprep.subr.mxu0 %v1598
    %1976 = vmatpush1.msra.mxu0 %v1597
    %1977 = vmatprep.subr.mxu0 %v1590
    %1978 = vmatpush1.msra.mxu0 %v1589
    %1979 = vmatprep.subr.mxu0 %v1582
    %1980 = vmatpush1.msra.mxu0 %v1581
    %1981 = vmatprep.subr.mxu0 %v1574
    %1982 = vmatpush1.msra.mxu0 %v1573
    %1983 = vmatprep.subr.mxu0 %v1566
    %1984 = vmatpush1.msra.mxu0 %v1565
    %1985 = vmatprep.subr.mxu0 %v1558
    %1986 = vmatpush1.msra.mxu0 %v1557
    %1987 = vmatprep.subr.mxu0 %v1806
    %1988 = vmatpush2.msra.mxu0 %v1805
    %1989 = vmatprep.subr.mxu0 %v1798
    %1990 = vmatpush2.msra.mxu0 %v1797
    %1991 = vmatprep.subr.mxu0 %v1790
    %1992 = vmatpush2.msra.mxu0 %v1789
    %1993 = vmatprep.subr.mxu0 %v1782
    %1994 = vmatpush2.msra.mxu0 %v1781
    %1995 = vmatprep.subr.mxu0 %v1774
    %1996 = vmatpush2.msra.mxu0 %v1773
    %1997 = vmatprep.subr.mxu0 %v1766
    %1998 = vmatpush2.msra.mxu0 %v1765
    %1999 = vmatprep.subr.mxu0 %v1758
    %2000 = vmatpush2.msra.mxu0 %v1757
    %2001 = vmatprep.subr.mxu0 %v1750
    %2002 = vmatpush2.msra.mxu0 %v1749
    %2003 = vmatprep.subr.mxu0 %v1742
    %2004 = vmatpush2.msra.mxu0 %v1741
    %2005 = vmatprep.subr.mxu0 %v1734
    %2006 = vmatpush2.msra.mxu0 %v1733
    %2007 = vmatprep.subr.mxu0 %v1726
    %2008 = vmatpush2.msra.mxu0 %v1725
    %2009 = vmatprep.subr.mxu0 %v1718
    %2010 = vmatpush2.msra.mxu0 %v1717
    %2011 = vmatprep.subr.mxu0 %v1710
    %2012 = vmatpush2.msra.mxu0 %v1709
    %2013 = vmatprep.subr.mxu0 %v1702
    %2014 = vmatpush2.msra.mxu0 %v1701
    %2015 = vmatprep.subr.mxu0 %v1694
    %2016 = vmatpush2.msra.mxu0 %v1693
    %2017 = vmatprep.subr.mxu0 %v1686
    %2018 = vmatpush2.msra.mxu0 %v1685
    %2019 = vmatprep.mubr.f32.mxu0 %v84
    %2020 = vmatmul.mubr.f32.gmra.mxu0 %v83
    %v2021 = vpop.f32.mrf.mxu0
    %v2022 = vadd.f32 %v1951, %v2021
    %v2023 = vpop.f32.mrf.mxu0
    %v2024 = vadd.f32 %v1953, %v2023
    %2025 = vdwg.mxu0
    %2026 = vmatprep.subr.mxu0 %v1168
    %2027 = vmatpush1.msra.mxu0 %v1167
    %2028 = vmatprep.subr.mxu0 %v1160
    %2029 = vmatpush1.msra.mxu0 %v1159
    %2030 = vmatprep.subr.mxu0 %v1152
    %2031 = vmatpush1.msra.mxu0 %v1151
    %2032 = vmatprep.subr.mxu0 %v1144
    %2033 = vmatpush1.msra.mxu0 %v1143
    %2034 = vmatprep.subr.mxu0 %v1136
    %2035 = vmatpush1.msra.mxu0 %v1135
    %2036 = vmatprep.subr.mxu0 %v1128
    %2037 = vmatpush1.msra.mxu0 %v1127
    %2038 = vmatprep.subr.mxu0 %v1120
    %2039 = vmatpush1.msra.mxu0 %v1119
    %2040 = vmatprep.subr.mxu0 %v1112
    %2041 = vmatpush1.msra.mxu0 %v1111
    %2042 = vmatprep.subr.mxu0 %v1104
    %2043 = vmatpush1.msra.mxu0 %v1103
    %2044 = vmatprep.subr.mxu0 %v1096
    %2045 = vmatpush1.msra.mxu0 %v1095
    %2046 = vmatprep.subr.mxu0 %v1088
    %2047 = vmatpush1.msra.mxu0 %v1087
    %2048 = vmatprep.subr.mxu0 %v1080
    %2049 = vmatpush1.msra.mxu0 %v1079
    %2050 = vmatprep.subr.mxu0 %v1072
    %2051 = vmatpush1.msra.mxu0 %v1071
    %2052 = vmatprep.subr.mxu0 %v1064
    %2053 = vmatpush1.msra.mxu0 %v1063
    %2054 = vmatprep.subr.mxu0 %v1056
    %2055 = vmatpush1.msra.mxu0 %v1055
    %2056 = vmatprep.subr.mxu0 %v1048
    %2057 = vmatpush1.msra.mxu0 %v1047
    %2058 = vmatprep.subr.mxu0 %v1296
    %2059 = vmatpush2.msra.mxu0 %v1295
    %2060 = vmatprep.subr.mxu0 %v1288
    %2061 = vmatpush2.msra.mxu0 %v1287
    %2062 = vmatprep.subr.mxu0 %v1280
    %2063 = vmatpush2.msra.mxu0 %v1279
    %2064 = vmatprep.subr.mxu0 %v1272
    %2065 = vmatpush2.msra.mxu0 %v1271
    %2066 = vmatprep.subr.mxu0 %v1264
    %2067 = vmatpush2.msra.mxu0 %v1263
    %2068 = vmatprep.subr.mxu0 %v1256
    %2069 = vmatpush2.msra.mxu0 %v1255
    %2070 = vmatprep.subr.mxu0 %v1248
    %2071 = vmatpush2.msra.mxu0 %v1247
    %2072 = vmatprep.subr.mxu0 %v1240
    %2073 = vmatpush2.msra.mxu0 %v1239
    %2074 = vmatprep.subr.mxu0 %v1232
    %2075 = vmatpush2.msra.mxu0 %v1231
    %2076 = vmatprep.subr.mxu0 %v1224
    %2077 = vmatpush2.msra.mxu0 %v1223
    %2078 = vmatprep.subr.mxu0 %v1216
    %2079 = vmatpush2.msra.mxu0 %v1215
    %2080 = vmatprep.subr.mxu0 %v1208
    %2081 = vmatpush2.msra.mxu0 %v1207
    %2082 = vmatprep.subr.mxu0 %v1200
    %2083 = vmatpush2.msra.mxu0 %v1199
    %2084 = vmatprep.subr.mxu0 %v1192
    %2085 = vmatpush2.msra.mxu0 %v1191
    %2086 = vmatprep.subr.mxu0 %v1184
    %2087 = vmatpush2.msra.mxu0 %v1183
    %2088 = vmatprep.subr.mxu0 %v1176
    %2089 = vmatpush2.msra.mxu0 %v1175
    %2090 = vmatprep.mubr.f32.mxu0 %v80
    %2091 = vmatmul.mubr.f32.gmra.mxu0 %v79
    %v2092 = vpop.f32.mrf.mxu0
    %v2093 = vadd.f32 0.0, %v2092
    %v2094 = vpop.f32.mrf.mxu0
    %v2095 = vadd.f32 0.0, %v2094
    %2096 = vdwg.mxu0
    %2097 = vmatprep.subr.mxu0 %v1424
    %2098 = vmatpush1.msra.mxu0 %v1423
    %2099 = vmatprep.subr.mxu0 %v1416
    %2100 = vmatpush1.msra.mxu0 %v1415
    %2101 = vmatprep.subr.mxu0 %v1408
    %2102 = vmatpush1.msra.mxu0 %v1407
    %2103 = vmatprep.subr.mxu0 %v1400
    %2104 = vmatpush1.msra.mxu0 %v1399
    %2105 = vmatprep.subr.mxu0 %v1392
    %2106 = vmatpush1.msra.mxu0 %v1391
    %2107 = vmatprep.subr.mxu0 %v1384
    %2108 = vmatpush1.msra.mxu0 %v1383
    %2109 = vmatprep.subr.mxu0 %v1376
    %2110 = vmatpush1.msra.mxu0 %v1375
    %2111 = vmatprep.subr.mxu0 %v1368
    %2112 = vmatpush1.msra.mxu0 %v1367
    %2113 = vmatprep.subr.mxu0 %v1360
    %2114 = vmatpush1.msra.mxu0 %v1359
    %2115 = vmatprep.subr.mxu0 %v1352
    %2116 = vmatpush1.msra.mxu0 %v1351
    %2117 = vmatprep.subr.mxu0 %v1344
    %2118 = vmatpush1.msra.mxu0 %v1343
    %2119 = vmatprep.subr.mxu0 %v1336
    %2120 = vmatpush1.msra.mxu0 %v1335
    %2121 = vmatprep.subr.mxu0 %v1328
    %2122 = vmatpush1.msra.mxu0 %v1327
    %2123 = vmatprep.subr.mxu0 %v1320
    %2124 = vmatpush1.msra.mxu0 %v1319
    %2125 = vmatprep.subr.mxu0 %v1312
    %2126 = vmatpush1.msra.mxu0 %v1311
    %2127 = vmatprep.subr.mxu0 %v1304
    %2128 = vmatpush1.msra.mxu0 %v1303
    %2129 = vmatprep.subr.mxu0 %v1552
    %2130 = vmatpush2.msra.mxu0 %v1551
    %2131 = vmatprep.subr.mxu0 %v1544
    %2132 = vmatpush2.msra.mxu0 %v1543
    %2133 = vmatprep.subr.mxu0 %v1536
    %2134 = vmatpush2.msra.mxu0 %v1535
    %2135 = vmatprep.subr.mxu0 %v1528
    %2136 = vmatpush2.msra.mxu0 %v1527
    %2137 = vmatprep.subr.mxu0 %v1520
    %2138 = vmatpush2.msra.mxu0 %v1519
    %2139 = vmatprep.subr.mxu0 %v1512
    %2140 = vmatpush2.msra.mxu0 %v1511
    %2141 = vmatprep.subr.mxu0 %v1504
    %2142 = vmatpush2.msra.mxu0 %v1503
    %2143 = vmatprep.subr.mxu0 %v1496
    %2144 = vmatpush2.msra.mxu0 %v1495
    %2145 = vmatprep.subr.mxu0 %v1488
    %2146 = vmatpush2.msra.mxu0 %v1487
    %2147 = vmatprep.subr.mxu0 %v1480
    %2148 = vmatpush2.msra.mxu0 %v1479
    %2149 = vmatprep.subr.mxu0 %v1472
    %2150 = vmatpush2.msra.mxu0 %v1471
    %2151 = vmatprep.subr.mxu0 %v1464
    %2152 = vmatpush2.msra.mxu0 %v1463
    %2153 = vmatprep.subr.mxu0 %v1456
    %2154 = vmatpush2.msra.mxu0 %v1455
    %2155 = vmatprep.subr.mxu0 %v1448
    %2156 = vmatpush2.msra.mxu0 %v1447
    %2157 = vmatprep.subr.mxu0 %v1440
    %2158 = vmatpush2.msra.mxu0 %v1439
    %2159 = vmatprep.subr.mxu0 %v1432
    %2160 = vmatpush2.msra.mxu0 %v1431
    %2161 = vmatprep.mubr.f32.mxu0 %v82
    %2162 = vmatmul.mubr.f32.gmra.mxu0 %v81
    %v2163 = vpop.f32.mrf.mxu0
    %v2164 = vadd.f32 %v2093, %v2163
    %v2165 = vpop.f32.mrf.mxu0
    %v2166 = vadd.f32 %v2095, %v2165
    %2167 = vdwg.mxu0
    %2168 = vmatprep.subr.mxu0 %v1680
    %2169 = vmatpush1.msra.mxu0 %v1679
    %2170 = vmatprep.subr.mxu0 %v1672
    %2171 = vmatpush1.msra.mxu0 %v1671
    %2172 = vmatprep.subr.mxu0 %v1664
    %2173 = vmatpush1.msra.mxu0 %v1663
    %2174 = vmatprep.subr.mxu0 %v1656
    %2175 = vmatpush1.msra.mxu0 %v1655
    %2176 = vmatprep.subr.mxu0 %v1648
    %2177 = vmatpush1.msra.mxu0 %v1647
    %2178 = vmatprep.subr.mxu0 %v1640
    %2179 = vmatpush1.msra.mxu0 %v1639
    %2180 = vmatprep.subr.mxu0 %v1632
    %2181 = vmatpush1.msra.mxu0 %v1631
    %2182 = vmatprep.subr.mxu0 %v1624
    %2183 = vmatpush1.msra.mxu0 %v1623
    %2184 = vmatprep.subr.mxu0 %v1616
    %2185 = vmatpush1.msra.mxu0 %v1615
    %2186 = vmatprep.subr.mxu0 %v1608
    %2187 = vmatpush1.msra.mxu0 %v1607
    %2188 = vmatprep.subr.mxu0 %v1600
    %2189 = vmatpush1.msra.mxu0 %v1599
    %2190 = vmatprep.subr.mxu0 %v1592
    %2191 = vmatpush1.msra.mxu0 %v1591
    %2192 = vmatprep.subr.mxu0 %v1584
    %2193 = vmatpush1.msra.mxu0 %v1583
    %2194 = vmatprep.subr.mxu0 %v1576
    %2195 = vmatpush1.msra.mxu0 %v1575
    %2196 = vmatprep.subr.mxu0 %v1568
    %2197 = vmatpush1.msra.mxu0 %v1567
    %2198 = vmatprep.subr.mxu0 %v1560
    %2199 = vmatpush1.msra.mxu0 %v1559
    %2200 = vmatprep.subr.mxu0 %v1808
    %2201 = vmatpush2.msra.mxu0 %v1807
    %2202 = vmatprep.subr.mxu0 %v1800
    %2203 = vmatpush2.msra.mxu0 %v1799
    %2204 = vmatprep.subr.mxu0 %v1792
    %2205 = vmatpush2.msra.mxu0 %v1791
    %2206 = vmatprep.subr.mxu0 %v1784
    %2207 = vmatpush2.msra.mxu0 %v1783
    %2208 = vmatprep.subr.mxu0 %v1776
    %2209 = vmatpush2.msra.mxu0 %v1775
    %2210 = vmatprep.subr.mxu0 %v1768
    %2211 = vmatpush2.msra.mxu0 %v1767
    %2212 = vmatprep.subr.mxu0 %v1760
    %2213 = vmatpush2.msra.mxu0 %v1759
    %2214 = vmatprep.subr.mxu0 %v1752
    %2215 = vmatpush2.msra.mxu0 %v1751
    %2216 = vmatprep.subr.mxu0 %v1744
    %2217 = vmatpush2.msra.mxu0 %v1743
    %2218 = vmatprep.subr.mxu0 %v1736
    %2219 = vmatpush2.msra.mxu0 %v1735
    %2220 = vmatprep.subr.mxu0 %v1728
    %2221 = vmatpush2.msra.mxu0 %v1727
    %2222 = vmatprep.subr.mxu0 %v1720
    %2223 = vmatpush2.msra.mxu0 %v1719
    %2224 = vmatprep.subr.mxu0 %v1712
    %2225 = vmatpush2.msra.mxu0 %v1711
    %2226 = vmatprep.subr.mxu0 %v1704
    %2227 = vmatpush2.msra.mxu0 %v1703
    %2228 = vmatprep.subr.mxu0 %v1696
    %2229 = vmatpush2.msra.mxu0 %v1695
    %2230 = vmatprep.subr.mxu0 %v1688
    %2231 = vmatpush2.msra.mxu0 %v1687
    %2232 = vmatprep.mubr.f32.mxu0 %v84
    %2233 = vmatmul.mubr.f32.gmra.mxu0 %v83
    %v2234 = vpop.f32.mrf.mxu0
    %v2235 = vadd.f32 %v2164, %v2234
    %v2236 = vpop.f32.mrf.mxu0
    %v2237 = vadd.f32 %v2166, %v2236
    %2238 = vdwg.mxu0
    %2239 = vmatprep.subr.mxu0 %v1170
    %2240 = vmatpush1.msra.mxu0 %v1169
    %2241 = vmatprep.subr.mxu0 %v1162
    %2242 = vmatpush1.msra.mxu0 %v1161
    %2243 = vmatprep.subr.mxu0 %v1154
    %2244 = vmatpush1.msra.mxu0 %v1153
    %2245 = vmatprep.subr.mxu0 %v1146
    %2246 = vmatpush1.msra.mxu0 %v1145
    %2247 = vmatprep.subr.mxu0 %v1138
    %2248 = vmatpush1.msra.mxu0 %v1137
    %2249 = vmatprep.subr.mxu0 %v1130
    %2250 = vmatpush1.msra.mxu0 %v1129
    %2251 = vmatprep.subr.mxu0 %v1122
    %2252 = vmatpush1.msra.mxu0 %v1121
    %2253 = vmatprep.subr.mxu0 %v1114
    %2254 = vmatpush1.msra.mxu0 %v1113
    %2255 = vmatprep.subr.mxu0 %v1106
    %2256 = vmatpush1.msra.mxu0 %v1105
    %2257 = vmatprep.subr.mxu0 %v1098
    %2258 = vmatpush1.msra.mxu0 %v1097
    %2259 = vmatprep.subr.mxu0 %v1090
    %2260 = vmatpush1.msra.mxu0 %v1089
    %2261 = vmatprep.subr.mxu0 %v1082
    %2262 = vmatpush1.msra.mxu0 %v1081
    %2263 = vmatprep.subr.mxu0 %v1074
    %2264 = vmatpush1.msra.mxu0 %v1073
    %2265 = vmatprep.subr.mxu0 %v1066
    %2266 = vmatpush1.msra.mxu0 %v1065
    %2267 = vmatprep.subr.mxu0 %v1058
    %2268 = vmatpush1.msra.mxu0 %v1057
    %2269 = vmatprep.subr.mxu0 %v1050
    %2270 = vmatpush1.msra.mxu0 %v1049
    %2271 = vmatprep.subr.mxu0 %v1298
    %2272 = vmatpush2.msra.mxu0 %v1297
    %2273 = vmatprep.subr.mxu0 %v1290
    %2274 = vmatpush2.msra.mxu0 %v1289
    %2275 = vmatprep.subr.mxu0 %v1282
    %2276 = vmatpush2.msra.mxu0 %v1281
    %2277 = vmatprep.subr.mxu0 %v1274
    %2278 = vmatpush2.msra.mxu0 %v1273
    %2279 = vmatprep.subr.mxu0 %v1266
    %2280 = vmatpush2.msra.mxu0 %v1265
    %2281 = vmatprep.subr.mxu0 %v1258
    %2282 = vmatpush2.msra.mxu0 %v1257
    %2283 = vmatprep.subr.mxu0 %v1250
    %2284 = vmatpush2.msra.mxu0 %v1249
    %2285 = vmatprep.subr.mxu0 %v1242
    %2286 = vmatpush2.msra.mxu0 %v1241
    %2287 = vmatprep.subr.mxu0 %v1234
    %2288 = vmatpush2.msra.mxu0 %v1233
    %2289 = vmatprep.subr.mxu0 %v1226
    %2290 = vmatpush2.msra.mxu0 %v1225
    %2291 = vmatprep.subr.mxu0 %v1218
    %2292 = vmatpush2.msra.mxu0 %v1217
    %2293 = vmatprep.subr.mxu0 %v1210
    %2294 = vmatpush2.msra.mxu0 %v1209
    %2295 = vmatprep.subr.mxu0 %v1202
    %2296 = vmatpush2.msra.mxu0 %v1201
    %2297 = vmatprep.subr.mxu0 %v1194
    %2298 = vmatpush2.msra.mxu0 %v1193
    %2299 = vmatprep.subr.mxu0 %v1186
    %2300 = vmatpush2.msra.mxu0 %v1185
    %2301 = vmatprep.subr.mxu0 %v1178
    %2302 = vmatpush2.msra.mxu0 %v1177
    %2303 = vmatprep.mubr.f32.mxu0 %v80
    %2304 = vmatmul.mubr.f32.gmra.mxu0 %v79
    %v2305 = vpop.f32.mrf.mxu0
    %v2306 = vadd.f32 0.0, %v2305
    %v2307 = vpop.f32.mrf.mxu0
    %v2308 = vadd.f32 0.0, %v2307
    %2309 = vdwg.mxu0
    %2310 = vmatprep.subr.mxu0 %v1426
    %2311 = vmatpush1.msra.mxu0 %v1425
    %2312 = vmatprep.subr.mxu0 %v1418
    %2313 = vmatpush1.msra.mxu0 %v1417
    %2314 = vmatprep.subr.mxu0 %v1410
    %2315 = vmatpush1.msra.mxu0 %v1409
    %2316 = vmatprep.subr.mxu0 %v1402
    %2317 = vmatpush1.msra.mxu0 %v1401
    %2318 = vmatprep.subr.mxu0 %v1394
    %2319 = vmatpush1.msra.mxu0 %v1393
    %2320 = vmatprep.subr.mxu0 %v1386
    %2321 = vmatpush1.msra.mxu0 %v1385
    %2322 = vmatprep.subr.mxu0 %v1378
    %2323 = vmatpush1.msra.mxu0 %v1377
    %2324 = vmatprep.subr.mxu0 %v1370
    %2325 = vmatpush1.msra.mxu0 %v1369
    %2326 = vmatprep.subr.mxu0 %v1362
    %2327 = vmatpush1.msra.mxu0 %v1361
    %2328 = vmatprep.subr.mxu0 %v1354
    %2329 = vmatpush1.msra.mxu0 %v1353
    %2330 = vmatprep.subr.mxu0 %v1346
    %2331 = vmatpush1.msra.mxu0 %v1345
    %2332 = vmatprep.subr.mxu0 %v1338
    %2333 = vmatpush1.msra.mxu0 %v1337
    %2334 = vmatprep.subr.mxu0 %v1330
    %2335 = vmatpush1.msra.mxu0 %v1329
    %2336 = vmatprep.subr.mxu0 %v1322
    %2337 = vmatpush1.msra.mxu0 %v1321
    %2338 = vmatprep.subr.mxu0 %v1314
    %2339 = vmatpush1.msra.mxu0 %v1313
    %2340 = vmatprep.subr.mxu0 %v1306
    %2341 = vmatpush1.msra.mxu0 %v1305
    %2342 = vmatprep.subr.mxu0 %v1554
    %2343 = vmatpush2.msra.mxu0 %v1553
    %2344 = vmatprep.subr.mxu0 %v1546
    %2345 = vmatpush2.msra.mxu0 %v1545
    %2346 = vmatprep.subr.mxu0 %v1538
    %2347 = vmatpush2.msra.mxu0 %v1537
    %2348 = vmatprep.subr.mxu0 %v1530
    %2349 = vmatpush2.msra.mxu0 %v1529
    %2350 = vmatprep.subr.mxu0 %v1522
    %2351 = vmatpush2.msra.mxu0 %v1521
    %2352 = vmatprep.subr.mxu0 %v1514
    %2353 = vmatpush2.msra.mxu0 %v1513
    %2354 = vmatprep.subr.mxu0 %v1506
    %2355 = vmatpush2.msra.mxu0 %v1505
    %2356 = vmatprep.subr.mxu0 %v1498
    %2357 = vmatpush2.msra.mxu0 %v1497
    %2358 = vmatprep.subr.mxu0 %v1490
    %2359 = vmatpush2.msra.mxu0 %v1489
    %2360 = vmatprep.subr.mxu0 %v1482
    %2361 = vmatpush2.msra.mxu0 %v1481
    %2362 = vmatprep.subr.mxu0 %v1474
    %2363 = vmatpush2.msra.mxu0 %v1473
    %2364 = vmatprep.subr.mxu0 %v1466
    %2365 = vmatpush2.msra.mxu0 %v1465
    %2366 = vmatprep.subr.mxu0 %v1458
    %2367 = vmatpush2.msra.mxu0 %v1457
    %2368 = vmatprep.subr.mxu0 %v1450
    %2369 = vmatpush2.msra.mxu0 %v1449
    %2370 = vmatprep.subr.mxu0 %v1442
    %2371 = vmatpush2.msra.mxu0 %v1441
    %2372 = vmatprep.subr.mxu0 %v1434
    %2373 = vmatpush2.msra.mxu0 %v1433
    %2374 = vmatprep.mubr.f32.mxu0 %v82
    %2375 = vmatmul.mubr.f32.gmra.mxu0 %v81
    %v2376 = vpop.f32.mrf.mxu0
    %v2377 = vadd.f32 %v2306, %v2376
    %v2378 = vpop.f32.mrf.mxu0
    %v2379 = vadd.f32 %v2308, %v2378
    %2380 = vdwg.mxu0
    %2381 = vmatprep.subr.mxu0 %v1682
    %2382 = vmatpush1.msra.mxu0 %v1681
    %2383 = vmatprep.subr.mxu0 %v1674
    %2384 = vmatpush1.msra.mxu0 %v1673
    %2385 = vmatprep.subr.mxu0 %v1666
    %2386 = vmatpush1.msra.mxu0 %v1665
    %2387 = vmatprep.subr.mxu0 %v1658
    %2388 = vmatpush1.msra.mxu0 %v1657
    %2389 = vmatprep.subr.mxu0 %v1650
    %2390 = vmatpush1.msra.mxu0 %v1649
    %2391 = vmatprep.subr.mxu0 %v1642
    %2392 = vmatpush1.msra.mxu0 %v1641
    %2393 = vmatprep.subr.mxu0 %v1634
    %2394 = vmatpush1.msra.mxu0 %v1633
    %2395 = vmatprep.subr.mxu0 %v1626
    %2396 = vmatpush1.msra.mxu0 %v1625
    %2397 = vmatprep.subr.mxu0 %v1618
    %2398 = vmatpush1.msra.mxu0 %v1617
    %2399 = vmatprep.subr.mxu0 %v1610
    %2400 = vmatpush1.msra.mxu0 %v1609
    %2401 = vmatprep.subr.mxu0 %v1602
    %2402 = vmatpush1.msra.mxu0 %v1601
    %2403 = vmatprep.subr.mxu0 %v1594
    %2404 = vmatpush1.msra.mxu0 %v1593
    %2405 = vmatprep.subr.mxu0 %v1586
    %2406 = vmatpush1.msra.mxu0 %v1585
    %2407 = vmatprep.subr.mxu0 %v1578
    %2408 = vmatpush1.msra.mxu0 %v1577
    %2409 = vmatprep.subr.mxu0 %v1570
    %2410 = vmatpush1.msra.mxu0 %v1569
    %2411 = vmatprep.subr.mxu0 %v1562
    %2412 = vmatpush1.msra.mxu0 %v1561
    %2413 = vmatprep.subr.mxu0 %v1810
    %2414 = vmatpush2.msra.mxu0 %v1809
    %2415 = vmatprep.subr.mxu0 %v1802
    %2416 = vmatpush2.msra.mxu0 %v1801
    %2417 = vmatprep.subr.mxu0 %v1794
    %2418 = vmatpush2.msra.mxu0 %v1793
    %2419 = vmatprep.subr.mxu0 %v1786
    %2420 = vmatpush2.msra.mxu0 %v1785
    %2421 = vmatprep.subr.mxu0 %v1778
    %2422 = vmatpush2.msra.mxu0 %v1777
    %2423 = vmatprep.subr.mxu0 %v1770
    %2424 = vmatpush2.msra.mxu0 %v1769
    %2425 = vmatprep.subr.mxu0 %v1762
    %2426 = vmatpush2.msra.mxu0 %v1761
    %2427 = vmatprep.subr.mxu0 %v1754
    %2428 = vmatpush2.msra.mxu0 %v1753
    %2429 = vmatprep.subr.mxu0 %v1746
    %2430 = vmatpush2.msra.mxu0 %v1745
    %2431 = vmatprep.subr.mxu0 %v1738
    %2432 = vmatpush2.msra.mxu0 %v1737
    %2433 = vmatprep.subr.mxu0 %v1730
    %2434 = vmatpush2.msra.mxu0 %v1729
    %2435 = vmatprep.subr.mxu0 %v1722
    %2436 = vmatpush2.msra.mxu0 %v1721
    %2437 = vmatprep.subr.mxu0 %v1714
    %2438 = vmatpush2.msra.mxu0 %v1713
    %2439 = vmatprep.subr.mxu0 %v1706
    %2440 = vmatpush2.msra.mxu0 %v1705
    %2441 = vmatprep.subr.mxu0 %v1698
    %2442 = vmatpush2.msra.mxu0 %v1697
    %2443 = vmatprep.subr.mxu0 %v1690
    %2444 = vmatpush2.msra.mxu0 %v1689
    %2445 = vmatprep.mubr.f32.mxu0 %v84
    %2446 = vmatmul.mubr.f32.gmra.mxu0 %v83
    %v2447 = vpop.f32.mrf.mxu0
    %v2448 = vadd.f32 %v2377, %v2447
    %v2449 = vpop.f32.mrf.mxu0
    %v2450 = vadd.f32 %v2379, %v2449
    %2451 = vdwg.mxu0
    %2452 = vmatprep.subr.mxu0 %v1172
    %2453 = vmatpush1.msra.mxu0 %v1171
    %2454 = vmatprep.subr.mxu0 %v1164
    %2455 = vmatpush1.msra.mxu0 %v1163
    %2456 = vmatprep.subr.mxu0 %v1156
    %2457 = vmatpush1.msra.mxu0 %v1155
    %2458 = vmatprep.subr.mxu0 %v1148
    %2459 = vmatpush1.msra.mxu0 %v1147
    %2460 = vmatprep.subr.mxu0 %v1140
    %2461 = vmatpush1.msra.mxu0 %v1139
    %2462 = vmatprep.subr.mxu0 %v1132
    %2463 = vmatpush1.msra.mxu0 %v1131
    %2464 = vmatprep.subr.mxu0 %v1124
    %2465 = vmatpush1.msra.mxu0 %v1123
    %2466 = vmatprep.subr.mxu0 %v1116
    %2467 = vmatpush1.msra.mxu0 %v1115
    %2468 = vmatprep.subr.mxu0 %v1108
    %2469 = vmatpush1.msra.mxu0 %v1107
    %2470 = vmatprep.subr.mxu0 %v1100
    %2471 = vmatpush1.msra.mxu0 %v1099
    %2472 = vmatprep.subr.mxu0 %v1092
    %2473 = vmatpush1.msra.mxu0 %v1091
    %2474 = vmatprep.subr.mxu0 %v1084
    %2475 = vmatpush1.msra.mxu0 %v1083
    %2476 = vmatprep.subr.mxu0 %v1076
    %2477 = vmatpush1.msra.mxu0 %v1075
    %2478 = vmatprep.subr.mxu0 %v1068
    %2479 = vmatpush1.msra.mxu0 %v1067
    %2480 = vmatprep.subr.mxu0 %v1060
    %2481 = vmatpush1.msra.mxu0 %v1059
    %2482 = vmatprep.subr.mxu0 %v1052
    %2483 = vmatpush1.msra.mxu0 %v1051
    %2484 = vmatprep.subr.mxu0 %v1300
    %2485 = vmatpush2.msra.mxu0 %v1299
    %2486 = vmatprep.subr.mxu0 %v1292
    %2487 = vmatpush2.msra.mxu0 %v1291
    %2488 = vmatprep.subr.mxu0 %v1284
    %2489 = vmatpush2.msra.mxu0 %v1283
    %2490 = vmatprep.subr.mxu0 %v1276
    %2491 = vmatpush2.msra.mxu0 %v1275
    %2492 = vmatprep.subr.mxu0 %v1268
    %2493 = vmatpush2.msra.mxu0 %v1267
    %2494 = vmatprep.subr.mxu0 %v1260
    %2495 = vmatpush2.msra.mxu0 %v1259
    %2496 = vmatprep.subr.mxu0 %v1252
    %2497 = vmatpush2.msra.mxu0 %v1251
    %2498 = vmatprep.subr.mxu0 %v1244
    %2499 = vmatpush2.msra.mxu0 %v1243
    %2500 = vmatprep.subr.mxu0 %v1236
    %2501 = vmatpush2.msra.mxu0 %v1235
    %2502 = vmatprep.subr.mxu0 %v1228
    %2503 = vmatpush2.msra.mxu0 %v1227
    %2504 = vmatprep.subr.mxu0 %v1220
    %2505 = vmatpush2.msra.mxu0 %v1219
    %2506 = vmatprep.subr.mxu0 %v1212
    %2507 = vmatpush2.msra.mxu0 %v1211
    %2508 = vmatprep.subr.mxu0 %v1204
    %2509 = vmatpush2.msra.mxu0 %v1203
    %2510 = vmatprep.subr.mxu0 %v1196
    %2511 = vmatpush2.msra.mxu0 %v1195
    %2512 = vmatprep.subr.mxu0 %v1188
    %2513 = vmatpush2.msra.mxu0 %v1187
    %2514 = vmatprep.subr.mxu0 %v1180
    %2515 = vmatpush2.msra.mxu0 %v1179
    %2516 = vmatprep.mubr.f32.mxu0 %v80
    %2517 = vmatmul.mubr.f32.gmra.mxu0 %v79
    %v2518 = vpop.f32.mrf.mxu0
    %v2519 = vadd.f32 0.0, %v2518
    %v2520 = vpop.f32.mrf.mxu0
    %v2521 = vadd.f32 0.0, %v2520
    %2522 = vdwg.mxu0
    %2523 = vmatprep.subr.mxu0 %v1428
    %2524 = vmatpush1.msra.mxu0 %v1427
    %2525 = vmatprep.subr.mxu0 %v1420
    %2526 = vmatpush1.msra.mxu0 %v1419
    %2527 = vmatprep.subr.mxu0 %v1412
    %2528 = vmatpush1.msra.mxu0 %v1411
    %2529 = vmatprep.subr.mxu0 %v1404
    %2530 = vmatpush1.msra.mxu0 %v1403
    %2531 = vmatprep.subr.mxu0 %v1396
    %2532 = vmatpush1.msra.mxu0 %v1395
    %2533 = vmatprep.subr.mxu0 %v1388
    %2534 = vmatpush1.msra.mxu0 %v1387
    %2535 = vmatprep.subr.mxu0 %v1380
    %2536 = vmatpush1.msra.mxu0 %v1379
    %2537 = vmatprep.subr.mxu0 %v1372
    %2538 = vmatpush1.msra.mxu0 %v1371
    %2539 = vmatprep.subr.mxu0 %v1364
    %2540 = vmatpush1.msra.mxu0 %v1363
    %2541 = vmatprep.subr.mxu0 %v1356
    %2542 = vmatpush1.msra.mxu0 %v1355
    %2543 = vmatprep.subr.mxu0 %v1348
    %2544 = vmatpush1.msra.mxu0 %v1347
    %2545 = vmatprep.subr.mxu0 %v1340
    %2546 = vmatpush1.msra.mxu0 %v1339
    %2547 = vmatprep.subr.mxu0 %v1332
    %2548 = vmatpush1.msra.mxu0 %v1331
    %2549 = vmatprep.subr.mxu0 %v1324
    %2550 = vmatpush1.msra.mxu0 %v1323
    %2551 = vmatprep.subr.mxu0 %v1316
    %2552 = vmatpush1.msra.mxu0 %v1315
    %2553 = vmatprep.subr.mxu0 %v1308
    %2554 = vmatpush1.msra.mxu0 %v1307
    %2555 = vmatprep.subr.mxu0 %v1556
    %2556 = vmatpush2.msra.mxu0 %v1555
    %2557 = vmatprep.subr.mxu0 %v1548
    %2558 = vmatpush2.msra.mxu0 %v1547
    %2559 = vmatprep.subr.mxu0 %v1540
    %2560 = vmatpush2.msra.mxu0 %v1539
    %2561 = vmatprep.subr.mxu0 %v1532
    %2562 = vmatpush2.msra.mxu0 %v1531
    %2563 = vmatprep.subr.mxu0 %v1524
    %2564 = vmatpush2.msra.mxu0 %v1523
    %2565 = vmatprep.subr.mxu0 %v1516
    %2566 = vmatpush2.msra.mxu0 %v1515
    %2567 = vmatprep.subr.mxu0 %v1508
    %2568 = vmatpush2.msra.mxu0 %v1507
    %2569 = vmatprep.subr.mxu0 %v1500
    %2570 = vmatpush2.msra.mxu0 %v1499
    %2571 = vmatprep.subr.mxu0 %v1492
    %2572 = vmatpush2.msra.mxu0 %v1491
    %2573 = vmatprep.subr.mxu0 %v1484
    %2574 = vmatpush2.msra.mxu0 %v1483
    %2575 = vmatprep.subr.mxu0 %v1476
    %2576 = vmatpush2.msra.mxu0 %v1475
    %2577 = vmatprep.subr.mxu0 %v1468
    %2578 = vmatpush2.msra.mxu0 %v1467
    %2579 = vmatprep.subr.mxu0 %v1460
    %2580 = vmatpush2.msra.mxu0 %v1459
    %2581 = vmatprep.subr.mxu0 %v1452
    %2582 = vmatpush2.msra.mxu0 %v1451
    %2583 = vmatprep.subr.mxu0 %v1444
    %2584 = vmatpush2.msra.mxu0 %v1443
    %2585 = vmatprep.subr.mxu0 %v1436
    %2586 = vmatpush2.msra.mxu0 %v1435
    %2587 = vmatprep.mubr.f32.mxu0 %v82
    %2588 = vmatmul.mubr.f32.gmra.mxu0 %v81
    %v2589 = vpop.f32.mrf.mxu0
    %v2590 = vadd.f32 %v2519, %v2589
    %v2591 = vpop.f32.mrf.mxu0
    %v2592 = vadd.f32 %v2521, %v2591
    %2593 = vdwg.mxu0
    %2594 = vmatprep.subr.mxu0 %v1684
    %2595 = vmatpush1.msra.mxu0 %v1683
    %2596 = vmatprep.subr.mxu0 %v1676
    %2597 = vmatpush1.msra.mxu0 %v1675
    %2598 = vmatprep.subr.mxu0 %v1668
    %2599 = vmatpush1.msra.mxu0 %v1667
    %2600 = vmatprep.subr.mxu0 %v1660
    %2601 = vmatpush1.msra.mxu0 %v1659
    %2602 = vmatprep.subr.mxu0 %v1652
    %2603 = vmatpush1.msra.mxu0 %v1651
    %2604 = vmatprep.subr.mxu0 %v1644
    %2605 = vmatpush1.msra.mxu0 %v1643
    %2606 = vmatprep.subr.mxu0 %v1636
    %2607 = vmatpush1.msra.mxu0 %v1635
    %2608 = vmatprep.subr.mxu0 %v1628
    %2609 = vmatpush1.msra.mxu0 %v1627
    %2610 = vmatprep.subr.mxu0 %v1620
    %2611 = vmatpush1.msra.mxu0 %v1619
    %2612 = vmatprep.subr.mxu0 %v1612
    %2613 = vmatpush1.msra.mxu0 %v1611
    %2614 = vmatprep.subr.mxu0 %v1604
    %2615 = vmatpush1.msra.mxu0 %v1603
    %2616 = vmatprep.subr.mxu0 %v1596
    %2617 = vmatpush1.msra.mxu0 %v1595
    %2618 = vmatprep.subr.mxu0 %v1588
    %2619 = vmatpush1.msra.mxu0 %v1587
    %2620 = vmatprep.subr.mxu0 %v1580
    %2621 = vmatpush1.msra.mxu0 %v1579
    %2622 = vmatprep.subr.mxu0 %v1572
    %2623 = vmatpush1.msra.mxu0 %v1571
    %2624 = vmatprep.subr.mxu0 %v1564
    %2625 = vmatpush1.msra.mxu0 %v1563
    %2626 = vmatprep.subr.mxu0 %v1812
    %2627 = vmatpush2.msra.mxu0 %v1811
    %2628 = vmatprep.subr.mxu0 %v1804
    %2629 = vmatpush2.msra.mxu0 %v1803
    %2630 = vmatprep.subr.mxu0 %v1796
    %2631 = vmatpush2.msra.mxu0 %v1795
    %2632 = vmatprep.subr.mxu0 %v1788
    %2633 = vmatpush2.msra.mxu0 %v1787
    %2634 = vmatprep.subr.mxu0 %v1780
    %2635 = vmatpush2.msra.mxu0 %v1779
    %2636 = vmatprep.subr.mxu0 %v1772
    %2637 = vmatpush2.msra.mxu0 %v1771
    %2638 = vmatprep.subr.mxu0 %v1764
    %2639 = vmatpush2.msra.mxu0 %v1763
    %2640 = vmatprep.subr.mxu0 %v1756
    %2641 = vmatpush2.msra.mxu0 %v1755
    %2642 = vmatprep.subr.mxu0 %v1748
    %2643 = vmatpush2.msra.mxu0 %v1747
    %2644 = vmatprep.subr.mxu0 %v1740
    %2645 = vmatpush2.msra.mxu0 %v1739
    %2646 = vmatprep.subr.mxu0 %v1732
    %2647 = vmatpush2.msra.mxu0 %v1731
    %2648 = vmatprep.subr.mxu0 %v1724
    %2649 = vmatpush2.msra.mxu0 %v1723
    %2650 = vmatprep.subr.mxu0 %v1716
    %2651 = vmatpush2.msra.mxu0 %v1715
    %2652 = vmatprep.subr.mxu0 %v1708
    %2653 = vmatpush2.msra.mxu0 %v1707
    %2654 = vmatprep.subr.mxu0 %v1700
    %2655 = vmatpush2.msra.mxu0 %v1699
    %2656 = vmatprep.subr.mxu0 %v1692
    %2657 = vmatpush2.msra.mxu0 %v1691
    %2658 = vmatprep.mubr.f32.mxu0 %v84
    %2659 = vmatmul.mubr.f32.gmra.mxu0 %v83
    %v2660 = vpop.f32.mrf.mxu0
    %v2661 = vadd.f32 %v2590, %v2660
    %v2662 = vpop.f32.mrf.mxu0
    %v2663 = vadd.f32 %v2592, %v2662
    %2664 = vdwg.mxu0
    %v2665 = vld [vmem:[%s3] sm:$0xff]
    %v2667 = vlaneseq
    %v2668 = vshrl.u32 %v2667, 7
    %v2669 = vsub.s32 0, %v2668
    %v2670 = vrot.slane %v2665, %v2669
    %v2671 = vlaneseq
    %v2672 = vshrl.u32 %v2671, 7
    %v2673 = vsub.s32 1, %v2672
    %v2674 = vrot.slane %v2665, %v2673
    %v2675 = vlaneseq
    %v2676 = vshrl.u32 %v2675, 7
    %v2677 = vsub.s32 2, %v2676
    %v2678 = vrot.slane %v2665, %v2677
    %v2679 = vlaneseq
    %v2680 = vshrl.u32 %v2679, 7
    %v2681 = vsub.s32 3, %v2680
    %v2682 = vrot.slane %v2665, %v2681
    %v2683 = vlaneseq
    %v2684 = vshrl.u32 %v2683, 7
    %v2685 = vsub.s32 4, %v2684
    %v2686 = vrot.slane %v2665, %v2685
    %v2687 = vlaneseq
    %v2688 = vshrl.u32 %v2687, 7
    %v2689 = vsub.s32 5, %v2688
    %v2690 = vrot.slane %v2665, %v2689
    %v2691 = vlaneseq
    %v2692 = vshrl.u32 %v2691, 7
    %v2693 = vsub.s32 6, %v2692
    %v2694 = vrot.slane %v2665, %v2693
    %v2695 = vlaneseq
    %v2696 = vshrl.u32 %v2695, 7
    %v2697 = vsub.s32 7, %v2696
    %v2698 = vrot.slane %v2665, %v2697
    %v2707 = vmul.f32 %v2022, %v2670
    %v2708 = vmul.f32 %v2024, %v2674
    %v2709 = vmul.f32 %v2235, %v2678
    %v2710 = vmul.f32 %v2237, %v2682
    %v2711 = vmul.f32 %v2448, %v2686
    %v2712 = vmul.f32 %v2450, %v2690
    %v2713 = vmul.f32 %v2661, %v2694
    %v2714 = vmul.f32 %v2663, %v2698
    %v2715 = vld [vmem:[%s4] sm:$0xff]
    %v2717 = vlaneseq
    %v2718 = vshrl.u32 %v2717, 7
    %v2719 = vsub.s32 0, %v2718
    %v2720 = vrot.slane %v2715, %v2719
    %v2721 = vlaneseq
    %v2722 = vshrl.u32 %v2721, 7
    %v2723 = vsub.s32 1, %v2722
    %v2724 = vrot.slane %v2715, %v2723
    %v2725 = vlaneseq
    %v2726 = vshrl.u32 %v2725, 7
    %v2727 = vsub.s32 2, %v2726
    %v2728 = vrot.slane %v2715, %v2727
    %v2729 = vlaneseq
    %v2730 = vshrl.u32 %v2729, 7
    %v2731 = vsub.s32 3, %v2730
    %v2732 = vrot.slane %v2715, %v2731
    %v2733 = vlaneseq
    %v2734 = vshrl.u32 %v2733, 7
    %v2735 = vsub.s32 4, %v2734
    %v2736 = vrot.slane %v2715, %v2735
    %v2737 = vlaneseq
    %v2738 = vshrl.u32 %v2737, 7
    %v2739 = vsub.s32 5, %v2738
    %v2740 = vrot.slane %v2715, %v2739
    %v2741 = vlaneseq
    %v2742 = vshrl.u32 %v2741, 7
    %v2743 = vsub.s32 6, %v2742
    %v2744 = vrot.slane %v2715, %v2743
    %v2745 = vlaneseq
    %v2746 = vshrl.u32 %v2745, 7
    %v2747 = vsub.s32 7, %v2746
    %v2748 = vrot.slane %v2715, %v2747
    %v2757 = vadd.f32 %v2707, %v2720
    %v2758 = vadd.f32 %v2708, %v2724
    %v2759 = vadd.f32 %v2709, %v2728
    %v2760 = vadd.f32 %v2710, %v2732
    %v2761 = vadd.f32 %v2711, %v2736
    %v2762 = vadd.f32 %v2712, %v2740
    %v2763 = vadd.f32 %v2713, %v2744
    %v2764 = vadd.f32 %v2714, %v2748
    %v2765 = vmax.f32 %v2757, 0.0
    %v2766 = vmax.f32 %v2758, 0.0
    %v2767 = vmax.f32 %v2759, 0.0
    %v2768 = vmax.f32 %v2760, 0.0
    %v2769 = vmax.f32 %v2761, 0.0
    %v2770 = vmax.f32 %v2762, 0.0
    %v2771 = vmax.f32 %v2763, 0.0
    %v2772 = vmax.f32 %v2764, 0.0
    %v2773 = vpack.c.bf16 %v2765, %v2765
    %v2774 = vpack.c.bf16 %v2766, %v2766
    %v2775 = vpack.c.bf16 %v2767, %v2767
    %v2776 = vpack.c.bf16 %v2768, %v2768
    %v2777 = vpack.c.bf16 %v2769, %v2769
    %v2778 = vpack.c.bf16 %v2770, %v2770
    %v2779 = vpack.c.bf16 %v2771, %v2771
    %v2780 = vpack.c.bf16 %v2772, %v2772
    %v2781 = vld [vmem:[%s5] sm:$0xf]
    %v2782 = vld [vmem:[%s5 + $0x4] sm:$0xf]
    %v2783 = vld [vmem:[%s5 + $0x8] sm:$0xf]
    %v2784 = vld [vmem:[%s5 + $0xc] sm:$0xf]
    %v2785 = vld [vmem:[%s5 + $0x10] sm:$0xf]
    %v2786 = vld [vmem:[%s5 + $0x14] sm:$0xf]
    %v2787 = vld [vmem:[%s5 + $0x18] sm:$0xf]
    %v2788 = vld [vmem:[%s5 + $0x1c] sm:$0xf]
    %v2789 = vld [vmem:[%s5 + $0x20] sm:$0xf]
    %v2790 = vld [vmem:[%s5 + $0x24] sm:$0xf]
    %v2791 = vld [vmem:[%s5 + $0x28] sm:$0xf]
    %v2792 = vld [vmem:[%s5 + $0x2c] sm:$0xf]
    %v2793 = vld [vmem:[%s5 + $0x30] sm:$0xf]
    %v2794 = vld [vmem:[%s5 + $0x34] sm:$0xf]
    %v2795 = vld [vmem:[%s5 + $0x38] sm:$0xf]
    %v2796 = vld [vmem:[%s5 + $0x3c] sm:$0xf]
    %v2797 = vld [vmem:[%s5 + $0x40] sm:$0xf]
    %v2798 = vld [vmem:[%s5 + $0x44] sm:$0xf]
    %v2799 = vld [vmem:[%s5 + $0x48] sm:$0xf]
    %v2800 = vld [vmem:[%s5 + $0x4c] sm:$0xf]
    %v2801 = vld [vmem:[%s5 + $0x50] sm:$0xf]
    %v2802 = vld [vmem:[%s5 + $0x54] sm:$0xf]
    %v2803 = vld [vmem:[%s5 + $0x58] sm:$0xf]
    %v2804 = vld [vmem:[%s5 + $0x5c] sm:$0xf]
    %v2805 = vld [vmem:[%s5 + $0x60] sm:$0xf]
    %v2806 = vld [vmem:[%s5 + $0x64] sm:$0xf]
    %v2807 = vld [vmem:[%s5 + $0x68] sm:$0xf]
    %v2808 = vld [vmem:[%s5 + $0x6c] sm:$0xf]
    %v2809 = vld [vmem:[%s5 + $0x70] sm:$0xf]
    %v2810 = vld [vmem:[%s5 + $0x74] sm:$0xf]
    %v2811 = vld [vmem:[%s5 + $0x78] sm:$0xf]
    %v2812 = vld [vmem:[%s5 + $0x7c] sm:$0xf]
    %v2813 = vld [vmem:[%s5 + $0x80] sm:$0xf]
    %v2814 = vld [vmem:[%s5 + $0x84] sm:$0xf]
    %v2815 = vld [vmem:[%s5 + $0x88] sm:$0xf]
    %v2816 = vld [vmem:[%s5 + $0x8c] sm:$0xf]
    %v2817 = vld [vmem:[%s5 + $0x90] sm:$0xf]
    %v2818 = vld [vmem:[%s5 + $0x94] sm:$0xf]
    %v2819 = vld [vmem:[%s5 + $0x98] sm:$0xf]
    %v2820 = vld [vmem:[%s5 + $0x9c] sm:$0xf]
    %v2821 = vld [vmem:[%s5 + $0xa0] sm:$0xf]
    %v2822 = vld [vmem:[%s5 + $0xa4] sm:$0xf]
    %v2823 = vld [vmem:[%s5 + $0xa8] sm:$0xf]
    %v2824 = vld [vmem:[%s5 + $0xac] sm:$0xf]
    %v2825 = vld [vmem:[%s5 + $0xb0] sm:$0xf]
    %v2826 = vld [vmem:[%s5 + $0xb4] sm:$0xf]
    %v2827 = vld [vmem:[%s5 + $0xb8] sm:$0xf]
    %v2828 = vld [vmem:[%s5 + $0xbc] sm:$0xf]
    %v2829 = vld [vmem:[%s5 + $0xc0] sm:$0xf]
    %v2830 = vld [vmem:[%s5 + $0xc4] sm:$0xf]
    %v2831 = vld [vmem:[%s5 + $0xc8] sm:$0xf]
    %v2832 = vld [vmem:[%s5 + $0xcc] sm:$0xf]
    %v2833 = vld [vmem:[%s5 + $0xd0] sm:$0xf]
    %v2834 = vld [vmem:[%s5 + $0xd4] sm:$0xf]
    %v2835 = vld [vmem:[%s5 + $0xd8] sm:$0xf]
    %v2836 = vld [vmem:[%s5 + $0xdc] sm:$0xf]
    %v2837 = vld [vmem:[%s5 + $0xe0] sm:$0xf]
    %v2838 = vld [vmem:[%s5 + $0xe4] sm:$0xf]
    %v2839 = vld [vmem:[%s5 + $0xe8] sm:$0xf]
    %v2840 = vld [vmem:[%s5 + $0xec] sm:$0xf]
    %v2841 = vld [vmem:[%s5 + $0xf0] sm:$0xf]
    %v2842 = vld [vmem:[%s5 + $0xf4] sm:$0xf]
    %v2843 = vld [vmem:[%s5 + $0xf8] sm:$0xf]
    %v2844 = vld [vmem:[%s5 + $0xfc] sm:$0xf]
    %v2845 = vld [vmem:[%s5 + $0x100] sm:$0xf]
    %v2846 = vld [vmem:[%s5 + $0x104] sm:$0xf]
    %v2847 = vld [vmem:[%s5 + $0x108] sm:$0xf]
    %v2848 = vld [vmem:[%s5 + $0x10c] sm:$0xf]
    %v2849 = vld [vmem:[%s5 + $0x110] sm:$0xf]
    %v2850 = vld [vmem:[%s5 + $0x114] sm:$0xf]
    %v2851 = vld [vmem:[%s5 + $0x118] sm:$0xf]
    %v2852 = vld [vmem:[%s5 + $0x11c] sm:$0xf]
    %v2853 = vld [vmem:[%s5 + $0x120] sm:$0xf]
    %v2854 = vld [vmem:[%s5 + $0x124] sm:$0xf]
    %v2855 = vld [vmem:[%s5 + $0x128] sm:$0xf]
    %v2856 = vld [vmem:[%s5 + $0x12c] sm:$0xf]
    %v2857 = vld [vmem:[%s5 + $0x130] sm:$0xf]
    %v2858 = vld [vmem:[%s5 + $0x134] sm:$0xf]
    %v2859 = vld [vmem:[%s5 + $0x138] sm:$0xf]
    %v2860 = vld [vmem:[%s5 + $0x13c] sm:$0xf]
    %v2861 = vld [vmem:[%s5 + $0x140] sm:$0xf]
    %v2862 = vld [vmem:[%s5 + $0x144] sm:$0xf]
    %v2863 = vld [vmem:[%s5 + $0x148] sm:$0xf]
    %v2864 = vld [vmem:[%s5 + $0x14c] sm:$0xf]
    %v2865 = vld [vmem:[%s5 + $0x150] sm:$0xf]
    %v2866 = vld [vmem:[%s5 + $0x154] sm:$0xf]
    %v2867 = vld [vmem:[%s5 + $0x158] sm:$0xf]
    %v2868 = vld [vmem:[%s5 + $0x15c] sm:$0xf]
    %v2869 = vld [vmem:[%s5 + $0x160] sm:$0xf]
    %v2870 = vld [vmem:[%s5 + $0x164] sm:$0xf]
    %v2871 = vld [vmem:[%s5 + $0x168] sm:$0xf]
    %v2872 = vld [vmem:[%s5 + $0x16c] sm:$0xf]
    %v2873 = vld [vmem:[%s5 + $0x170] sm:$0xf]
    %v2874 = vld [vmem:[%s5 + $0x174] sm:$0xf]
    %v2875 = vld [vmem:[%s5 + $0x178] sm:$0xf]
    %v2876 = vld [vmem:[%s5 + $0x17c] sm:$0xf]
    %v2877 = vld [vmem:[%s5 + $0x180] sm:$0xf]
    %v2878 = vld [vmem:[%s5 + $0x184] sm:$0xf]
    %v2879 = vld [vmem:[%s5 + $0x188] sm:$0xf]
    %v2880 = vld [vmem:[%s5 + $0x18c] sm:$0xf]
    %v2881 = vld [vmem:[%s5 + $0x190] sm:$0xf]
    %v2882 = vld [vmem:[%s5 + $0x194] sm:$0xf]
    %v2883 = vld [vmem:[%s5 + $0x198] sm:$0xf]
    %v2884 = vld [vmem:[%s5 + $0x19c] sm:$0xf]
    %v2885 = vld [vmem:[%s5 + $0x1a0] sm:$0xf]
    %v2886 = vld [vmem:[%s5 + $0x1a4] sm:$0xf]
    %v2887 = vld [vmem:[%s5 + $0x1a8] sm:$0xf]
    %v2888 = vld [vmem:[%s5 + $0x1ac] sm:$0xf]
    %v2889 = vld [vmem:[%s5 + $0x1b0] sm:$0xf]
    %v2890 = vld [vmem:[%s5 + $0x1b4] sm:$0xf]
    %v2891 = vld [vmem:[%s5 + $0x1b8] sm:$0xf]
    %v2892 = vld [vmem:[%s5 + $0x1bc] sm:$0xf]
    %v2893 = vld [vmem:[%s5 + $0x1c0] sm:$0xf]
    %v2894 = vld [vmem:[%s5 + $0x1c4] sm:$0xf]
    %v2895 = vld [vmem:[%s5 + $0x1c8] sm:$0xf]
    %v2896 = vld [vmem:[%s5 + $0x1cc] sm:$0xf]
    %v2897 = vld [vmem:[%s5 + $0x1d0] sm:$0xf]
    %v2898 = vld [vmem:[%s5 + $0x1d4] sm:$0xf]
    %v2899 = vld [vmem:[%s5 + $0x1d8] sm:$0xf]
    %v2900 = vld [vmem:[%s5 + $0x1dc] sm:$0xf]
    %v2901 = vld [vmem:[%s5 + $0x1e0] sm:$0xf]
    %v2902 = vld [vmem:[%s5 + $0x1e4] sm:$0xf]
    %v2903 = vld [vmem:[%s5 + $0x1e8] sm:$0xf]
    %v2904 = vld [vmem:[%s5 + $0x1ec] sm:$0xf]
    %v2905 = vld [vmem:[%s5 + $0x1f0] sm:$0xf]
    %v2906 = vld [vmem:[%s5 + $0x1f4] sm:$0xf]
    %v2907 = vld [vmem:[%s5 + $0x1f8] sm:$0xf]
    %v2908 = vld [vmem:[%s5 + $0x1fc] sm:$0xf]
    %v2909 = vld [vmem:[%s6] sm:$0x1]
    %v2911 = vlaneseq
    %v2912 = vshrl.u32 %v2911, 7
    %v2913 = vsub.s32 0, %v2912
    %v2914 = vrot.slane %v2909, %v2913
    %v3044 = vunpack.c.l.b16 %v2781
    %v3045 = vunpack.c.l.b16 %v2782
    %v3046 = vunpack.c.l.b16 %v2783
    %v3047 = vunpack.c.l.b16 %v2784
    %v3048 = vunpack.c.l.b16 %v2785
    %v3049 = vunpack.c.l.b16 %v2786
    %v3050 = vunpack.c.l.b16 %v2787
    %v3051 = vunpack.c.l.b16 %v2788
    %v3052 = vunpack.c.l.b16 %v2789
    %v3053 = vunpack.c.l.b16 %v2790
    %v3054 = vunpack.c.l.b16 %v2791
    %v3055 = vunpack.c.l.b16 %v2792
    %v3056 = vunpack.c.l.b16 %v2793
    %v3057 = vunpack.c.l.b16 %v2794
    %v3058 = vunpack.c.l.b16 %v2795
    %v3059 = vunpack.c.l.b16 %v2796
    %v3060 = vunpack.c.l.b16 %v2797
    %v3061 = vunpack.c.l.b16 %v2798
    %v3062 = vunpack.c.l.b16 %v2799
    %v3063 = vunpack.c.l.b16 %v2800
    %v3064 = vunpack.c.l.b16 %v2801
    %v3065 = vunpack.c.l.b16 %v2802
    %v3066 = vunpack.c.l.b16 %v2803
    %v3067 = vunpack.c.l.b16 %v2804
    %v3068 = vunpack.c.l.b16 %v2805
    %v3069 = vunpack.c.l.b16 %v2806
    %v3070 = vunpack.c.l.b16 %v2807
    %v3071 = vunpack.c.l.b16 %v2808
    %v3072 = vunpack.c.l.b16 %v2809
    %v3073 = vunpack.c.l.b16 %v2810
    %v3074 = vunpack.c.l.b16 %v2811
    %v3075 = vunpack.c.l.b16 %v2812
    %v3076 = vunpack.c.l.b16 %v2813
    %v3077 = vunpack.c.l.b16 %v2814
    %v3078 = vunpack.c.l.b16 %v2815
    %v3079 = vunpack.c.l.b16 %v2816
    %v3080 = vunpack.c.l.b16 %v2817
    %v3081 = vunpack.c.l.b16 %v2818
    %v3082 = vunpack.c.l.b16 %v2819
    %v3083 = vunpack.c.l.b16 %v2820
    %v3084 = vunpack.c.l.b16 %v2821
    %v3085 = vunpack.c.l.b16 %v2822
    %v3086 = vunpack.c.l.b16 %v2823
    %v3087 = vunpack.c.l.b16 %v2824
    %v3088 = vunpack.c.l.b16 %v2825
    %v3089 = vunpack.c.l.b16 %v2826
    %v3090 = vunpack.c.l.b16 %v2827
    %v3091 = vunpack.c.l.b16 %v2828
    %v3092 = vunpack.c.l.b16 %v2829
    %v3093 = vunpack.c.l.b16 %v2830
    %v3094 = vunpack.c.l.b16 %v2831
    %v3095 = vunpack.c.l.b16 %v2832
    %v3096 = vunpack.c.l.b16 %v2833
    %v3097 = vunpack.c.l.b16 %v2834
    %v3098 = vunpack.c.l.b16 %v2835
    %v3099 = vunpack.c.l.b16 %v2836
    %v3100 = vunpack.c.l.b16 %v2837
    %v3101 = vunpack.c.l.b16 %v2838
    %v3102 = vunpack.c.l.b16 %v2839
    %v3103 = vunpack.c.l.b16 %v2840
    %v3104 = vunpack.c.l.b16 %v2841
    %v3105 = vunpack.c.l.b16 %v2842
    %v3106 = vunpack.c.l.b16 %v2843
    %v3107 = vunpack.c.l.b16 %v2844
    %v3108 = vunpack.c.l.b16 %v2845
    %v3109 = vunpack.c.l.b16 %v2846
    %v3110 = vunpack.c.l.b16 %v2847
    %v3111 = vunpack.c.l.b16 %v2848
    %v3112 = vunpack.c.l.b16 %v2849
    %v3113 = vunpack.c.l.b16 %v2850
    %v3114 = vunpack.c.l.b16 %v2851
    %v3115 = vunpack.c.l.b16 %v2852
    %v3116 = vunpack.c.l.b16 %v2853
    %v3117 = vunpack.c.l.b16 %v2854
    %v3118 = vunpack.c.l.b16 %v2855
    %v3119 = vunpack.c.l.b16 %v2856
    %v3120 = vunpack.c.l.b16 %v2857
    %v3121 = vunpack.c.l.b16 %v2858
    %v3122 = vunpack.c.l.b16 %v2859
    %v3123 = vunpack.c.l.b16 %v2860
    %v3124 = vunpack.c.l.b16 %v2861
    %v3125 = vunpack.c.l.b16 %v2862
    %v3126 = vunpack.c.l.b16 %v2863
    %v3127 = vunpack.c.l.b16 %v2864
    %v3128 = vunpack.c.l.b16 %v2865
    %v3129 = vunpack.c.l.b16 %v2866
    %v3130 = vunpack.c.l.b16 %v2867
    %v3131 = vunpack.c.l.b16 %v2868
    %v3132 = vunpack.c.l.b16 %v2869
    %v3133 = vunpack.c.l.b16 %v2870
    %v3134 = vunpack.c.l.b16 %v2871
    %v3135 = vunpack.c.l.b16 %v2872
    %v3136 = vunpack.c.l.b16 %v2873
    %v3137 = vunpack.c.l.b16 %v2874
    %v3138 = vunpack.c.l.b16 %v2875
    %v3139 = vunpack.c.l.b16 %v2876
    %v3140 = vunpack.c.l.b16 %v2877
    %v3141 = vunpack.c.l.b16 %v2878
    %v3142 = vunpack.c.l.b16 %v2879
    %v3143 = vunpack.c.l.b16 %v2880
    %v3144 = vunpack.c.l.b16 %v2881
    %v3145 = vunpack.c.l.b16 %v2882
    %v3146 = vunpack.c.l.b16 %v2883
    %v3147 = vunpack.c.l.b16 %v2884
    %v3148 = vunpack.c.l.b16 %v2885
    %v3149 = vunpack.c.l.b16 %v2886
    %v3150 = vunpack.c.l.b16 %v2887
    %v3151 = vunpack.c.l.b16 %v2888
    %v3152 = vunpack.c.l.b16 %v2889
    %v3153 = vunpack.c.l.b16 %v2890
    %v3154 = vunpack.c.l.b16 %v2891
    %v3155 = vunpack.c.l.b16 %v2892
    %v3156 = vunpack.c.l.b16 %v2893
    %v3157 = vunpack.c.l.b16 %v2894
    %v3158 = vunpack.c.l.b16 %v2895
    %v3159 = vunpack.c.l.b16 %v2896
    %v3160 = vunpack.c.l.b16 %v2897
    %v3161 = vunpack.c.l.b16 %v2898
    %v3162 = vunpack.c.l.b16 %v2899
    %v3163 = vunpack.c.l.b16 %v2900
    %v3164 = vunpack.c.l.b16 %v2901
    %v3165 = vunpack.c.l.b16 %v2902
    %v3166 = vunpack.c.l.b16 %v2903
    %v3167 = vunpack.c.l.b16 %v2904
    %v3168 = vunpack.c.l.b16 %v2905
    %v3169 = vunpack.c.l.b16 %v2906
    %v3170 = vunpack.c.l.b16 %v2907
    %v3171 = vunpack.c.l.b16 %v2908
    %v3172 = vpack.c.b16 %v3045, %v3044
    %v3173 = vpack.c.b16 %v3047, %v3046
    %v3174 = vpack.c.b16 %v3049, %v3048
    %v3175 = vpack.c.b16 %v3051, %v3050
    %v3176 = vpack.c.b16 %v3053, %v3052
    %v3177 = vpack.c.b16 %v3055, %v3054
    %v3178 = vpack.c.b16 %v3057, %v3056
    %v3179 = vpack.c.b16 %v3059, %v3058
    %v3180 = vpack.c.b16 %v3061, %v3060
    %v3181 = vpack.c.b16 %v3063, %v3062
    %v3182 = vpack.c.b16 %v3065, %v3064
    %v3183 = vpack.c.b16 %v3067, %v3066
    %v3184 = vpack.c.b16 %v3069, %v3068
    %v3185 = vpack.c.b16 %v3071, %v3070
    %v3186 = vpack.c.b16 %v3073, %v3072
    %v3187 = vpack.c.b16 %v3075, %v3074
    %v3188 = vpack.c.b16 %v3077, %v3076
    %v3189 = vpack.c.b16 %v3079, %v3078
    %v3190 = vpack.c.b16 %v3081, %v3080
    %v3191 = vpack.c.b16 %v3083, %v3082
    %v3192 = vpack.c.b16 %v3085, %v3084
    %v3193 = vpack.c.b16 %v3087, %v3086
    %v3194 = vpack.c.b16 %v3089, %v3088
    %v3195 = vpack.c.b16 %v3091, %v3090
    %v3196 = vpack.c.b16 %v3093, %v3092
    %v3197 = vpack.c.b16 %v3095, %v3094
    %v3198 = vpack.c.b16 %v3097, %v3096
    %v3199 = vpack.c.b16 %v3099, %v3098
    %v3200 = vpack.c.b16 %v3101, %v3100
    %v3201 = vpack.c.b16 %v3103, %v3102
    %v3202 = vpack.c.b16 %v3105, %v3104
    %v3203 = vpack.c.b16 %v3107, %v3106
    %v3204 = vpack.c.b16 %v3109, %v3108
    %v3205 = vpack.c.b16 %v3111, %v3110
    %v3206 = vpack.c.b16 %v3113, %v3112
    %v3207 = vpack.c.b16 %v3115, %v3114
    %v3208 = vpack.c.b16 %v3117, %v3116
    %v3209 = vpack.c.b16 %v3119, %v3118
    %v3210 = vpack.c.b16 %v3121, %v3120
    %v3211 = vpack.c.b16 %v3123, %v3122
    %v3212 = vpack.c.b16 %v3125, %v3124
    %v3213 = vpack.c.b16 %v3127, %v3126
    %v3214 = vpack.c.b16 %v3129, %v3128
    %v3215 = vpack.c.b16 %v3131, %v3130
    %v3216 = vpack.c.b16 %v3133, %v3132
    %v3217 = vpack.c.b16 %v3135, %v3134
    %v3218 = vpack.c.b16 %v3137, %v3136
    %v3219 = vpack.c.b16 %v3139, %v3138
    %v3220 = vpack.c.b16 %v3141, %v3140
    %v3221 = vpack.c.b16 %v3143, %v3142
    %v3222 = vpack.c.b16 %v3145, %v3144
    %v3223 = vpack.c.b16 %v3147, %v3146
    %v3224 = vpack.c.b16 %v3149, %v3148
    %v3225 = vpack.c.b16 %v3151, %v3150
    %v3226 = vpack.c.b16 %v3153, %v3152
    %v3227 = vpack.c.b16 %v3155, %v3154
    %v3228 = vpack.c.b16 %v3157, %v3156
    %v3229 = vpack.c.b16 %v3159, %v3158
    %v3230 = vpack.c.b16 %v3161, %v3160
    %v3231 = vpack.c.b16 %v3163, %v3162
    %v3232 = vpack.c.b16 %v3165, %v3164
    %v3233 = vpack.c.b16 %v3167, %v3166
    %v3234 = vpack.c.b16 %v3169, %v3168
    %v3235 = vpack.c.b16 %v3171, %v3170
    %3300 = vmatprep.subr.bf16.mxu0 0
    %3301 = vmatpush1.bf16.msra.mxu0 %v3179
    %3302 = vmatprep.subr.bf16.mxu0 0
    %3303 = vmatpush1.bf16.msra.mxu0 %v3178
    %3304 = vmatprep.subr.bf16.mxu0 0
    %3305 = vmatpush1.bf16.msra.mxu0 %v3177
    %3306 = vmatprep.subr.bf16.mxu0 0
    %3307 = vmatpush1.bf16.msra.mxu0 %v3176
    %3308 = vmatprep.subr.bf16.mxu0 0
    %3309 = vmatpush1.bf16.msra.mxu0 %v3175
    %3310 = vmatprep.subr.bf16.mxu0 0
    %3311 = vmatpush1.bf16.msra.mxu0 %v3174
    %3312 = vmatprep.subr.bf16.mxu0 0
    %3313 = vmatpush1.bf16.msra.mxu0 %v3173
    %3314 = vmatprep.subr.bf16.mxu0 0
    %3315 = vmatpush1.bf16.msra.mxu0 %v3172
    %3316 = vmatprep.subr.bf16.mxu0 0
    %3317 = vmatpush2.bf16.msra.mxu0 %v3187
    %3318 = vmatprep.subr.bf16.mxu0 0
    %3319 = vmatpush2.bf16.msra.mxu0 %v3186
    %3320 = vmatprep.subr.bf16.mxu0 0
    %3321 = vmatpush2.bf16.msra.mxu0 %v3185
    %3322 = vmatprep.subr.bf16.mxu0 0
    %3323 = vmatpush2.bf16.msra.mxu0 %v3184
    %3324 = vmatprep.subr.bf16.mxu0 0
    %3325 = vmatpush2.bf16.msra.mxu0 %v3183
    %3326 = vmatprep.subr.bf16.mxu0 0
    %3327 = vmatpush2.bf16.msra.mxu0 %v3182
    %3328 = vmatprep.subr.bf16.mxu0 0
    %3329 = vmatpush2.bf16.msra.mxu0 %v3181
    %3330 = vmatprep.subr.bf16.mxu0 0
    %3331 = vmatpush2.bf16.msra.mxu0 %v3180
    %3332 = vmatprep.mubr.bf16.mxu0 %v2774
    %3333 = vmatmul.mubr.bf16.gmra.mxu0 %v2773
    %v3334 = vpop.f32.mrf.mxu0
    %v3335 = vadd.f32 %v2914, %v3334
    %v3336 = vpop.f32.mrf.mxu0
    %v3337 = vpop.f32.mrf.mxu0
    %v3338 = vpop.f32.mrf.mxu0
    %3339 = vdwg.mxu0
    %3340 = vmatprep.subr.bf16.mxu0 0
    %3341 = vmatpush1.bf16.msra.mxu0 %v3195
    %3342 = vmatprep.subr.bf16.mxu0 0
    %3343 = vmatpush1.bf16.msra.mxu0 %v3194
    %3344 = vmatprep.subr.bf16.mxu0 0
    %3345 = vmatpush1.bf16.msra.mxu0 %v3193
    %3346 = vmatprep.subr.bf16.mxu0 0
    %3347 = vmatpush1.bf16.msra.mxu0 %v3192
    %3348 = vmatprep.subr.bf16.mxu0 0
    %3349 = vmatpush1.bf16.msra.mxu0 %v3191
    %3350 = vmatprep.subr.bf16.mxu0 0
    %3351 = vmatpush1.bf16.msra.mxu0 %v3190
    %3352 = vmatprep.subr.bf16.mxu0 0
    %3353 = vmatpush1.bf16.msra.mxu0 %v3189
    %3354 = vmatprep.subr.bf16.mxu0 0
    %3355 = vmatpush1.bf16.msra.mxu0 %v3188
    %3356 = vmatprep.subr.bf16.mxu0 0
    %3357 = vmatpush2.bf16.msra.mxu0 %v3203
    %3358 = vmatprep.subr.bf16.mxu0 0
    %3359 = vmatpush2.bf16.msra.mxu0 %v3202
    %3360 = vmatprep.subr.bf16.mxu0 0
    %3361 = vmatpush2.bf16.msra.mxu0 %v3201
    %3362 = vmatprep.subr.bf16.mxu0 0
    %3363 = vmatpush2.bf16.msra.mxu0 %v3200
    %3364 = vmatprep.subr.bf16.mxu0 0
    %3365 = vmatpush2.bf16.msra.mxu0 %v3199
    %3366 = vmatprep.subr.bf16.mxu0 0
    %3367 = vmatpush2.bf16.msra.mxu0 %v3198
    %3368 = vmatprep.subr.bf16.mxu0 0
    %3369 = vmatpush2.bf16.msra.mxu0 %v3197
    %3370 = vmatprep.subr.bf16.mxu0 0
    %3371 = vmatpush2.bf16.msra.mxu0 %v3196
    %3372 = vmatprep.mubr.bf16.mxu0 %v2776
    %3373 = vmatmul.mubr.bf16.gmra.mxu0 %v2775
    %v3374 = vpop.f32.mrf.mxu0
    %v3375 = vadd.f32 %v3335, %v3374
    %v3376 = vpop.f32.mrf.mxu0
    %v3377 = vpop.f32.mrf.mxu0
    %v3378 = vpop.f32.mrf.mxu0
    %3379 = vdwg.mxu0
    %3380 = vmatprep.subr.bf16.mxu0 0
    %3381 = vmatpush1.bf16.msra.mxu0 %v3211
    %3382 = vmatprep.subr.bf16.mxu0 0
    %3383 = vmatpush1.bf16.msra.mxu0 %v3210
    %3384 = vmatprep.subr.bf16.mxu0 0
    %3385 = vmatpush1.bf16.msra.mxu0 %v3209
    %3386 = vmatprep.subr.bf16.mxu0 0
    %3387 = vmatpush1.bf16.msra.mxu0 %v3208
    %3388 = vmatprep.subr.bf16.mxu0 0
    %3389 = vmatpush1.bf16.msra.mxu0 %v3207
    %3390 = vmatprep.subr.bf16.mxu0 0
    %3391 = vmatpush1.bf16.msra.mxu0 %v3206
    %3392 = vmatprep.subr.bf16.mxu0 0
    %3393 = vmatpush1.bf16.msra.mxu0 %v3205
    %3394 = vmatprep.subr.bf16.mxu0 0
    %3395 = vmatpush1.bf16.msra.mxu0 %v3204
    %3396 = vmatprep.subr.bf16.mxu0 0
    %3397 = vmatpush2.bf16.msra.mxu0 %v3219
    %3398 = vmatprep.subr.bf16.mxu0 0
    %3399 = vmatpush2.bf16.msra.mxu0 %v3218
    %3400 = vmatprep.subr.bf16.mxu0 0
    %3401 = vmatpush2.bf16.msra.mxu0 %v3217
    %3402 = vmatprep.subr.bf16.mxu0 0
    %3403 = vmatpush2.bf16.msra.mxu0 %v3216
    %3404 = vmatprep.subr.bf16.mxu0 0
    %3405 = vmatpush2.bf16.msra.mxu0 %v3215
    %3406 = vmatprep.subr.bf16.mxu0 0
    %3407 = vmatpush2.bf16.msra.mxu0 %v3214
    %3408 = vmatprep.subr.bf16.mxu0 0
    %3409 = vmatpush2.bf16.msra.mxu0 %v3213
    %3410 = vmatprep.subr.bf16.mxu0 0
    %3411 = vmatpush2.bf16.msra.mxu0 %v3212
    %3412 = vmatprep.mubr.bf16.mxu0 %v2778
    %3413 = vmatmul.mubr.bf16.gmra.mxu0 %v2777
    %v3414 = vpop.f32.mrf.mxu0
    %v3415 = vadd.f32 %v3375, %v3414
    %v3416 = vpop.f32.mrf.mxu0
    %v3417 = vpop.f32.mrf.mxu0
    %v3418 = vpop.f32.mrf.mxu0
    %3419 = vdwg.mxu0
    %3420 = vmatprep.subr.bf16.mxu0 0
    %3421 = vmatpush1.bf16.msra.mxu0 %v3227
    %3422 = vmatprep.subr.bf16.mxu0 0
    %3423 = vmatpush1.bf16.msra.mxu0 %v3226
    %3424 = vmatprep.subr.bf16.mxu0 0
    %3425 = vmatpush1.bf16.msra.mxu0 %v3225
    %3426 = vmatprep.subr.bf16.mxu0 0
    %3427 = vmatpush1.bf16.msra.mxu0 %v3224
    %3428 = vmatprep.subr.bf16.mxu0 0
    %3429 = vmatpush1.bf16.msra.mxu0 %v3223
    %3430 = vmatprep.subr.bf16.mxu0 0
    %3431 = vmatpush1.bf16.msra.mxu0 %v3222
    %3432 = vmatprep.subr.bf16.mxu0 0
    %3433 = vmatpush1.bf16.msra.mxu0 %v3221
    %3434 = vmatprep.subr.bf16.mxu0 0
    %3435 = vmatpush1.bf16.msra.mxu0 %v3220
    %3436 = vmatprep.subr.bf16.mxu0 0
    %3437 = vmatpush2.bf16.msra.mxu0 %v3235
    %3438 = vmatprep.subr.bf16.mxu0 0
    %3439 = vmatpush2.bf16.msra.mxu0 %v3234
    %3440 = vmatprep.subr.bf16.mxu0 0
    %3441 = vmatpush2.bf16.msra.mxu0 %v3233
    %3442 = vmatprep.subr.bf16.mxu0 0
    %3443 = vmatpush2.bf16.msra.mxu0 %v3232
    %3444 = vmatprep.subr.bf16.mxu0 0
    %3445 = vmatpush2.bf16.msra.mxu0 %v3231
    %3446 = vmatprep.subr.bf16.mxu0 0
    %3447 = vmatpush2.bf16.msra.mxu0 %v3230
    %3448 = vmatprep.subr.bf16.mxu0 0
    %3449 = vmatpush2.bf16.msra.mxu0 %v3229
    %3450 = vmatprep.subr.bf16.mxu0 0
    %3451 = vmatpush2.bf16.msra.mxu0 %v3228
    %3452 = vmatprep.mubr.bf16.mxu0 %v2780
    %3453 = vmatmul.mubr.bf16.gmra.mxu0 %v2779
    %v3454 = vpop.f32.mrf.mxu0
    %v3455 = vadd.f32 %v3415, %v3454
    %v3456 = vpop.f32.mrf.mxu0
    %v3457 = vpop.f32.mrf.mxu0
    %v3458 = vpop.f32.mrf.mxu0
    %3459 = vdwg.mxu0
    %3460 = vst [vmem:[%s7] sm:$0xff] %v3455
    // Predicated region
    $region34: #{reprogramming_forward.1} parent=1 // pred_check
      _
    $region35: #{reprogramming_forward.1} parent=1 // pred_check_branch
      %3462 = sbr.rel (0) target = $region37
    $region36: #{reprogramming_forward.1} parent=1 // pred_region
      _
    $region37: #{reprogramming_forward.1} parent=1 // pred_fallthru
      _
    // Predicated region
    $region38: #{reprogramming_forward.1} parent=1 // pred_check
      _
    $region39: #{reprogramming_forward.1} parent=1 // pred_check_branch
      %3464 = sbr.rel (0) target = $region41
    $region40: #{reprogramming_forward.1} parent=1 // pred_region
      _
    $region41: #{reprogramming_forward.1} parent=1 // pred_fallthru
      _
    %3465 = vsyncpa [#allocation3], 1

</llo_original>
